<compile_context>
chip_gen: v6e
topology: v6e:2x2x1
jax: 0.10.0
libtpu: 0.0.40
codegen_flags: <defaults>
</compile_context>

<pallas_src>
import math
from functools import partial

import jax
import jax.numpy as jnp
from jax.experimental import pallas as pl
from jax.experimental.pallas import tpu as pltpu


def _layer_norm(x, gamma, beta, eps=1e-5):
    mu = jnp.mean(x, axis=-1, keepdims=True)
    var = jnp.mean((x - mu) ** 2, axis=-1, keepdims=True)
    return (x - mu) * jax.lax.rsqrt(var + eps) * gamma + beta


# --------------------------------------------------------------------------
# Kernel: one (batch, q-tile) owns the scratch accumulators; the kv axis is
# the innermost ('arbitrary') grid dimension and streams K/V tiles through.
# --------------------------------------------------------------------------
def encoder_layer_kernel(
    q_ref, k_ref, v_ref,                       # activations
    wq_ref, bq_ref, wo_ref, bo_ref,            # attention weights
    g1_ref, be1_ref,                           # LayerNorm 1
    w1_ref, b1_ref, w2_ref, b2_ref,            # FFN weights
    g2_ref, be2_ref,                           # LayerNorm 2
    o_ref,                                     # output
    q_scr, m_scr, l_scr, acc_scr,              # scratch (persist across kv axis)
    *, n_heads, d_k, d_v,
):
    cd = q_scr.dtype                           # MXU compute dtype (bf16 or f32)
    ki = pl.program_id(2)
    tq = q_ref.shape[1]
    tk = k_ref.shape[1]

    # ---- first KV step: project + head-split Q once, init online-softmax ----
    @pl.when(ki == 0)
    def _init():
        xq = q_ref[0].astype(cd)                                        # (tq, D)
        q = jnp.dot(xq, wq_ref[...],
                    preferred_element_type=jnp.float32) + bq_ref[...]   # (tq, H*dk)
        q = q * (1.0 / math.sqrt(d_k))          # fold scale into q (cheaper than scores)
        qh = jnp.transpose(q.reshape(tq, n_heads, d_k), (1, 0, 2))      # (H, tq, dk)
        q_scr[...] = qh.astype(cd)
        m_scr[...] = jnp.full(m_scr.shape, -jnp.inf, jnp.float32)
        l_scr[...] = jnp.zeros(l_scr.shape, jnp.float32)
        acc_scr[...] = jnp.zeros(acc_scr.shape, jnp.float32)

    # ---- per-KV-tile online softmax (K/V already projected on the host) ----
    kh = jnp.transpose(k_ref[0].reshape(tk, n_heads, d_k), (1, 0, 2)).astype(cd)
    vh = jnp.transpose(v_ref[0].reshape(tk, n_heads, d_v), (1, 0, 2)).astype(cd)

    s = jnp.einsum("hqd,hkd->hqk", q_scr[...], kh,
                   preferred_element_type=jnp.float32)                  # (H, tq, tk) f32
    m_prev = m_scr[...]
    m_new = jnp.maximum(m_prev, jnp.max(s, axis=-1, keepdims=True))
    alpha = jnp.exp(m_prev - m_new)
    p = jnp.exp(s - m_new)
    l_scr[...] = alpha * l_scr[...] + jnp.sum(p, axis=-1, keepdims=True)
    acc_scr[...] = alpha * acc_scr[...] + jnp.einsum(
        "hqk,hkd->hqd", p.astype(cd), vh, preferred_element_type=jnp.float32)
    m_scr[...] = m_new

    # ---- last KV step: output projection + LN + FFN + LN, write the tile ----
    @pl.when(ki == pl.num_programs(2) - 1)
    def _finish():
        # exact normalization (tiny op count; avoids approx-reciprocal drift)
        ctx = acc_scr[...] * (1.0 / l_scr[...])                         # (H, tq, dv)
        ctx = jnp.transpose(ctx, (1, 0, 2)).reshape(tq, n_heads * d_v)  # (tq, H*dv)
        att = jnp.dot(ctx.astype(cd), wo_ref[...],
                      preferred_element_type=jnp.float32) + bo_ref[...]  # (tq, D)

        x = q_ref[0].astype(jnp.float32)                 # residual path in f32
        y = _layer_norm(x + att, g1_ref[...], be1_ref[...])

        hdd = jnp.dot(y.astype(cd), w1_ref[...],
                      preferred_element_type=jnp.float32) + b1_ref[...]  # (tq, DFF)
        hdd = jnp.maximum(hdd, 0.0)
        ff = jnp.dot(hdd.astype(cd), w2_ref[...],
                     preferred_element_type=jnp.float32) + b2_ref[...]   # (tq, D)

        o_ref[0] = _layer_norm(y + ff, g2_ref[...], be2_ref[...]).astype(o_ref.dtype)


# --------------------------------------------------------------------------
# Host wrapper
# --------------------------------------------------------------------------
def _pick_block(S, target):
    """Largest multiple of 8 (<= target) dividing S, else full S."""
    if S <= target:
        return S
    t = (target // 8) * 8
    while t >= 8:
        if S % t == 0:
            return t
        t -= 8
    return S


def _vmem_limit_bytes():
    try:
        cap = int(pltpu.get_tpu_info().vmem_capacity_bytes)   # generation-aware
    except Exception:
        cap = 64 * 1024 * 1024                                # conservative (v7x per-TC)
    return min(int(cap * 3 // 4), 100 * 1024 * 1024)


def _weight_spec(shape, single_buffer):
    ndim = len(shape)
    imap = lambda b, qi, ki, _n=ndim: (0,) * _n   # grid-invariant: fetched once
    if single_buffer:
        return pl.BlockSpec(shape, imap, pipeline_mode=pl.Buffered(1))
    return pl.BlockSpec(shape, imap)


def encoder_layer(queries, keys, values, params, *, n_heads, d_k, d_v,
                  compute_dtype=jnp.bfloat16, q_block=None, kv_block=None):
    B, S, D = queries.shape
    HDK, HDV = n_heads * d_k, n_heads * d_v
    DFF = params["w1"].shape[1]
    # tq target 256: fills the 256-wide MXU on v6e/v7x; KV streaming keeps the
    # VMEM working set small, so the same tile is safe under v7x's 64 MiB.
    tq = q_block if q_block is not None else _pick_block(S, 256)
    tk = kv_block if kv_block is not None else _pick_block(S, 256)
    assert S % tq == 0 and S % tk == 0

    cd = compute_dtype
    f32 = jnp.float32
    prec = jax.lax.Precision.HIGHEST if cd == jnp.float32 else None

    # ---- hoisted K/V projections (computed once, not per query tile) -------
    k_proj = (jnp.dot(keys.astype(cd), params["wk"].astype(cd), precision=prec,
                      preferred_element_type=f32) + params["bk"]).astype(cd)
    v_proj = (jnp.dot(values.astype(cd), params["wv"].astype(cd), precision=prec,
                      preferred_element_type=f32) + params["bv"]).astype(cd)

    # Matmul weights stored in the MXU compute dtype (halves weight DMA for
    # bf16); biases / LayerNorm params stay f32 (added to f32 accumulators).
    weight_list = [
        params["wq"].astype(cd), params["bq"].astype(f32),
        params["wo"].astype(cd), params["bo"].astype(f32),
        params["g1"].astype(f32), params["be1"].astype(f32),
        params["w1"].astype(cd), params["b1"].astype(f32),
        params["w2"].astype(cd), params["b2"].astype(f32),
        params["g2"].astype(f32), params["be2"].astype(f32),
    ]

    q_spec = pl.BlockSpec((1, tq, D), lambda b, qi, ki: (b, qi, 0))
    k_spec = pl.BlockSpec((1, tk, HDK), lambda b, qi, ki: (b, ki, 0))
    v_spec = pl.BlockSpec((1, tk, HDV), lambda b, qi, ki: (b, ki, 0))
    out_spec = pl.BlockSpec((1, tq, D), lambda b, qi, ki: (b, qi, 0))

    scratch = [
        pltpu.VMEM((n_heads, tq, d_k), cd),    # projected, scaled, head-split Q
        pltpu.VMEM((n_heads, tq, 1), f32),     # running max
        pltpu.VMEM((n_heads, tq, 1), f32),     # running sum
        pltpu.VMEM((n_heads, tq, d_v), f32),   # context accumulator
    ]

    # Advisory cost so XLA can overlap the hoisted projections with the kernel.
    flops = 2 * B * S * (D * HDK + n_heads * S * d_k + n_heads * S * d_v
                         + HDV * D + 2 * D * DFF)
    transcendentals = B * n_heads * S * S
    bytes_accessed = int(
        2 * queries.nbytes + (S // tq) * (k_proj.nbytes + v_proj.nbytes)
        + sum(int(w.nbytes) for w in weight_list))

    kernel = partial(encoder_layer_kernel, n_heads=n_heads, d_k=d_k, d_v=d_v)

    def _forward(single_buffer_weights):
        wspecs = [_weight_spec(w.shape, single_buffer_weights) for w in weight_list]
        return pl.pallas_call(
            kernel,
            out_shape=jax.ShapeDtypeStruct((B, S, D), queries.dtype),
            grid_spec=pltpu.PrefetchScalarGridSpec(
                num_scalar_prefetch=0,
                grid=(B, S // tq, S // tk),
                in_specs=[q_spec, k_spec, v_spec] + wspecs,
                out_specs=out_spec,
                scratch_shapes=scratch,
            ),
            compiler_params=pltpu.CompilerParams(
                dimension_semantics=("parallel", "parallel", "arbitrary"),
                vmem_limit_bytes=_vmem_limit_bytes(),
            ),
            cost_estimate=pl.CostEstimate(
                flops=int(flops),
                transcendentals=int(transcendentals),
                bytes_accessed=int(bytes_accessed),
            ),
        )(queries, k_proj, v_proj, *weight_list)

    try:
        return _forward(True)            # single-buffered grid-invariant weights
    except Exception:
        return _forward(False)           # fall back to default double-buffering


# -------------------- pure-JAX reference for validation --------------------
def encoder_layer_ref(queries, keys, values, params, *, n_heads, d_k, d_v):
    P = jax.lax.Precision.HIGHEST        # keep the reference in true f32
    B, S, D = queries.shape
    q = jnp.dot(queries, params["wq"], precision=P) + params["bq"]
    k = jnp.dot(keys, params["wk"], precision=P) + params["bk"]
    v = jnp.dot(values, params["wv"], precision=P) + params["bv"]
    q = q.reshape(B, S, n_heads, d_k).transpose(0, 2, 1, 3)
    k = k.reshape(B, S, n_heads, d_k).transpose(0, 2, 1, 3)
    v = v.reshape(B, S, n_heads, d_v).transpose(0, 2, 1, 3)
    s = jnp.einsum("bhqd,bhkd->bhqk", q, k, precision=P) / math.sqrt(d_k)
    p = jax.nn.softmax(s, axis=-1)
    att = jnp.einsum("bhqk,bhkd->bhqd", p, v, precision=P)
    att = att.transpose(0, 2, 1, 3).reshape(B, S, n_heads * d_v)
    att = jnp.dot(att, params["wo"], precision=P) + params["bo"]
    y = _layer_norm(queries + att, params["g1"], params["be1"])
    h = jnp.maximum(jnp.dot(y, params["w1"], precision=P) + params["b1"], 0.0)
    ff = jnp.dot(h, params["w2"], precision=P) + params["b2"]
    return _layer_norm(y + ff, params["g2"], params["be2"])


if __name__ == "__main__":
    # Small, lane-dense shapes consistent with the module's structure.
    B, S = 2, 8
    D, H, DK, DV, DFF = 128, 4, 32, 32, 256

    key = jax.random.PRNGKey(0)
    ks = jax.random.split(key, 16)

    def _w(k, shape, fan_in):
        return jax.random.normal(k, shape, jnp.float32) / math.sqrt(fan_in)

    params = {
        "wq": _w(ks[0], (D, H * DK), D),
        "wk": _w(ks[1], (D, H * DK), D),
        "wv": _w(ks[2], (D, H * DV), D),
        "wo": _w(ks[3], (H * DV, D), H * DV),
        "w1": _w(ks[4], (D, DFF), D),
        "w2": _w(ks[5], (DFF, D), DFF),
        "bq": 0.01 * jax.random.normal(ks[6], (1, H * DK), jnp.float32),
        "bk": 0.01 * jax.random.normal(ks[7], (1, H * DK), jnp.float32),
        "bv": 0.01 * jax.random.normal(ks[8], (1, H * DV), jnp.float32),
        "bo": 0.01 * jax.random.normal(ks[9], (1, D), jnp.float32),
        "b1": 0.01 * jax.random.normal(ks[10], (1, DFF), jnp.float32),
        "b2": 0.01 * jax.random.normal(ks[11], (1, D), jnp.float32),
        "g1": jnp.ones((1, D), jnp.float32), "be1": jnp.zeros((1, D), jnp.float32),
        "g2": jnp.ones((1, D), jnp.float32), "be2": jnp.zeros((1, D), jnp.float32),
    }

    queries = jax.random.normal(ks[12], (B, S, D), jnp.float32)
    keys_in = jax.random.normal(ks[13], (B, S, D), jnp.float32)
    values_in = jax.random.normal(ks[14], (B, S, D), jnp.float32)

    ref = encoder_layer_ref(queries, keys_in, values_in, params,
                            n_heads=H, d_k=DK, d_v=DV)

    # f32 MXU operands: tight correctness check of the kernel structure.
    out_f32 = encoder_layer(queries, keys_in, values_in, params,
                            n_heads=H, d_k=DK, d_v=DV,
                            compute_dtype=jnp.float32)
    out_f32 = jax.block_until_ready(out_f32)
    assert jnp.allclose(out_f32, ref, atol=2e-3, rtol=2e-3), "f32 path mismatch"

    # bf16 MXU operands (production path): compare against the f32 kernel to
    # isolate pure quantization error, and loosely against the reference.
    out_bf16 = encoder_layer(queries, keys_in, values_in, params,
                             n_heads=H, d_k=DK, d_v=DV,
                             compute_dtype=jnp.bfloat16)
    out_bf16 = jax.block_until_ready(out_bf16)
    assert jnp.allclose(out_bf16, out_f32, atol=1e-1, rtol=1e-1), "bf16 vs f32 kernel mismatch"
    assert jnp.allclose(out_bf16, ref, atol=1e-1, rtol=1e-1), "bf16 path mismatch"

    # TODO(synk): attention_mask / attention_weights (None in the spec's default
    # forward) and dropout (identity at inference) are not modeled.
    print("KERNEL_OK")
</pallas_src>

<mosaic_0001>
module attributes {stable_mosaic.version = 11 : i64} {
  func.func @encoder_layer_kernel(%arg0: i32, %arg1: i32, %arg2: i32, %arg3: memref<1x8x128xf32, #tpu.memory_space<vmem>>, %arg4: memref<1x8x128xf32, #tpu.memory_space<vmem>>, %arg5: memref<1x8x128xf32, #tpu.memory_space<vmem>>, %arg6: memref<128x128xf32, #tpu.memory_space<vmem>>, %arg7: memref<1x128xf32, #tpu.memory_space<vmem>>, %arg8: memref<128x128xf32, #tpu.memory_space<vmem>>, %arg9: memref<1x128xf32, #tpu.memory_space<vmem>>, %arg10: memref<1x128xf32, #tpu.memory_space<vmem>>, %arg11: memref<1x128xf32, #tpu.memory_space<vmem>>, %arg12: memref<128x256xf32, #tpu.memory_space<vmem>>, %arg13: memref<1x256xf32, #tpu.memory_space<vmem>>, %arg14: memref<256x128xf32, #tpu.memory_space<vmem>>, %arg15: memref<1x128xf32, #tpu.memory_space<vmem>>, %arg16: memref<1x128xf32, #tpu.memory_space<vmem>>, %arg17: memref<1x128xf32, #tpu.memory_space<vmem>>, %arg18: memref<1x8x128xf32, #tpu.memory_space<vmem>>, %arg19: memref<4x8x32xf32, #tpu.memory_space<vmem>>, %arg20: memref<4x8x1xf32, #tpu.memory_space<vmem>>, %arg21: memref<4x8x1xf32, #tpu.memory_space<vmem>>, %arg22: memref<4x8x32xf32, #tpu.memory_space<vmem>>) attributes {dimension_semantics = [#tpu.dimension_semantics<parallel>, #tpu.dimension_semantics<parallel>, #tpu.dimension_semantics<arbitrary>], iteration_bounds = array<i64: 2, 1, 1>, scalar_prefetch = 0 : i64, scratch_operands = 4 : i64, tpu.core_type = #tpu.core_type<tc>, window_params = [{transform_indices = @transform_0, window_bounds = array<i64: 1, 8, 128>}, {transform_indices = @transform_1, window_bounds = array<i64: 1, 8, 128>}, {transform_indices = @transform_2, window_bounds = array<i64: 1, 8, 128>}, {pipeline_mode = #tpu.pipeline_mode<synchronous>, transform_indices = @transform_3, window_bounds = array<i64: 128, 128>}, {pipeline_mode = #tpu.pipeline_mode<synchronous>, transform_indices = @transform_4, window_bounds = array<i64: 1, 128>}, {pipeline_mode = #tpu.pipeline_mode<synchronous>, transform_indices = @transform_5, window_bounds = array<i64: 128, 128>}, {pipeline_mode = #tpu.pipeline_mode<synchronous>, transform_indices = @transform_6, window_bounds = array<i64: 1, 128>}, {pipeline_mode = #tpu.pipeline_mode<synchronous>, transform_indices = @transform_7, window_bounds = array<i64: 1, 128>}, {pipeline_mode = #tpu.pipeline_mode<synchronous>, transform_indices = @transform_8, window_bounds = array<i64: 1, 128>}, {pipeline_mode = #tpu.pipeline_mode<synchronous>, transform_indices = @transform_9, window_bounds = array<i64: 128, 256>}, {pipeline_mode = #tpu.pipeline_mode<synchronous>, transform_indices = @transform_10, window_bounds = array<i64: 1, 256>}, {pipeline_mode = #tpu.pipeline_mode<synchronous>, transform_indices = @transform_11, window_bounds = array<i64: 256, 128>}, {pipeline_mode = #tpu.pipeline_mode<synchronous>, transform_indices = @transform_12, window_bounds = array<i64: 1, 128>}, {pipeline_mode = #tpu.pipeline_mode<synchronous>, transform_indices = @transform_13, window_bounds = array<i64: 1, 128>}, {pipeline_mode = #tpu.pipeline_mode<synchronous>, transform_indices = @transform_14, window_bounds = array<i64: 1, 128>}, {transform_indices = @transform_15, window_bounds = array<i64: 1, 8, 128>}]} {
    %c0_i32 = arith.constant 0 : i32
    %0 = arith.cmpi eq, %arg2, %c0_i32 : i32
    %1 = arith.extui %0 : i1 to i32
    %c0_i32_0 = arith.constant 0 : i32
    %2 = arith.cmpi ne, %1, %c0_i32_0 : i32
    scf.if %2 {
      %c0_32 = arith.constant 0 : index
      %c0_33 = arith.constant 0 : index
      %c0_34 = arith.constant 0 : index
      %38 = vector.load %arg3[%c0_32, %c0_33, %c0_34] : memref<1x8x128xf32, #tpu.memory_space<vmem>>, vector<1x8x128xf32>
      %39 = vector.shape_cast %38 : vector<1x8x128xf32> to vector<8x128xf32>
      %c0_35 = arith.constant 0 : index
      %c0_36 = arith.constant 0 : index
      %40 = vector.load %arg6[%c0_35, %c0_36] : memref<128x128xf32, #tpu.memory_space<vmem>>, vector<128x128xf32>
      %cst_37 = arith.constant dense<0.000000e+00> : vector<8x128xf32>
      %41 = tpu.matmul %39, %40, %cst_37 {dimension_numbers = #tpu.dot_dimension_numbers<[1], [0], [0], [1], [0, 0, 1, 1], [], []>} : vector<8x128xf32>, vector<128x128xf32>, vector<8x128xf32> -> vector<8x128xf32>
      %c0_38 = arith.constant 0 : index
      %c0_39 = arith.constant 0 : index
      %42 = vector.load %arg7[%c0_38, %c0_39] : memref<1x128xf32, #tpu.memory_space<vmem>>, vector<1x128xf32>
      %43 = vector.broadcast %42 : vector<1x128xf32> to vector<8x128xf32>
      %44 = arith.addf %41, %43 : vector<8x128xf32>
      %cst_40 = arith.constant 0.176776692 : f32
      %45 = vector.broadcast %cst_40 : f32 to vector<8x128xf32>
      %46 = arith.mulf %44, %45 : vector<8x128xf32>
      %47 = vector.shape_cast %46 : vector<8x128xf32> to vector<8x4x32xf32>
      %48 = tpu.transpose %47, [1, 0, 2] : vector<8x4x32xf32> -> vector<4x8x32xf32>
      %c0_41 = arith.constant 0 : index
      %c0_42 = arith.constant 0 : index
      %c0_43 = arith.constant 0 : index
      %49 = vector.load %arg19[%c0_41, %c0_42, %c0_43] : memref<4x8x32xf32, #tpu.memory_space<vmem>>, vector<4x8x32xf32>
      tpu.vector_store %arg19[%c0_41, %c0_42, %c0_43], %48 {strides = array<i32>} : memref<4x8x32xf32, #tpu.memory_space<vmem>>, vector<4x8x32xf32>,
      %cst_44 = arith.constant 0xFF800000 : f32
      %50 = vector.broadcast %cst_44 : f32 to vector<4x8x1xf32>
      %c0_45 = arith.constant 0 : index
      %c0_46 = arith.constant 0 : index
      %c0_47 = arith.constant 0 : index
      %51 = vector.load %arg20[%c0_45, %c0_46, %c0_47] : memref<4x8x1xf32, #tpu.memory_space<vmem>>, vector<4x8x1xf32>
      tpu.vector_store %arg20[%c0_45, %c0_46, %c0_47], %50 {strides = array<i32>} : memref<4x8x1xf32, #tpu.memory_space<vmem>>, vector<4x8x1xf32>,
      %cst_48 = arith.constant 0.000000e+00 : f32
      %52 = vector.broadcast %cst_48 : f32 to vector<4x8x1xf32>
      %c0_49 = arith.constant 0 : index
      %c0_50 = arith.constant 0 : index
      %c0_51 = arith.constant 0 : index
      %53 = vector.load %arg21[%c0_49, %c0_50, %c0_51] : memref<4x8x1xf32, #tpu.memory_space<vmem>>, vector<4x8x1xf32>
      tpu.vector_store %arg21[%c0_49, %c0_50, %c0_51], %52 {strides = array<i32>} : memref<4x8x1xf32, #tpu.memory_space<vmem>>, vector<4x8x1xf32>,
      %cst_52 = arith.constant 0.000000e+00 : f32
      %54 = vector.broadcast %cst_52 : f32 to vector<4x8x32xf32>
      %c0_53 = arith.constant 0 : index
      %c0_54 = arith.constant 0 : index
      %c0_55 = arith.constant 0 : index
      %55 = vector.load %arg22[%c0_53, %c0_54, %c0_55] : memref<4x8x32xf32, #tpu.memory_space<vmem>>, vector<4x8x32xf32>
      tpu.vector_store %arg22[%c0_53, %c0_54, %c0_55], %54 {strides = array<i32>} : memref<4x8x32xf32, #tpu.memory_space<vmem>>, vector<4x8x32xf32>,
    } else {
    }
    %c0 = arith.constant 0 : index
    %c0_1 = arith.constant 0 : index
    %c0_2 = arith.constant 0 : index
    %3 = vector.load %arg4[%c0, %c0_1, %c0_2] : memref<1x8x128xf32, #tpu.memory_space<vmem>>, vector<1x8x128xf32>
    %4 = vector.shape_cast %3 : vector<1x8x128xf32> to vector<8x128xf32>
    %5 = vector.shape_cast %4 : vector<8x128xf32> to vector<8x4x32xf32>
    %6 = tpu.transpose %5, [1, 0, 2] : vector<8x4x32xf32> -> vector<4x8x32xf32>
    %c0_3 = arith.constant 0 : index
    %c0_4 = arith.constant 0 : index
    %c0_5 = arith.constant 0 : index
    %7 = vector.load %arg5[%c0_3, %c0_4, %c0_5] : memref<1x8x128xf32, #tpu.memory_space<vmem>>, vector<1x8x128xf32>
    %8 = vector.shape_cast %7 : vector<1x8x128xf32> to vector<8x128xf32>
    %9 = vector.shape_cast %8 : vector<8x128xf32> to vector<8x4x32xf32>
    %10 = tpu.transpose %9, [1, 0, 2] : vector<8x4x32xf32> -> vector<4x8x32xf32>
    %c0_6 = arith.constant 0 : index
    %c0_7 = arith.constant 0 : index
    %c0_8 = arith.constant 0 : index
    %11 = vector.load %arg19[%c0_6, %c0_7, %c0_8] : memref<4x8x32xf32, #tpu.memory_space<vmem>>, vector<4x8x32xf32>
    "tpu.trace_start"() <{level = 10 : i32, message = "hqd,hkd->hqk"}> : () -> ()
    %cst = arith.constant dense<0.000000e+00> : vector<4x8x8xf32>
    %12 = tpu.matmul %11, %6, %cst {dimension_numbers = #tpu.dot_dimension_numbers<[2], [2], [1], [1], [0, 0, 0, 1, 1, 1], [0], [0]>} : vector<4x8x32xf32>, vector<4x8x32xf32>, vector<4x8x8xf32> -> vector<4x8x8xf32>
    "tpu.trace_stop"() : () -> ()
    %c0_9 = arith.constant 0 : index
    %c0_10 = arith.constant 0 : index
    %c0_11 = arith.constant 0 : index
    %13 = vector.load %arg20[%c0_9, %c0_10, %c0_11] : memref<4x8x1xf32, #tpu.memory_space<vmem>>, vector<4x8x1xf32>
    %cst_12 = arith.constant dense<0xFF800000> : vector<4x8xf32>
    %14 = vector.multi_reduction <maximumf>, %12, %cst_12 [2] : vector<4x8x8xf32> to vector<4x8xf32>
    %15 = vector.shape_cast %14 : vector<4x8xf32> to vector<4x8x1xf32>
    %16 = arith.maximumf %13, %15 : vector<4x8x1xf32>
    %17 = arith.subf %13, %16 : vector<4x8x1xf32>
    %18 = math.exp %17 : vector<4x8x1xf32>
    %19 = vector.broadcast %16 : vector<4x8x1xf32> to vector<4x8x8xf32>
    %20 = arith.subf %12, %19 : vector<4x8x8xf32>
    %21 = math.exp %20 : vector<4x8x8xf32>
    %c0_13 = arith.constant 0 : index
    %c0_14 = arith.constant 0 : index
    %c0_15 = arith.constant 0 : index
    %22 = vector.load %arg21[%c0_13, %c0_14, %c0_15] : memref<4x8x1xf32, #tpu.memory_space<vmem>>, vector<4x8x1xf32>
    %23 = arith.mulf %18, %22 : vector<4x8x1xf32>
    %cst_16 = arith.constant dense<0.000000e+00> : vector<4x8xf32>
    %24 = vector.multi_reduction <add>, %21, %cst_16 [2] : vector<4x8x8xf32> to vector<4x8xf32>
    %25 = vector.shape_cast %24 : vector<4x8xf32> to vector<4x8x1xf32>
    %26 = arith.addf %23, %25 : vector<4x8x1xf32>
    %c0_17 = arith.constant 0 : index
    %c0_18 = arith.constant 0 : index
    %c0_19 = arith.constant 0 : index
    %27 = vector.load %arg21[%c0_17, %c0_18, %c0_19] : memref<4x8x1xf32, #tpu.memory_space<vmem>>, vector<4x8x1xf32>
    tpu.vector_store %arg21[%c0_17, %c0_18, %c0_19], %26 {strides = array<i32>} : memref<4x8x1xf32, #tpu.memory_space<vmem>>, vector<4x8x1xf32>,
    %c0_20 = arith.constant 0 : index
    %c0_21 = arith.constant 0 : index
    %c0_22 = arith.constant 0 : index
    %28 = vector.load %arg22[%c0_20, %c0_21, %c0_22] : memref<4x8x32xf32, #tpu.memory_space<vmem>>, vector<4x8x32xf32>
    %29 = vector.broadcast %18 : vector<4x8x1xf32> to vector<4x8x32xf32>
    %30 = arith.mulf %29, %28 : vector<4x8x32xf32>
    "tpu.trace_start"() <{level = 10 : i32, message = "hqk,hkd->hqd"}> : () -> ()
    %cst_23 = arith.constant dense<0.000000e+00> : vector<4x8x32xf32>
    %31 = tpu.matmul %21, %10, %cst_23 {dimension_numbers = #tpu.dot_dimension_numbers<[2], [1], [1], [2], [0, 0, 0, 1, 1, 2], [0], [0]>} : vector<4x8x8xf32>, vector<4x8x32xf32>, vector<4x8x32xf32> -> vector<4x8x32xf32>
    "tpu.trace_stop"() : () -> ()
    %32 = arith.addf %30, %31 : vector<4x8x32xf32>
    %c0_24 = arith.constant 0 : index
    %c0_25 = arith.constant 0 : index
    %c0_26 = arith.constant 0 : index
    %33 = vector.load %arg22[%c0_24, %c0_25, %c0_26] : memref<4x8x32xf32, #tpu.memory_space<vmem>>, vector<4x8x32xf32>
    tpu.vector_store %arg22[%c0_24, %c0_25, %c0_26], %32 {strides = array<i32>} : memref<4x8x32xf32, #tpu.memory_space<vmem>>, vector<4x8x32xf32>,
    %c0_27 = arith.constant 0 : index
    %c0_28 = arith.constant 0 : index
    %c0_29 = arith.constant 0 : index
    %34 = vector.load %arg20[%c0_27, %c0_28, %c0_29] : memref<4x8x1xf32, #tpu.memory_space<vmem>>, vector<4x8x1xf32>
    tpu.vector_store %arg20[%c0_27, %c0_28, %c0_29], %16 {strides = array<i32>} : memref<4x8x1xf32, #tpu.memory_space<vmem>>, vector<4x8x1xf32>,
    %c0_i32_30 = arith.constant 0 : i32
    %35 = arith.cmpi eq, %arg2, %c0_i32_30 : i32
    %36 = arith.extui %35 : i1 to i32
    %c0_i32_31 = arith.constant 0 : i32
    %37 = arith.cmpi ne, %36, %c0_i32_31 : i32
    scf.if %37 {
      %c0_32 = arith.constant 0 : index
      %c0_33 = arith.constant 0 : index
      %c0_34 = arith.constant 0 : index
      %38 = vector.load %arg22[%c0_32, %c0_33, %c0_34] : memref<4x8x32xf32, #tpu.memory_space<vmem>>, vector<4x8x32xf32>
      %c0_35 = arith.constant 0 : index
      %c0_36 = arith.constant 0 : index
      %c0_37 = arith.constant 0 : index
      %39 = vector.load %arg21[%c0_35, %c0_36, %c0_37] : memref<4x8x1xf32, #tpu.memory_space<vmem>>, vector<4x8x1xf32>
      %cst_38 = arith.constant 1.000000e+00 : f32
      %40 = vector.broadcast %cst_38 : f32 to vector<4x8x1xf32>
      %41 = arith.divf %40, %39 : vector<4x8x1xf32>
      %42 = vector.broadcast %41 : vector<4x8x1xf32> to vector<4x8x32xf32>
      %43 = arith.mulf %38, %42 : vector<4x8x32xf32>
      %44 = tpu.transpose %43, [1, 0, 2] : vector<4x8x32xf32> -> vector<8x4x32xf32>
      %45 = vector.shape_cast %44 : vector<8x4x32xf32> to vector<8x128xf32>
      %c0_39 = arith.constant 0 : index
      %c0_40 = arith.constant 0 : index
      %46 = vector.load %arg8[%c0_39, %c0_40] : memref<128x128xf32, #tpu.memory_space<vmem>>, vector<128x128xf32>
      %cst_41 = arith.constant dense<0.000000e+00> : vector<8x128xf32>
      %47 = tpu.matmul %45, %46, %cst_41 {dimension_numbers = #tpu.dot_dimension_numbers<[1], [0], [0], [1], [0, 0, 1, 1], [], []>} : vector<8x128xf32>, vector<128x128xf32>, vector<8x128xf32> -> vector<8x128xf32>
      %c0_42 = arith.constant 0 : index
      %c0_43 = arith.constant 0 : index
      %48 = vector.load %arg9[%c0_42, %c0_43] : memref<1x128xf32, #tpu.memory_space<vmem>>, vector<1x128xf32>
      %49 = vector.broadcast %48 : vector<1x128xf32> to vector<8x128xf32>
      %50 = arith.addf %47, %49 : vector<8x128xf32>
      %c0_44 = arith.constant 0 : index
      %c0_45 = arith.constant 0 : index
      %c0_46 = arith.constant 0 : index
      %51 = vector.load %arg3[%c0_44, %c0_45, %c0_46] : memref<1x8x128xf32, #tpu.memory_space<vmem>>, vector<1x8x128xf32>
      %52 = vector.shape_cast %51 : vector<1x8x128xf32> to vector<8x128xf32>
      %53 = arith.addf %52, %50 : vector<8x128xf32>
      %c0_47 = arith.constant 0 : index
      %c0_48 = arith.constant 0 : index
      %54 = vector.load %arg10[%c0_47, %c0_48] : memref<1x128xf32, #tpu.memory_space<vmem>>, vector<1x128xf32>
      %c0_49 = arith.constant 0 : index
      %c0_50 = arith.constant 0 : index
      %55 = vector.load %arg11[%c0_49, %c0_50] : memref<1x128xf32, #tpu.memory_space<vmem>>, vector<1x128xf32>
      %cst_51 = arith.constant dense<0.000000e+00> : vector<8xf32>
      %56 = vector.multi_reduction <add>, %53, %cst_51 [1] : vector<8x128xf32> to vector<8xf32>
      %57 = vector.shape_cast %56 : vector<8xf32> to vector<8x1xf32>
      %cst_52 = arith.constant 1.280000e+02 : f32
      %58 = vector.broadcast %cst_52 : f32 to vector<8x1xf32>
      %59 = arith.divf %57, %58 : vector<8x1xf32>
      %60 = vector.broadcast %59 : vector<8x1xf32> to vector<8x128xf32>
      %61 = arith.subf %53, %60 : vector<8x128xf32>
      %62 = arith.mulf %61, %61 : vector<8x128xf32>
      %cst_53 = arith.constant dense<0.000000e+00> : vector<8xf32>
      %63 = vector.multi_reduction <add>, %62, %cst_53 [1] : vector<8x128xf32> to vector<8xf32>
      %64 = vector.shape_cast %63 : vector<8xf32> to vector<8x1xf32>
      %cst_54 = arith.constant 1.280000e+02 : f32
      %65 = vector.broadcast %cst_54 : f32 to vector<8x1xf32>
      %66 = arith.divf %64, %65 : vector<8x1xf32>
      %67 = vector.broadcast %59 : vector<8x1xf32> to vector<8x128xf32>
      %68 = arith.subf %53, %67 : vector<8x128xf32>
      %cst_55 = arith.constant 9.99999974E-6 : f32
      %69 = vector.broadcast %cst_55 : f32 to vector<8x1xf32>
      %70 = arith.addf %66, %69 : vector<8x1xf32>
      %71 = math.rsqrt %70 : vector<8x1xf32>
      %72 = vector.broadcast %71 : vector<8x1xf32> to vector<8x128xf32>
      %73 = arith.mulf %68, %72 : vector<8x128xf32>
      %74 = vector.broadcast %54 : vector<1x128xf32> to vector<8x128xf32>
      %75 = arith.mulf %73, %74 : vector<8x128xf32>
      %76 = vector.broadcast %55 : vector<1x128xf32> to vector<8x128xf32>
      %77 = arith.addf %75, %76 : vector<8x128xf32>
      %c0_56 = arith.constant 0 : index
      %c0_57 = arith.constant 0 : index
      %78 = vector.load %arg12[%c0_56, %c0_57] : memref<128x256xf32, #tpu.memory_space<vmem>>, vector<128x256xf32>
      %cst_58 = arith.constant dense<0.000000e+00> : vector<8x256xf32>
      %79 = tpu.matmul %77, %78, %cst_58 {dimension_numbers = #tpu.dot_dimension_numbers<[1], [0], [0], [1], [0, 0, 1, 1], [], []>} : vector<8x128xf32>, vector<128x256xf32>, vector<8x256xf32> -> vector<8x256xf32>
      %c0_59 = arith.constant 0 : index
      %c0_60 = arith.constant 0 : index
      %80 = vector.load %arg13[%c0_59, %c0_60] : memref<1x256xf32, #tpu.memory_space<vmem>>, vector<1x256xf32>
      %81 = vector.broadcast %80 : vector<1x256xf32> to vector<8x256xf32>
      %82 = arith.addf %79, %81 : vector<8x256xf32>
      %cst_61 = arith.constant 0.000000e+00 : f32
      %83 = vector.broadcast %cst_61 : f32 to vector<8x256xf32>
      %84 = arith.maximumf %82, %83 : vector<8x256xf32>
      %c0_62 = arith.constant 0 : index
      %c0_63 = arith.constant 0 : index
      %85 = vector.load %arg14[%c0_62, %c0_63] : memref<256x128xf32, #tpu.memory_space<vmem>>, vector<256x128xf32>
      %cst_64 = arith.constant dense<0.000000e+00> : vector<8x128xf32>
      %86 = tpu.matmul %84, %85, %cst_64 {dimension_numbers = #tpu.dot_dimension_numbers<[1], [0], [0], [1], [0, 0, 1, 1], [], []>} : vector<8x256xf32>, vector<256x128xf32>, vector<8x128xf32> -> vector<8x128xf32>
      %c0_65 = arith.constant 0 : index
      %c0_66 = arith.constant 0 : index
      %87 = vector.load %arg15[%c0_65, %c0_66] : memref<1x128xf32, #tpu.memory_space<vmem>>, vector<1x128xf32>
      %88 = vector.broadcast %87 : vector<1x128xf32> to vector<8x128xf32>
      %89 = arith.addf %86, %88 : vector<8x128xf32>
      %90 = arith.addf %77, %89 : vector<8x128xf32>
      %c0_67 = arith.constant 0 : index
      %c0_68 = arith.constant 0 : index
      %91 = vector.load %arg16[%c0_67, %c0_68] : memref<1x128xf32, #tpu.memory_space<vmem>>, vector<1x128xf32>
      %c0_69 = arith.constant 0 : index
      %c0_70 = arith.constant 0 : index
      %92 = vector.load %arg17[%c0_69, %c0_70] : memref<1x128xf32, #tpu.memory_space<vmem>>, vector<1x128xf32>
      %cst_71 = arith.constant dense<0.000000e+00> : vector<8xf32>
      %93 = vector.multi_reduction <add>, %90, %cst_71 [1] : vector<8x128xf32> to vector<8xf32>
      %94 = vector.shape_cast %93 : vector<8xf32> to vector<8x1xf32>
      %cst_72 = arith.constant 1.280000e+02 : f32
      %95 = vector.broadcast %cst_72 : f32 to vector<8x1xf32>
      %96 = arith.divf %94, %95 : vector<8x1xf32>
      %97 = vector.broadcast %96 : vector<8x1xf32> to vector<8x128xf32>
      %98 = arith.subf %90, %97 : vector<8x128xf32>
      %99 = arith.mulf %98, %98 : vector<8x128xf32>
      %cst_73 = arith.constant dense<0.000000e+00> : vector<8xf32>
      %100 = vector.multi_reduction <add>, %99, %cst_73 [1] : vector<8x128xf32> to vector<8xf32>
      %101 = vector.shape_cast %100 : vector<8xf32> to vector<8x1xf32>
      %cst_74 = arith.constant 1.280000e+02 : f32
      %102 = vector.broadcast %cst_74 : f32 to vector<8x1xf32>
      %103 = arith.divf %101, %102 : vector<8x1xf32>
      %104 = vector.broadcast %96 : vector<8x1xf32> to vector<8x128xf32>
      %105 = arith.subf %90, %104 : vector<8x128xf32>
      %cst_75 = arith.constant 9.99999974E-6 : f32
      %106 = vector.broadcast %cst_75 : f32 to vector<8x1xf32>
      %107 = arith.addf %103, %106 : vector<8x1xf32>
      %108 = math.rsqrt %107 : vector<8x1xf32>
      %109 = vector.broadcast %108 : vector<8x1xf32> to vector<8x128xf32>
      %110 = arith.mulf %105, %109 : vector<8x128xf32>
      %111 = vector.broadcast %91 : vector<1x128xf32> to vector<8x128xf32>
      %112 = arith.mulf %110, %111 : vector<8x128xf32>
      %113 = vector.broadcast %92 : vector<1x128xf32> to vector<8x128xf32>
      %114 = arith.addf %112, %113 : vector<8x128xf32>
      %c0_76 = arith.constant 0 : index
      %c0_77 = arith.constant 0 : index
      %c0_78 = arith.constant 0 : index
      %115 = vector.load %arg18[%c0_76, %c0_77, %c0_78] : memref<1x8x128xf32, #tpu.memory_space<vmem>>, vector<1x8x128xf32>
      %116 = vector.shape_cast %115 : vector<1x8x128xf32> to vector<8x128xf32>
      %117 = vector.shape_cast %114 : vector<8x128xf32> to vector<1x8x128xf32>
      tpu.vector_store %arg18[%c0_76, %c0_77, %c0_78], %117 {strides = array<i32>} : memref<1x8x128xf32, #tpu.memory_space<vmem>>, vector<1x8x128xf32>,
    } else {
    }
    return
  }
  func.func @transform_0(%arg0: i32, %arg1: i32, %arg2: i32) -> (i32, i32, i32) {
    %c0_i32 = arith.constant 0 : i32
    %c0_i32_0 = arith.constant 0 : i32
    return %arg0, %arg1, %c0_i32 : i32, i32, i32
  }
  func.func @transform_1(%arg0: i32, %arg1: i32, %arg2: i32) -> (i32, i32, i32) {
    %c0_i32 = arith.constant 0 : i32
    %c0_i32_0 = arith.constant 0 : i32
    return %arg0, %arg2, %c0_i32 : i32, i32, i32
  }
  func.func @transform_2(%arg0: i32, %arg1: i32, %arg2: i32) -> (i32, i32, i32) {
    %c0_i32 = arith.constant 0 : i32
    %c0_i32_0 = arith.constant 0 : i32
    return %arg0, %arg2, %c0_i32 : i32, i32, i32
  }
  func.func @transform_3(%arg0: i32, %arg1: i32, %arg2: i32) -> (i32, i32) {
    %c0_i32 = arith.constant 0 : i32
    %c0_i32_0 = arith.constant 0 : i32
    %c0_i32_1 = arith.constant 0 : i32
    return %c0_i32, %c0_i32_0 : i32, i32
  }
  func.func @transform_4(%arg0: i32, %arg1: i32, %arg2: i32) -> (i32, i32) {
    %c0_i32 = arith.constant 0 : i32
    %c0_i32_0 = arith.constant 0 : i32
    %c0_i32_1 = arith.constant 0 : i32
    return %c0_i32, %c0_i32_0 : i32, i32
  }
  func.func @transform_5(%arg0: i32, %arg1: i32, %arg2: i32) -> (i32, i32) {
    %c0_i32 = arith.constant 0 : i32
    %c0_i32_0 = arith.constant 0 : i32
    %c0_i32_1 = arith.constant 0 : i32
    return %c0_i32, %c0_i32_0 : i32, i32
  }
  func.func @transform_6(%arg0: i32, %arg1: i32, %arg2: i32) -> (i32, i32) {
    %c0_i32 = arith.constant 0 : i32
    %c0_i32_0 = arith.constant 0 : i32
    %c0_i32_1 = arith.constant 0 : i32
    return %c0_i32, %c0_i32_0 : i32, i32
  }
  func.func @transform_7(%arg0: i32, %arg1: i32, %arg2: i32) -> (i32, i32) {
    %c0_i32 = arith.constant 0 : i32
    %c0_i32_0 = arith.constant 0 : i32
    %c0_i32_1 = arith.constant 0 : i32
    return %c0_i32, %c0_i32_0 : i32, i32
  }
  func.func @transform_8(%arg0: i32, %arg1: i32, %arg2: i32) -> (i32, i32) {
    %c0_i32 = arith.constant 0 : i32
    %c0_i32_0 = arith.constant 0 : i32
    %c0_i32_1 = arith.constant 0 : i32
    return %c0_i32, %c0_i32_0 : i32, i32
  }
  func.func @transform_9(%arg0: i32, %arg1: i32, %arg2: i32) -> (i32, i32) {
    %c0_i32 = arith.constant 0 : i32
    %c0_i32_0 = arith.constant 0 : i32
    %c0_i32_1 = arith.constant 0 : i32
    return %c0_i32, %c0_i32_0 : i32, i32
  }
  func.func @transform_10(%arg0: i32, %arg1: i32, %arg2: i32) -> (i32, i32) {
    %c0_i32 = arith.constant 0 : i32
    %c0_i32_0 = arith.constant 0 : i32
    %c0_i32_1 = arith.constant 0 : i32
    return %c0_i32, %c0_i32_0 : i32, i32
  }
  func.func @transform_11(%arg0: i32, %arg1: i32, %arg2: i32) -> (i32, i32) {
    %c0_i32 = arith.constant 0 : i32
    %c0_i32_0 = arith.constant 0 : i32
    %c0_i32_1 = arith.constant 0 : i32
    return %c0_i32, %c0_i32_0 : i32, i32
  }
  func.func @transform_12(%arg0: i32, %arg1: i32, %arg2: i32) -> (i32, i32) {
    %c0_i32 = arith.constant 0 : i32
    %c0_i32_0 = arith.constant 0 : i32
    %c0_i32_1 = arith.constant 0 : i32
    return %c0_i32, %c0_i32_0 : i32, i32
  }
  func.func @transform_13(%arg0: i32, %arg1: i32, %arg2: i32) -> (i32, i32) {
    %c0_i32 = arith.constant 0 : i32
    %c0_i32_0 = arith.constant 0 : i32
    %c0_i32_1 = arith.constant 0 : i32
    return %c0_i32, %c0_i32_0 : i32, i32
  }
  func.func @transform_14(%arg0: i32, %arg1: i32, %arg2: i32) -> (i32, i32) {
    %c0_i32 = arith.constant 0 : i32
    %c0_i32_0 = arith.constant 0 : i32
    %c0_i32_1 = arith.constant 0 : i32
    return %c0_i32, %c0_i32_0 : i32, i32
  }
  func.func @transform_15(%arg0: i32, %arg1: i32, %arg2: i32) -> (i32, i32, i32) {
    %c0_i32 = arith.constant 0 : i32
    %c0_i32_0 = arith.constant 0 : i32
    return %arg0, %arg1, %c0_i32 : i32, i32, i32
  }
}

module attributes {stable_mosaic.version = 11 : i64} {
  func.func @encoder_layer_kernel(%arg0: i32, %arg1: i32, %arg2: i32, %arg3: memref<1x8x128xf32, #tpu.memory_space<vmem>>, %arg4: memref<1x8x128xf32, #tpu.memory_space<vmem>>, %arg5: memref<1x8x128xf32, #tpu.memory_space<vmem>>, %arg6: memref<128x128xf32, #tpu.memory_space<vmem>>, %arg7: memref<1x128xf32, #tpu.memory_space<vmem>>, %arg8: memref<128x128xf32, #tpu.memory_space<vmem>>, %arg9: memref<1x128xf32, #tpu.memory_space<vmem>>, %arg10: memref<1x128xf32, #tpu.memory_space<vmem>>, %arg11: memref<1x128xf32, #tpu.memory_space<vmem>>, %arg12: memref<128x256xf32, #tpu.memory_space<vmem>>, %arg13: memref<1x256xf32, #tpu.memory_space<vmem>>, %arg14: memref<256x128xf32, #tpu.memory_space<vmem>>, %arg15: memref<1x128xf32, #tpu.memory_space<vmem>>, %arg16: memref<1x128xf32, #tpu.memory_space<vmem>>, %arg17: memref<1x128xf32, #tpu.memory_space<vmem>>, %arg18: memref<1x8x128xf32, #tpu.memory_space<vmem>>, %arg19: memref<4x8x32xf32, #tpu.memory_space<vmem>>, %arg20: memref<4x8x1xf32, #tpu.memory_space<vmem>>, %arg21: memref<4x8x1xf32, #tpu.memory_space<vmem>>, %arg22: memref<4x8x32xf32, #tpu.memory_space<vmem>>) attributes {dimension_semantics = [#tpu.dimension_semantics<parallel>, #tpu.dimension_semantics<parallel>, #tpu.dimension_semantics<arbitrary>], iteration_bounds = array<i64: 2, 1, 1>, scalar_prefetch = 0 : i64, scratch_operands = 4 : i64, tpu.core_type = #tpu.core_type<tc>, window_params = [{transform_indices = @transform_0, window_bounds = array<i64: 1, 8, 128>}, {transform_indices = @transform_1, window_bounds = array<i64: 1, 8, 128>}, {transform_indices = @transform_2, window_bounds = array<i64: 1, 8, 128>}, {pipeline_mode = #tpu.pipeline_mode<synchronous>, transform_indices = @transform_3, window_bounds = array<i64: 128, 128>}, {pipeline_mode = #tpu.pipeline_mode<synchronous>, transform_indices = @transform_4, window_bounds = array<i64: 1, 128>}, {pipeline_mode = #tpu.pipeline_mode<synchronous>, transform_indices = @transform_5, window_bounds = array<i64: 128, 128>}, {pipeline_mode = #tpu.pipeline_mode<synchronous>, transform_indices = @transform_6, window_bounds = array<i64: 1, 128>}, {pipeline_mode = #tpu.pipeline_mode<synchronous>, transform_indices = @transform_7, window_bounds = array<i64: 1, 128>}, {pipeline_mode = #tpu.pipeline_mode<synchronous>, transform_indices = @transform_8, window_bounds = array<i64: 1, 128>}, {pipeline_mode = #tpu.pipeline_mode<synchronous>, transform_indices = @transform_9, window_bounds = array<i64: 128, 256>}, {pipeline_mode = #tpu.pipeline_mode<synchronous>, transform_indices = @transform_10, window_bounds = array<i64: 1, 256>}, {pipeline_mode = #tpu.pipeline_mode<synchronous>, transform_indices = @transform_11, window_bounds = array<i64: 256, 128>}, {pipeline_mode = #tpu.pipeline_mode<synchronous>, transform_indices = @transform_12, window_bounds = array<i64: 1, 128>}, {pipeline_mode = #tpu.pipeline_mode<synchronous>, transform_indices = @transform_13, window_bounds = array<i64: 1, 128>}, {pipeline_mode = #tpu.pipeline_mode<synchronous>, transform_indices = @transform_14, window_bounds = array<i64: 1, 128>}, {transform_indices = @transform_15, window_bounds = array<i64: 1, 8, 128>}]} {
    %c0_i32 = arith.constant 0 : i32
    %0 = arith.cmpi eq, %arg2, %c0_i32 : i32
    %1 = arith.extui %0 : i1 to i32
    %c0_i32_0 = arith.constant 0 : i32
    %2 = arith.cmpi ne, %1, %c0_i32_0 : i32
    scf.if %2 {
      %c0_32 = arith.constant 0 : index
      %c0_33 = arith.constant 0 : index
      %c0_34 = arith.constant 0 : index
      %38 = vector.load %arg3[%c0_32, %c0_33, %c0_34] : memref<1x8x128xf32, #tpu.memory_space<vmem>>, vector<1x8x128xf32>
      %39 = vector.shape_cast %38 : vector<1x8x128xf32> to vector<8x128xf32>
      %c0_35 = arith.constant 0 : index
      %c0_36 = arith.constant 0 : index
      %40 = vector.load %arg6[%c0_35, %c0_36] : memref<128x128xf32, #tpu.memory_space<vmem>>, vector<128x128xf32>
      %cst_37 = arith.constant dense<0.000000e+00> : vector<8x128xf32>
      %41 = tpu.matmul %39, %40, %cst_37 {dimension_numbers = #tpu.dot_dimension_numbers<[1], [0], [0], [1], [0, 0, 1, 1], [], []>} : vector<8x128xf32>, vector<128x128xf32>, vector<8x128xf32> -> vector<8x128xf32>
      %c0_38 = arith.constant 0 : index
      %c0_39 = arith.constant 0 : index
      %42 = vector.load %arg7[%c0_38, %c0_39] : memref<1x128xf32, #tpu.memory_space<vmem>>, vector<1x128xf32>
      %43 = vector.broadcast %42 : vector<1x128xf32> to vector<8x128xf32>
      %44 = arith.addf %41, %43 : vector<8x128xf32>
      %cst_40 = arith.constant 0.176776692 : f32
      %45 = vector.broadcast %cst_40 : f32 to vector<8x128xf32>
      %46 = arith.mulf %44, %45 : vector<8x128xf32>
      %47 = vector.shape_cast %46 : vector<8x128xf32> to vector<8x4x32xf32>
      %48 = tpu.transpose %47, [1, 0, 2] : vector<8x4x32xf32> -> vector<4x8x32xf32>
      %c0_41 = arith.constant 0 : index
      %c0_42 = arith.constant 0 : index
      %c0_43 = arith.constant 0 : index
      %49 = vector.load %arg19[%c0_41, %c0_42, %c0_43] : memref<4x8x32xf32, #tpu.memory_space<vmem>>, vector<4x8x32xf32>
      tpu.vector_store %arg19[%c0_41, %c0_42, %c0_43], %48 {strides = array<i32>} : memref<4x8x32xf32, #tpu.memory_space<vmem>>, vector<4x8x32xf32>,
      %cst_44 = arith.constant 0xFF800000 : f32
      %50 = vector.broadcast %cst_44 : f32 to vector<4x8x1xf32>
      %c0_45 = arith.constant 0 : index
      %c0_46 = arith.constant 0 : index
      %c0_47 = arith.constant 0 : index
      %51 = vector.load %arg20[%c0_45, %c0_46, %c0_47] : memref<4x8x1xf32, #tpu.memory_space<vmem>>, vector<4x8x1xf32>
      tpu.vector_store %arg20[%c0_45, %c0_46, %c0_47], %50 {strides = array<i32>} : memref<4x8x1xf32, #tpu.memory_space<vmem>>, vector<4x8x1xf32>,
      %cst_48 = arith.constant 0.000000e+00 : f32
      %52 = vector.broadcast %cst_48 : f32 to vector<4x8x1xf32>
      %c0_49 = arith.constant 0 : index
      %c0_50 = arith.constant 0 : index
      %c0_51 = arith.constant 0 : index
      %53 = vector.load %arg21[%c0_49, %c0_50, %c0_51] : memref<4x8x1xf32, #tpu.memory_space<vmem>>, vector<4x8x1xf32>
      tpu.vector_store %arg21[%c0_49, %c0_50, %c0_51], %52 {strides = array<i32>} : memref<4x8x1xf32, #tpu.memory_space<vmem>>, vector<4x8x1xf32>,
      %cst_52 = arith.constant 0.000000e+00 : f32
      %54 = vector.broadcast %cst_52 : f32 to vector<4x8x32xf32>
      %c0_53 = arith.constant 0 : index
      %c0_54 = arith.constant 0 : index
      %c0_55 = arith.constant 0 : index
      %55 = vector.load %arg22[%c0_53, %c0_54, %c0_55] : memref<4x8x32xf32, #tpu.memory_space<vmem>>, vector<4x8x32xf32>
      tpu.vector_store %arg22[%c0_53, %c0_54, %c0_55], %54 {strides = array<i32>} : memref<4x8x32xf32, #tpu.memory_space<vmem>>, vector<4x8x32xf32>,
    } else {
    }
    %c0 = arith.constant 0 : index
    %c0_1 = arith.constant 0 : index
    %c0_2 = arith.constant 0 : index
    %3 = vector.load %arg4[%c0, %c0_1, %c0_2] : memref<1x8x128xf32, #tpu.memory_space<vmem>>, vector<1x8x128xf32>
    %4 = vector.shape_cast %3 : vector<1x8x128xf32> to vector<8x128xf32>
    %5 = vector.shape_cast %4 : vector<8x128xf32> to vector<8x4x32xf32>
    %6 = tpu.transpose %5, [1, 0, 2] : vector<8x4x32xf32> -> vector<4x8x32xf32>
    %c0_3 = arith.constant 0 : index
    %c0_4 = arith.constant 0 : index
    %c0_5 = arith.constant 0 : index
    %7 = vector.load %arg5[%c0_3, %c0_4, %c0_5] : memref<1x8x128xf32, #tpu.memory_space<vmem>>, vector<1x8x128xf32>
    %8 = vector.shape_cast %7 : vector<1x8x128xf32> to vector<8x128xf32>
    %9 = vector.shape_cast %8 : vector<8x128xf32> to vector<8x4x32xf32>
    %10 = tpu.transpose %9, [1, 0, 2] : vector<8x4x32xf32> -> vector<4x8x32xf32>
    %c0_6 = arith.constant 0 : index
    %c0_7 = arith.constant 0 : index
    %c0_8 = arith.constant 0 : index
    %11 = vector.load %arg19[%c0_6, %c0_7, %c0_8] : memref<4x8x32xf32, #tpu.memory_space<vmem>>, vector<4x8x32xf32>
    "tpu.trace_start"() <{level = 10 : i32, message = "hqd,hkd->hqk"}> : () -> ()
    %cst = arith.constant dense<0.000000e+00> : vector<4x8x8xf32>
    %12 = tpu.matmul %11, %6, %cst {dimension_numbers = #tpu.dot_dimension_numbers<[2], [2], [1], [1], [0, 0, 0, 1, 1, 1], [0], [0]>} : vector<4x8x32xf32>, vector<4x8x32xf32>, vector<4x8x8xf32> -> vector<4x8x8xf32>
    "tpu.trace_stop"() : () -> ()
    %c0_9 = arith.constant 0 : index
    %c0_10 = arith.constant 0 : index
    %c0_11 = arith.constant 0 : index
    %13 = vector.load %arg20[%c0_9, %c0_10, %c0_11] : memref<4x8x1xf32, #tpu.memory_space<vmem>>, vector<4x8x1xf32>
    %cst_12 = arith.constant dense<0xFF800000> : vector<4x8xf32>
    %14 = vector.multi_reduction <maximumf>, %12, %cst_12 [2] : vector<4x8x8xf32> to vector<4x8xf32>
    %15 = vector.shape_cast %14 : vector<4x8xf32> to vector<4x8x1xf32>
    %16 = arith.maximumf %13, %15 : vector<4x8x1xf32>
    %17 = arith.subf %13, %16 : vector<4x8x1xf32>
    %18 = math.exp %17 : vector<4x8x1xf32>
    %19 = vector.broadcast %16 : vector<4x8x1xf32> to vector<4x8x8xf32>
    %20 = arith.subf %12, %19 : vector<4x8x8xf32>
    %21 = math.exp %20 : vector<4x8x8xf32>
    %c0_13 = arith.constant 0 : index
    %c0_14 = arith.constant 0 : index
    %c0_15 = arith.constant 0 : index
    %22 = vector.load %arg21[%c0_13, %c0_14, %c0_15] : memref<4x8x1xf32, #tpu.memory_space<vmem>>, vector<4x8x1xf32>
    %23 = arith.mulf %18, %22 : vector<4x8x1xf32>
    %cst_16 = arith.constant dense<0.000000e+00> : vector<4x8xf32>
    %24 = vector.multi_reduction <add>, %21, %cst_16 [2] : vector<4x8x8xf32> to vector<4x8xf32>
    %25 = vector.shape_cast %24 : vector<4x8xf32> to vector<4x8x1xf32>
    %26 = arith.addf %23, %25 : vector<4x8x1xf32>
    %c0_17 = arith.constant 0 : index
    %c0_18 = arith.constant 0 : index
    %c0_19 = arith.constant 0 : index
    %27 = vector.load %arg21[%c0_17, %c0_18, %c0_19] : memref<4x8x1xf32, #tpu.memory_space<vmem>>, vector<4x8x1xf32>
    tpu.vector_store %arg21[%c0_17, %c0_18, %c0_19], %26 {strides = array<i32>} : memref<4x8x1xf32, #tpu.memory_space<vmem>>, vector<4x8x1xf32>,
    %c0_20 = arith.constant 0 : index
    %c0_21 = arith.constant 0 : index
    %c0_22 = arith.constant 0 : index
    %28 = vector.load %arg22[%c0_20, %c0_21, %c0_22] : memref<4x8x32xf32, #tpu.memory_space<vmem>>, vector<4x8x32xf32>
    %29 = vector.broadcast %18 : vector<4x8x1xf32> to vector<4x8x32xf32>
    %30 = arith.mulf %29, %28 : vector<4x8x32xf32>
    "tpu.trace_start"() <{level = 10 : i32, message = "hqk,hkd->hqd"}> : () -> ()
    %cst_23 = arith.constant dense<0.000000e+00> : vector<4x8x32xf32>
    %31 = tpu.matmul %21, %10, %cst_23 {dimension_numbers = #tpu.dot_dimension_numbers<[2], [1], [1], [2], [0, 0, 0, 1, 1, 2], [0], [0]>} : vector<4x8x8xf32>, vector<4x8x32xf32>, vector<4x8x32xf32> -> vector<4x8x32xf32>
    "tpu.trace_stop"() : () -> ()
    %32 = arith.addf %30, %31 : vector<4x8x32xf32>
    %c0_24 = arith.constant 0 : index
    %c0_25 = arith.constant 0 : index
    %c0_26 = arith.constant 0 : index
    %33 = vector.load %arg22[%c0_24, %c0_25, %c0_26] : memref<4x8x32xf32, #tpu.memory_space<vmem>>, vector<4x8x32xf32>
    tpu.vector_store %arg22[%c0_24, %c0_25, %c0_26], %32 {strides = array<i32>} : memref<4x8x32xf32, #tpu.memory_space<vmem>>, vector<4x8x32xf32>,
    %c0_27 = arith.constant 0 : index
    %c0_28 = arith.constant 0 : index
    %c0_29 = arith.constant 0 : index
    %34 = vector.load %arg20[%c0_27, %c0_28, %c0_29] : memref<4x8x1xf32, #tpu.memory_space<vmem>>, vector<4x8x1xf32>
    tpu.vector_store %arg20[%c0_27, %c0_28, %c0_29], %16 {strides = array<i32>} : memref<4x8x1xf32, #tpu.memory_space<vmem>>, vector<4x8x1xf32>,
    %c0_i32_30 = arith.constant 0 : i32
    %35 = arith.cmpi eq, %arg2, %c0_i32_30 : i32
    %36 = arith.extui %35 : i1 to i32
    %c0_i32_31 = arith.constant 0 : i32
    %37 = arith.cmpi ne, %36, %c0_i32_31 : i32
    scf.if %37 {
      %c0_32 = arith.constant 0 : index
      %c0_33 = arith.constant 0 : index
      %c0_34 = arith.constant 0 : index
      %38 = vector.load %arg22[%c0_32, %c0_33, %c0_34] : memref<4x8x32xf32, #tpu.memory_space<vmem>>, vector<4x8x32xf32>
      %c0_35 = arith.constant 0 : index
      %c0_36 = arith.constant 0 : index
      %c0_37 = arith.constant 0 : index
      %39 = vector.load %arg21[%c0_35, %c0_36, %c0_37] : memref<4x8x1xf32, #tpu.memory_space<vmem>>, vector<4x8x1xf32>
      %cst_38 = arith.constant 1.000000e+00 : f32
      %40 = vector.broadcast %cst_38 : f32 to vector<4x8x1xf32>
      %41 = arith.divf %40, %39 : vector<4x8x1xf32>
      %42 = vector.broadcast %41 : vector<4x8x1xf32> to vector<4x8x32xf32>
      %43 = arith.mulf %38, %42 : vector<4x8x32xf32>
      %44 = tpu.transpose %43, [1, 0, 2] : vector<4x8x32xf32> -> vector<8x4x32xf32>
      %45 = vector.shape_cast %44 : vector<8x4x32xf32> to vector<8x128xf32>
      %c0_39 = arith.constant 0 : index
      %c0_40 = arith.constant 0 : index
      %46 = vector.load %arg8[%c0_39, %c0_40] : memref<128x128xf32, #tpu.memory_space<vmem>>, vector<128x128xf32>
      %cst_41 = arith.constant dense<0.000000e+00> : vector<8x128xf32>
      %47 = tpu.matmul %45, %46, %cst_41 {dimension_numbers = #tpu.dot_dimension_numbers<[1], [0], [0], [1], [0, 0, 1, 1], [], []>} : vector<8x128xf32>, vector<128x128xf32>, vector<8x128xf32> -> vector<8x128xf32>
      %c0_42 = arith.constant 0 : index
      %c0_43 = arith.constant 0 : index
      %48 = vector.load %arg9[%c0_42, %c0_43] : memref<1x128xf32, #tpu.memory_space<vmem>>, vector<1x128xf32>
      %49 = vector.broadcast %48 : vector<1x128xf32> to vector<8x128xf32>
      %50 = arith.addf %47, %49 : vector<8x128xf32>
      %c0_44 = arith.constant 0 : index
      %c0_45 = arith.constant 0 : index
      %c0_46 = arith.constant 0 : index
      %51 = vector.load %arg3[%c0_44, %c0_45, %c0_46] : memref<1x8x128xf32, #tpu.memory_space<vmem>>, vector<1x8x128xf32>
      %52 = vector.shape_cast %51 : vector<1x8x128xf32> to vector<8x128xf32>
      %53 = arith.addf %52, %50 : vector<8x128xf32>
      %c0_47 = arith.constant 0 : index
      %c0_48 = arith.constant 0 : index
      %54 = vector.load %arg10[%c0_47, %c0_48] : memref<1x128xf32, #tpu.memory_space<vmem>>, vector<1x128xf32>
      %c0_49 = arith.constant 0 : index
      %c0_50 = arith.constant 0 : index
      %55 = vector.load %arg11[%c0_49, %c0_50] : memref<1x128xf32, #tpu.memory_space<vmem>>, vector<1x128xf32>
      %cst_51 = arith.constant dense<0.000000e+00> : vector<8xf32>
      %56 = vector.multi_reduction <add>, %53, %cst_51 [1] : vector<8x128xf32> to vector<8xf32>
      %57 = vector.shape_cast %56 : vector<8xf32> to vector<8x1xf32>
      %cst_52 = arith.constant 1.280000e+02 : f32
      %58 = vector.broadcast %cst_52 : f32 to vector<8x1xf32>
      %59 = arith.divf %57, %58 : vector<8x1xf32>
      %60 = vector.broadcast %59 : vector<8x1xf32> to vector<8x128xf32>
      %61 = arith.subf %53, %60 : vector<8x128xf32>
      %62 = arith.mulf %61, %61 : vector<8x128xf32>
      %cst_53 = arith.constant dense<0.000000e+00> : vector<8xf32>
      %63 = vector.multi_reduction <add>, %62, %cst_53 [1] : vector<8x128xf32> to vector<8xf32>
      %64 = vector.shape_cast %63 : vector<8xf32> to vector<8x1xf32>
      %cst_54 = arith.constant 1.280000e+02 : f32
      %65 = vector.broadcast %cst_54 : f32 to vector<8x1xf32>
      %66 = arith.divf %64, %65 : vector<8x1xf32>
      %67 = vector.broadcast %59 : vector<8x1xf32> to vector<8x128xf32>
      %68 = arith.subf %53, %67 : vector<8x128xf32>
      %cst_55 = arith.constant 9.99999974E-6 : f32
      %69 = vector.broadcast %cst_55 : f32 to vector<8x1xf32>
      %70 = arith.addf %66, %69 : vector<8x1xf32>
      %71 = math.rsqrt %70 : vector<8x1xf32>
      %72 = vector.broadcast %71 : vector<8x1xf32> to vector<8x128xf32>
      %73 = arith.mulf %68, %72 : vector<8x128xf32>
      %74 = vector.broadcast %54 : vector<1x128xf32> to vector<8x128xf32>
      %75 = arith.mulf %73, %74 : vector<8x128xf32>
      %76 = vector.broadcast %55 : vector<1x128xf32> to vector<8x128xf32>
      %77 = arith.addf %75, %76 : vector<8x128xf32>
      %c0_56 = arith.constant 0 : index
      %c0_57 = arith.constant 0 : index
      %78 = vector.load %arg12[%c0_56, %c0_57] : memref<128x256xf32, #tpu.memory_space<vmem>>, vector<128x256xf32>
      %cst_58 = arith.constant dense<0.000000e+00> : vector<8x256xf32>
      %79 = tpu.matmul %77, %78, %cst_58 {dimension_numbers = #tpu.dot_dimension_numbers<[1], [0], [0], [1], [0, 0, 1, 1], [], []>} : vector<8x128xf32>, vector<128x256xf32>, vector<8x256xf32> -> vector<8x256xf32>
      %c0_59 = arith.constant 0 : index
      %c0_60 = arith.constant 0 : index
      %80 = vector.load %arg13[%c0_59, %c0_60] : memref<1x256xf32, #tpu.memory_space<vmem>>, vector<1x256xf32>
      %81 = vector.broadcast %80 : vector<1x256xf32> to vector<8x256xf32>
      %82 = arith.addf %79, %81 : vector<8x256xf32>
      %cst_61 = arith.constant 0.000000e+00 : f32
      %83 = vector.broadcast %cst_61 : f32 to vector<8x256xf32>
      %84 = arith.maximumf %82, %83 : vector<8x256xf32>
      %c0_62 = arith.constant 0 : index
      %c0_63 = arith.constant 0 : index
      %85 = vector.load %arg14[%c0_62, %c0_63] : memref<256x128xf32, #tpu.memory_space<vmem>>, vector<256x128xf32>
      %cst_64 = arith.constant dense<0.000000e+00> : vector<8x128xf32>
      %86 = tpu.matmul %84, %85, %cst_64 {dimension_numbers = #tpu.dot_dimension_numbers<[1], [0], [0], [1], [0, 0, 1, 1], [], []>} : vector<8x256xf32>, vector<256x128xf32>, vector<8x128xf32> -> vector<8x128xf32>
      %c0_65 = arith.constant 0 : index
      %c0_66 = arith.constant 0 : index
      %87 = vector.load %arg15[%c0_65, %c0_66] : memref<1x128xf32, #tpu.memory_space<vmem>>, vector<1x128xf32>
      %88 = vector.broadcast %87 : vector<1x128xf32> to vector<8x128xf32>
      %89 = arith.addf %86, %88 : vector<8x128xf32>
      %90 = arith.addf %77, %89 : vector<8x128xf32>
      %c0_67 = arith.constant 0 : index
      %c0_68 = arith.constant 0 : index
      %91 = vector.load %arg16[%c0_67, %c0_68] : memref<1x128xf32, #tpu.memory_space<vmem>>, vector<1x128xf32>
      %c0_69 = arith.constant 0 : index
      %c0_70 = arith.constant 0 : index
      %92 = vector.load %arg17[%c0_69, %c0_70] : memref<1x128xf32, #tpu.memory_space<vmem>>, vector<1x128xf32>
      %cst_71 = arith.constant dense<0.000000e+00> : vector<8xf32>
      %93 = vector.multi_reduction <add>, %90, %cst_71 [1] : vector<8x128xf32> to vector<8xf32>
      %94 = vector.shape_cast %93 : vector<8xf32> to vector<8x1xf32>
      %cst_72 = arith.constant 1.280000e+02 : f32
      %95 = vector.broadcast %cst_72 : f32 to vector<8x1xf32>
      %96 = arith.divf %94, %95 : vector<8x1xf32>
      %97 = vector.broadcast %96 : vector<8x1xf32> to vector<8x128xf32>
      %98 = arith.subf %90, %97 : vector<8x128xf32>
      %99 = arith.mulf %98, %98 : vector<8x128xf32>
      %cst_73 = arith.constant dense<0.000000e+00> : vector<8xf32>
      %100 = vector.multi_reduction <add>, %99, %cst_73 [1] : vector<8x128xf32> to vector<8xf32>
      %101 = vector.shape_cast %100 : vector<8xf32> to vector<8x1xf32>
      %cst_74 = arith.constant 1.280000e+02 : f32
      %102 = vector.broadcast %cst_74 : f32 to vector<8x1xf32>
      %103 = arith.divf %101, %102 : vector<8x1xf32>
      %104 = vector.broadcast %96 : vector<8x1xf32> to vector<8x128xf32>
      %105 = arith.subf %90, %104 : vector<8x128xf32>
      %cst_75 = arith.constant 9.99999974E-6 : f32
      %106 = vector.broadcast %cst_75 : f32 to vector<8x1xf32>
      %107 = arith.addf %103, %106 : vector<8x1xf32>
      %108 = math.rsqrt %107 : vector<8x1xf32>
      %109 = vector.broadcast %108 : vector<8x1xf32> to vector<8x128xf32>
      %110 = arith.mulf %105, %109 : vector<8x128xf32>
      %111 = vector.broadcast %91 : vector<1x128xf32> to vector<8x128xf32>
      %112 = arith.mulf %110, %111 : vector<8x128xf32>
      %113 = vector.broadcast %92 : vector<1x128xf32> to vector<8x128xf32>
      %114 = arith.addf %112, %113 : vector<8x128xf32>
      %c0_76 = arith.constant 0 : index
      %c0_77 = arith.constant 0 : index
      %c0_78 = arith.constant 0 : index
      %115 = vector.load %arg18[%c0_76, %c0_77, %c0_78] : memref<1x8x128xf32, #tpu.memory_space<vmem>>, vector<1x8x128xf32>
      %116 = vector.shape_cast %115 : vector<1x8x128xf32> to vector<8x128xf32>
      %117 = vector.shape_cast %114 : vector<8x128xf32> to vector<1x8x128xf32>
      tpu.vector_store %arg18[%c0_76, %c0_77, %c0_78], %117 {strides = array<i32>} : memref<1x8x128xf32, #tpu.memory_space<vmem>>, vector<1x8x128xf32>,
    } else {
    }
    return
  }
  func.func @transform_0(%arg0: i32, %arg1: i32, %arg2: i32) -> (i32, i32, i32) {
    %c0_i32 = arith.constant 0 : i32
    %c0_i32_0 = arith.constant 0 : i32
    return %arg0, %arg1, %c0_i32 : i32, i32, i32
  }
  func.func @transform_1(%arg0: i32, %arg1: i32, %arg2: i32) -> (i32, i32, i32) {
    %c0_i32 = arith.constant 0 : i32
    %c0_i32_0 = arith.constant 0 : i32
    return %arg0, %arg2, %c0_i32 : i32, i32, i32
  }
  func.func @transform_2(%arg0: i32, %arg1: i32, %arg2: i32) -> (i32, i32, i32) {
    %c0_i32 = arith.constant 0 : i32
    %c0_i32_0 = arith.constant 0 : i32
    return %arg0, %arg2, %c0_i32 : i32, i32, i32
  }
  func.func @transform_3(%arg0: i32, %arg1: i32, %arg2: i32) -> (i32, i32) {
    %c0_i32 = arith.constant 0 : i32
    %c0_i32_0 = arith.constant 0 : i32
    %c0_i32_1 = arith.constant 0 : i32
    return %c0_i32, %c0_i32_0 : i32, i32
  }
  func.func @transform_4(%arg0: i32, %arg1: i32, %arg2: i32) -> (i32, i32) {
    %c0_i32 = arith.constant 0 : i32
    %c0_i32_0 = arith.constant 0 : i32
    %c0_i32_1 = arith.constant 0 : i32
    return %c0_i32, %c0_i32_0 : i32, i32
  }
  func.func @transform_5(%arg0: i32, %arg1: i32, %arg2: i32) -> (i32, i32) {
    %c0_i32 = arith.constant 0 : i32
    %c0_i32_0 = arith.constant 0 : i32
    %c0_i32_1 = arith.constant 0 : i32
    return %c0_i32, %c0_i32_0 : i32, i32
  }
  func.func @transform_6(%arg0: i32, %arg1: i32, %arg2: i32) -> (i32, i32) {
    %c0_i32 = arith.constant 0 : i32
    %c0_i32_0 = arith.constant 0 : i32
    %c0_i32_1 = arith.constant 0 : i32
    return %c0_i32, %c0_i32_0 : i32, i32
  }
  func.func @transform_7(%arg0: i32, %arg1: i32, %arg2: i32) -> (i32, i32) {
    %c0_i32 = arith.constant 0 : i32
    %c0_i32_0 = arith.constant 0 : i32
    %c0_i32_1 = arith.constant 0 : i32
    return %c0_i32, %c0_i32_0 : i32, i32
  }
  func.func @transform_8(%arg0: i32, %arg1: i32, %arg2: i32) -> (i32, i32) {
    %c0_i32 = arith.constant 0 : i32
    %c0_i32_0 = arith.constant 0 : i32
    %c0_i32_1 = arith.constant 0 : i32
    return %c0_i32, %c0_i32_0 : i32, i32
  }
  func.func @transform_9(%arg0: i32, %arg1: i32, %arg2: i32) -> (i32, i32) {
    %c0_i32 = arith.constant 0 : i32
    %c0_i32_0 = arith.constant 0 : i32
    %c0_i32_1 = arith.constant 0 : i32
    return %c0_i32, %c0_i32_0 : i32, i32
  }
  func.func @transform_10(%arg0: i32, %arg1: i32, %arg2: i32) -> (i32, i32) {
    %c0_i32 = arith.constant 0 : i32
    %c0_i32_0 = arith.constant 0 : i32
    %c0_i32_1 = arith.constant 0 : i32
    return %c0_i32, %c0_i32_0 : i32, i32
  }
  func.func @transform_11(%arg0: i32, %arg1: i32, %arg2: i32) -> (i32, i32) {
    %c0_i32 = arith.constant 0 : i32
    %c0_i32_0 = arith.constant 0 : i32
    %c0_i32_1 = arith.constant 0 : i32
    return %c0_i32, %c0_i32_0 : i32, i32
  }
  func.func @transform_12(%arg0: i32, %arg1: i32, %arg2: i32) -> (i32, i32) {
    %c0_i32 = arith.constant 0 : i32
    %c0_i32_0 = arith.constant 0 : i32
    %c0_i32_1 = arith.constant 0 : i32
    return %c0_i32, %c0_i32_0 : i32, i32
  }
  func.func @transform_13(%arg0: i32, %arg1: i32, %arg2: i32) -> (i32, i32) {
    %c0_i32 = arith.constant 0 : i32
    %c0_i32_0 = arith.constant 0 : i32
    %c0_i32_1 = arith.constant 0 : i32
    return %c0_i32, %c0_i32_0 : i32, i32
  }
  func.func @transform_14(%arg0: i32, %arg1: i32, %arg2: i32) -> (i32, i32) {
    %c0_i32 = arith.constant 0 : i32
    %c0_i32_0 = arith.constant 0 : i32
    %c0_i32_1 = arith.constant 0 : i32
    return %c0_i32, %c0_i32_0 : i32, i32
  }
  func.func @transform_15(%arg0: i32, %arg1: i32, %arg2: i32) -> (i32, i32, i32) {
    %c0_i32 = arith.constant 0 : i32
    %c0_i32_0 = arith.constant 0 : i32
    return %arg0, %arg1, %c0_i32 : i32, i32, i32
  }
}

</mosaic_0001>

<llo_original>
// kernel: tpu_custom_call.1
$region0: #{tpu_custom_call.1}
  #allocation0 [shape = 'u32[]', space=smem, size = 0x4, offset = 0x4, fixed_abs, tag = 'smem constant byte address 0x4 - core index']
  #allocation1 [shape = 'u32[144,128]{1,0:T(1,128)}', space=vmem, size = 0x12000, scoped, tag = 'internal scratch']
  #allocation2 [shape = 'f32[4,8,32]{2,1,0:T(8,128)}', space=vmem, size = 0x4000, scoped, tag = 'scratch operand']
  #allocation3 [shape = 'f32[4,8,1]{2,1,0:T(8,128)}', space=vmem, size = 0x4000, scoped, tag = 'scratch operand']
  #allocation4 [shape = 'f32[4,8,1]{2,1,0:T(8,128)}', space=vmem, size = 0x4000, scoped, tag = 'scratch operand']
  #allocation5 [shape = 'f32[4,8,32]{2,1,0:T(8,128)}', space=vmem, size = 0x4000, scoped, tag = 'scratch operand']
  %s0 = inlined_call_operand.hbm [shape: f32[2,8,128], index: 0, kind: input, shape index: {}]
  %s1 = inlined_call_operand.hbm [shape: f32[2,8,128], index: 1, kind: input, shape index: {}]
  %s2 = inlined_call_operand.hbm [shape: f32[2,8,128], index: 2, kind: input, shape index: {}]
  %s3 = inlined_call_operand.hbm [shape: f32[128,128], index: 3, kind: input, shape index: {}]
  %s4 = inlined_call_operand.vmem [shape: f32[1,128], index: 4, kind: input, shape index: {}]
  %s5 = inlined_call_operand.hbm [shape: f32[128,128], index: 5, kind: input, shape index: {}]
  %s6 = inlined_call_operand.vmem [shape: f32[1,128], index: 6, kind: input, shape index: {}]
  %s7 = inlined_call_operand.vmem [shape: f32[1,128], index: 7, kind: input, shape index: {}]
  %s8 = inlined_call_operand.vmem [shape: f32[1,128], index: 8, kind: input, shape index: {}]
  %s9 = inlined_call_operand.hbm [shape: f32[128,256], index: 9, kind: input, shape index: {}]
  %s10 = inlined_call_operand.vmem [shape: f32[1,256], index: 10, kind: input, shape index: {}]
  %s11 = inlined_call_operand.hbm [shape: f32[256,128], index: 11, kind: input, shape index: {}]
  %s12 = inlined_call_operand.vmem [shape: f32[1,128], index: 12, kind: input, shape index: {}]
  %s13 = inlined_call_operand.vmem [shape: f32[1,128], index: 13, kind: input, shape index: {}]
  %s14 = inlined_call_operand.vmem [shape: f32[1,128], index: 14, kind: input, shape index: {}]
  %s15 = inlined_call_operand.hbm [shape: f32[2,8,128], index: 15, kind: output, shape index: {}]
  %s16 = sld [smem:[#allocation0]]
  $region129: #{tpu_custom_call.1} parent=0
    _
  %s18 = ssub.s32 1, %s16
  %s19 = scalar_select 0, %s18, %s16
  $region1: #{tpu_custom_call.1} parent=0
    #allocation6 [shape = 'u8[8192]{0}', space=vmem, size = 0x2000, scoped, tag = 'input window, operand 0']
    #allocation7 [shape = 's32[2]{0}', space=sflag, size = 0x8, scoped, tag = 'scoped memory for tpu_custom_call.1']
    #allocation8 [shape = 's32[2]{0}', space=sflag, size = 0x8, scoped, tag = 'scoped memory for tpu_custom_call.1']
    #allocation9 [shape = 'u8[8192]{0}', space=vmem, size = 0x2000, scoped, tag = 'input window, operand 1']
    #allocation10 [shape = 's32[2]{0}', space=sflag, size = 0x8, scoped, tag = 'scoped memory for tpu_custom_call.1']
    #allocation11 [shape = 'u8[8192]{0}', space=vmem, size = 0x2000, scoped, tag = 'input window, operand 2']
    #allocation12 [shape = 'u8[65536]{0}', space=vmem, size = 0x10000, scoped, tag = 'input window, operand 3, single buffered']
    #allocation13 [shape = 's32[1]{0}', space=sflag, size = 0x4, scoped, tag = 'scoped memory for tpu_custom_call.1']
    #allocation14 [shape = 'u8[65536]{0}', space=vmem, size = 0x10000, scoped, tag = 'input window, operand 5, single buffered']
    #allocation15 [shape = 'u8[131072]{0}', space=vmem, size = 0x20000, scoped, tag = 'input window, operand 9, single buffered']
    #allocation16 [shape = 's32[1]{0}', space=sflag, size = 0x4, scoped, tag = 'scoped memory for tpu_custom_call.1']
    #allocation17 [shape = 'u8[131072]{0}', space=vmem, size = 0x20000, scoped, tag = 'input window, operand 11, single buffered']
    #allocation18 [shape = 'u8[8192]{0}', space=vmem, size = 0x2000, scoped, tag = 'output window, operand 0']
    %20 = vsyncpa [#allocation7], 0
    %s21 = scalar_lea.sflag [#allocation7], 1
    %22 = vsyncpa %s21, 0
    %23 = vsyncpa [#allocation10], 0
    %s24 = scalar_lea.sflag [#allocation10], 1
    %25 = vsyncpa %s24, 0
    %26 = vsyncpa [#allocation13], 0
    %27 = vsyncpa [#allocation16], 0
    %28 = vsyncpa [#allocation8], 0
    %s29 = scalar_lea.sflag [#allocation8], 1
    %30 = vsyncpa %s29, 0
    loop: start=0, step=1, limit=4
    $region2: #{tpu_custom_call.1} parent=1 // loop_pre_header
      _
    $region3: #{tpu_custom_call.1} parent=1 // loop_header
      %s32 = sphi 0, %s36
      %p33 = scmp.ge.s32.totalorder %s32, 4
      %s39 = sphi 0, %s58
      %s40 = sphi 0, %s54
      %s41 = sphi 0, %s50
      %s42 = sphi 0, %s39
      %s43 = sphi 0, %s40
      %s44 = sphi 0, %s41
      %s45 = sphi 0, %s42
      %s46 = sphi 0, %s43
      %s47 = sphi 0, %s44
      %s63 = sphi 0, %s65
      %s66 = sphi 0, %s63
      %s67 = sphi 0, %s66
      %s83 = sphi 0, %s67
      %s91 = sphi 0, %s93
      %s94 = sphi 0, %s91
      %s95 = sphi 0, %s94
      %s111 = sphi 0, %s95
      %s119 = sphi 0, %s121
      %s122 = sphi 0, %s119
      %s123 = sphi 0, %s122
      %s139 = sphi 0, %s123
      %s143 = sphi 0, %s143
      %s145 = sphi 0, %s143
      %s146 = sphi 0, %s145
      %s160 = sphi 0, %s146
      %s164 = sphi 0, %s164
      %s166 = sphi 0, %s164
      %s167 = sphi 0, %s166
      %s181 = sphi 0, %s167
      %s185 = sphi 0, %s185
      %s187 = sphi 0, %s185
      %s188 = sphi 0, %s187
      %s202 = sphi 0, %s188
      %s206 = sphi 0, %s206
      %s208 = sphi 0, %s206
      %s209 = sphi 0, %s208
      %s223 = sphi 0, %s209
      %s227 = sphi 0, %s227
      %s229 = sphi 0, %s227
      %s230 = sphi 0, %s229
      %s244 = sphi 0, %s230
      %s248 = sphi 0, %s248
      %s250 = sphi 0, %s248
      %s251 = sphi 0, %s250
      %s265 = sphi 0, %s251
      %s269 = sphi 0, %s269
      %s271 = sphi 0, %s269
      %s272 = sphi 0, %s271
      %s286 = sphi 0, %s272
      %s290 = sphi 0, %s290
      %s292 = sphi 0, %s290
      %s293 = sphi 0, %s292
      %s307 = sphi 0, %s293
      %s311 = sphi 0, %s311
      %s313 = sphi 0, %s311
      %s314 = sphi 0, %s313
      %s328 = sphi 0, %s314
      %s332 = sphi 0, %s332
      %s334 = sphi 0, %s332
      %s335 = sphi 0, %s334
      %s349 = sphi 0, %s335
      %s353 = sphi 0, %s353
      %s355 = sphi 0, %s353
      %s356 = sphi 0, %s355
      %s370 = sphi 0, %s356
      %s374 = sphi 0, %s374
      %s376 = sphi 0, %s374
      %s377 = sphi 0, %s376
      %s391 = sphi 0, %s377
      %s399 = sphi 0, %s401
      %s402 = sphi 0, %s399
      %s403 = sphi 0, %s402
      %s419 = sphi 0, %s403
    $region4: #{tpu_custom_call.1} parent=1 // loop_header_branch
      %35 = sbr.rel (%p33) target = $region8
    $region5: #{tpu_custom_call.1} parent=1 // loop_body
      %s37 = ssub.s32 %s32, 1
      %s38 = ssub.s32 %s32, 2
      %s48 = sadd.s32 1, %s41
      %p49 = scmp.ge.s32.totalorder %s48, 1
      %s50 = scalar_select %p49, 0, %s48
      %s51 = sadd.s32 1, %s40
      %s52 = scalar_select %p49, %s51, %s40
      %p53 = scmp.ge.s32.totalorder %s52, 1
      %s54 = scalar_select %p53, 0, %s52
      %s55 = sadd.s32 1, %s39
      %s56 = scalar_select %p53, %s55, %s39
      %p57 = scmp.ge.s32.totalorder %s56, 2
      %s58 = scalar_select %p57, 0, %s56
      %s59 = ssub.s32 %s39, %s58
      %s60 = ssub.s32 %s40, %s54
      %s61 = sor.u32 %s59, %s60
      %p62 = scmp.eq.s32.totalorder %s61, 0
      %s64 = sadd.s32 %s63, 1
      %s65 = scalar_select %p62, %s63, %s64
      %p68 = pneg %p62
      %p69 = scmp.eq.s32.totalorder %s32, 1
      %p70 = por %p68, %p69
      %p71 = scmp.ne.s32.totalorder %s63, %s66
      %p72 = scmp.eq.s32.totalorder %s32, 0
      %p73 = por %p71, %p72
      %p74 = scmp.ne.s32.totalorder %s63, %s66
      %p75 = scmp.eq.s32.totalorder %s37, 1
      %p76 = por %p74, %p75
      %p77 = scmp.ne.s32.totalorder %s66, %s67
      %p78 = scmp.eq.s32.totalorder %s37, 0
      %p79 = por %p77, %p78
      %p80 = scmp.ne.s32.totalorder %s66, %s67
      %p81 = scmp.eq.s32.totalorder %s38, 1
      %p82 = por %p80, %p81
      %p84 = scmp.ne.s32.totalorder %s67, %s83
      %p85 = scmp.eq.s32.totalorder %s38, 0
      %p86 = por %p84, %p85
      %s87 = ssub.s32 %s39, %s58
      %s88 = ssub.s32 %s41, %s50
      %s89 = sor.u32 %s87, %s88
      %p90 = scmp.eq.s32.totalorder %s89, 0
      %s92 = sadd.s32 %s91, 1
      %s93 = scalar_select %p90, %s91, %s92
      %p96 = pneg %p90
      %p97 = scmp.eq.s32.totalorder %s32, 1
      %p98 = por %p96, %p97
      %p99 = scmp.ne.s32.totalorder %s91, %s94
      %p100 = scmp.eq.s32.totalorder %s32, 0
      %p101 = por %p99, %p100
      %p102 = scmp.ne.s32.totalorder %s91, %s94
      %p103 = scmp.eq.s32.totalorder %s37, 1
      %p104 = por %p102, %p103
      %p105 = scmp.ne.s32.totalorder %s94, %s95
      %p106 = scmp.eq.s32.totalorder %s37, 0
      %p107 = por %p105, %p106
      %p108 = scmp.ne.s32.totalorder %s94, %s95
      %p109 = scmp.eq.s32.totalorder %s38, 1
      %p110 = por %p108, %p109
      %p112 = scmp.ne.s32.totalorder %s95, %s111
      %p113 = scmp.eq.s32.totalorder %s38, 0
      %p114 = por %p112, %p113
      %s115 = ssub.s32 %s39, %s58
      %s116 = ssub.s32 %s41, %s50
      %s117 = sor.u32 %s115, %s116
      %p118 = scmp.eq.s32.totalorder %s117, 0
      %s120 = sadd.s32 %s119, 1
      %s121 = scalar_select %p118, %s119, %s120
      %p124 = pneg %p118
      %p125 = scmp.eq.s32.totalorder %s32, 1
      %p126 = por %p124, %p125
      %p127 = scmp.ne.s32.totalorder %s119, %s122
      %p128 = scmp.eq.s32.totalorder %s32, 0
      %p129 = por %p127, %p128
      %p130 = scmp.ne.s32.totalorder %s119, %s122
      %p131 = scmp.eq.s32.totalorder %s37, 1
      %p132 = por %p130, %p131
      %p133 = scmp.ne.s32.totalorder %s122, %s123
      %p134 = scmp.eq.s32.totalorder %s37, 0
      %p135 = por %p133, %p134
      %p136 = scmp.ne.s32.totalorder %s122, %s123
      %p137 = scmp.eq.s32.totalorder %s38, 1
      %p138 = por %p136, %p137
      %p140 = scmp.ne.s32.totalorder %s123, %s139
      %p141 = scmp.eq.s32.totalorder %s38, 0
      %p142 = por %p140, %p141
      %s144 = sadd.s32 %s143, 1
      %p147 = scmp.eq.s32.totalorder %s32, 1
      %p148 = scmp.ne.s32.totalorder %s143, %s145
      %p149 = scmp.eq.s32.totalorder %s32, 0
      %p150 = por %p148, %p149
      %p151 = scmp.ne.s32.totalorder %s143, %s145
      %p152 = scmp.eq.s32.totalorder %s37, 1
      %p153 = por %p151, %p152
      %p154 = scmp.ne.s32.totalorder %s145, %s146
      %p155 = scmp.eq.s32.totalorder %s37, 0
      %p156 = por %p154, %p155
      %p157 = scmp.ne.s32.totalorder %s145, %s146
      %p158 = scmp.eq.s32.totalorder %s38, 1
      %p159 = por %p157, %p158
      %p161 = scmp.ne.s32.totalorder %s146, %s160
      %p162 = scmp.eq.s32.totalorder %s38, 0
      %p163 = por %p161, %p162
      %s165 = sadd.s32 %s164, 1
      %p168 = scmp.eq.s32.totalorder %s32, 1
      %p169 = scmp.ne.s32.totalorder %s164, %s166
      %p170 = scmp.eq.s32.totalorder %s32, 0
      %p171 = por %p169, %p170
      %p172 = scmp.ne.s32.totalorder %s164, %s166
      %p173 = scmp.eq.s32.totalorder %s37, 1
      %p174 = por %p172, %p173
      %p175 = scmp.ne.s32.totalorder %s166, %s167
      %p176 = scmp.eq.s32.totalorder %s37, 0
      %p177 = por %p175, %p176
      %p178 = scmp.ne.s32.totalorder %s166, %s167
      %p179 = scmp.eq.s32.totalorder %s38, 1
      %p180 = por %p178, %p179
      %p182 = scmp.ne.s32.totalorder %s167, %s181
      %p183 = scmp.eq.s32.totalorder %s38, 0
      %p184 = por %p182, %p183
      %s186 = sadd.s32 %s185, 1
      %p189 = scmp.eq.s32.totalorder %s32, 1
      %p190 = scmp.ne.s32.totalorder %s185, %s187
      %p191 = scmp.eq.s32.totalorder %s32, 0
      %p192 = por %p190, %p191
      %p193 = scmp.ne.s32.totalorder %s185, %s187
      %p194 = scmp.eq.s32.totalorder %s37, 1
      %p195 = por %p193, %p194
      %p196 = scmp.ne.s32.totalorder %s187, %s188
      %p197 = scmp.eq.s32.totalorder %s37, 0
      %p198 = por %p196, %p197
      %p199 = scmp.ne.s32.totalorder %s187, %s188
      %p200 = scmp.eq.s32.totalorder %s38, 1
      %p201 = por %p199, %p200
      %p203 = scmp.ne.s32.totalorder %s188, %s202
      %p204 = scmp.eq.s32.totalorder %s38, 0
      %p205 = por %p203, %p204
      %s207 = sadd.s32 %s206, 1
      %p210 = scmp.eq.s32.totalorder %s32, 1
      %p211 = scmp.ne.s32.totalorder %s206, %s208
      %p212 = scmp.eq.s32.totalorder %s32, 0
      %p213 = por %p211, %p212
      %p214 = scmp.ne.s32.totalorder %s206, %s208
      %p215 = scmp.eq.s32.totalorder %s37, 1
      %p216 = por %p214, %p215
      %p217 = scmp.ne.s32.totalorder %s208, %s209
      %p218 = scmp.eq.s32.totalorder %s37, 0
      %p219 = por %p217, %p218
      %p220 = scmp.ne.s32.totalorder %s208, %s209
      %p221 = scmp.eq.s32.totalorder %s38, 1
      %p222 = por %p220, %p221
      %p224 = scmp.ne.s32.totalorder %s209, %s223
      %p225 = scmp.eq.s32.totalorder %s38, 0
      %p226 = por %p224, %p225
      %s228 = sadd.s32 %s227, 1
      %p231 = scmp.eq.s32.totalorder %s32, 1
      %p232 = scmp.ne.s32.totalorder %s227, %s229
      %p233 = scmp.eq.s32.totalorder %s32, 0
      %p234 = por %p232, %p233
      %p235 = scmp.ne.s32.totalorder %s227, %s229
      %p236 = scmp.eq.s32.totalorder %s37, 1
      %p237 = por %p235, %p236
      %p238 = scmp.ne.s32.totalorder %s229, %s230
      %p239 = scmp.eq.s32.totalorder %s37, 0
      %p240 = por %p238, %p239
      %p241 = scmp.ne.s32.totalorder %s229, %s230
      %p242 = scmp.eq.s32.totalorder %s38, 1
      %p243 = por %p241, %p242
      %p245 = scmp.ne.s32.totalorder %s230, %s244
      %p246 = scmp.eq.s32.totalorder %s38, 0
      %p247 = por %p245, %p246
      %s249 = sadd.s32 %s248, 1
      %p252 = scmp.eq.s32.totalorder %s32, 1
      %p253 = scmp.ne.s32.totalorder %s248, %s250
      %p254 = scmp.eq.s32.totalorder %s32, 0
      %p255 = por %p253, %p254
      %p256 = scmp.ne.s32.totalorder %s248, %s250
      %p257 = scmp.eq.s32.totalorder %s37, 1
      %p258 = por %p256, %p257
      %p259 = scmp.ne.s32.totalorder %s250, %s251
      %p260 = scmp.eq.s32.totalorder %s37, 0
      %p261 = por %p259, %p260
      %p262 = scmp.ne.s32.totalorder %s250, %s251
      %p263 = scmp.eq.s32.totalorder %s38, 1
      %p264 = por %p262, %p263
      %p266 = scmp.ne.s32.totalorder %s251, %s265
      %p267 = scmp.eq.s32.totalorder %s38, 0
      %p268 = por %p266, %p267
      %s270 = sadd.s32 %s269, 1
      %p273 = scmp.eq.s32.totalorder %s32, 1
      %p274 = scmp.ne.s32.totalorder %s269, %s271
      %p275 = scmp.eq.s32.totalorder %s32, 0
      %p276 = por %p274, %p275
      %p277 = scmp.ne.s32.totalorder %s269, %s271
      %p278 = scmp.eq.s32.totalorder %s37, 1
      %p279 = por %p277, %p278
      %p280 = scmp.ne.s32.totalorder %s271, %s272
      %p281 = scmp.eq.s32.totalorder %s37, 0
      %p282 = por %p280, %p281
      %p283 = scmp.ne.s32.totalorder %s271, %s272
      %p284 = scmp.eq.s32.totalorder %s38, 1
      %p285 = por %p283, %p284
      %p287 = scmp.ne.s32.totalorder %s272, %s286
      %p288 = scmp.eq.s32.totalorder %s38, 0
      %p289 = por %p287, %p288
      %s291 = sadd.s32 %s290, 1
      %p294 = scmp.eq.s32.totalorder %s32, 1
      %p295 = scmp.ne.s32.totalorder %s290, %s292
      %p296 = scmp.eq.s32.totalorder %s32, 0
      %p297 = por %p295, %p296
      %p298 = scmp.ne.s32.totalorder %s290, %s292
      %p299 = scmp.eq.s32.totalorder %s37, 1
      %p300 = por %p298, %p299
      %p301 = scmp.ne.s32.totalorder %s292, %s293
      %p302 = scmp.eq.s32.totalorder %s37, 0
      %p303 = por %p301, %p302
      %p304 = scmp.ne.s32.totalorder %s292, %s293
      %p305 = scmp.eq.s32.totalorder %s38, 1
      %p306 = por %p304, %p305
      %p308 = scmp.ne.s32.totalorder %s293, %s307
      %p309 = scmp.eq.s32.totalorder %s38, 0
      %p310 = por %p308, %p309
      %s312 = sadd.s32 %s311, 1
      %p315 = scmp.eq.s32.totalorder %s32, 1
      %p316 = scmp.ne.s32.totalorder %s311, %s313
      %p317 = scmp.eq.s32.totalorder %s32, 0
      %p318 = por %p316, %p317
      %p319 = scmp.ne.s32.totalorder %s311, %s313
      %p320 = scmp.eq.s32.totalorder %s37, 1
      %p321 = por %p319, %p320
      %p322 = scmp.ne.s32.totalorder %s313, %s314
      %p323 = scmp.eq.s32.totalorder %s37, 0
      %p324 = por %p322, %p323
      %p325 = scmp.ne.s32.totalorder %s313, %s314
      %p326 = scmp.eq.s32.totalorder %s38, 1
      %p327 = por %p325, %p326
      %p329 = scmp.ne.s32.totalorder %s314, %s328
      %p330 = scmp.eq.s32.totalorder %s38, 0
      %p331 = por %p329, %p330
      %s333 = sadd.s32 %s332, 1
      %p336 = scmp.eq.s32.totalorder %s32, 1
      %p337 = scmp.ne.s32.totalorder %s332, %s334
      %p338 = scmp.eq.s32.totalorder %s32, 0
      %p339 = por %p337, %p338
      %p340 = scmp.ne.s32.totalorder %s332, %s334
      %p341 = scmp.eq.s32.totalorder %s37, 1
      %p342 = por %p340, %p341
      %p343 = scmp.ne.s32.totalorder %s334, %s335
      %p344 = scmp.eq.s32.totalorder %s37, 0
      %p345 = por %p343, %p344
      %p346 = scmp.ne.s32.totalorder %s334, %s335
      %p347 = scmp.eq.s32.totalorder %s38, 1
      %p348 = por %p346, %p347
      %p350 = scmp.ne.s32.totalorder %s335, %s349
      %p351 = scmp.eq.s32.totalorder %s38, 0
      %p352 = por %p350, %p351
      %s354 = sadd.s32 %s353, 1
      %p357 = scmp.eq.s32.totalorder %s32, 1
      %p358 = scmp.ne.s32.totalorder %s353, %s355
      %p359 = scmp.eq.s32.totalorder %s32, 0
      %p360 = por %p358, %p359
      %p361 = scmp.ne.s32.totalorder %s353, %s355
      %p362 = scmp.eq.s32.totalorder %s37, 1
      %p363 = por %p361, %p362
      %p364 = scmp.ne.s32.totalorder %s355, %s356
      %p365 = scmp.eq.s32.totalorder %s37, 0
      %p366 = por %p364, %p365
      %p367 = scmp.ne.s32.totalorder %s355, %s356
      %p368 = scmp.eq.s32.totalorder %s38, 1
      %p369 = por %p367, %p368
      %p371 = scmp.ne.s32.totalorder %s356, %s370
      %p372 = scmp.eq.s32.totalorder %s38, 0
      %p373 = por %p371, %p372
      %s375 = sadd.s32 %s374, 1
      %p378 = scmp.eq.s32.totalorder %s32, 1
      %p379 = scmp.ne.s32.totalorder %s374, %s376
      %p380 = scmp.eq.s32.totalorder %s32, 0
      %p381 = por %p379, %p380
      %p382 = scmp.ne.s32.totalorder %s374, %s376
      %p383 = scmp.eq.s32.totalorder %s37, 1
      %p384 = por %p382, %p383
      %p385 = scmp.ne.s32.totalorder %s376, %s377
      %p386 = scmp.eq.s32.totalorder %s37, 0
      %p387 = por %p385, %p386
      %p388 = scmp.ne.s32.totalorder %s376, %s377
      %p389 = scmp.eq.s32.totalorder %s38, 1
      %p390 = por %p388, %p389
      %p392 = scmp.ne.s32.totalorder %s377, %s391
      %p393 = scmp.eq.s32.totalorder %s38, 0
      %p394 = por %p392, %p393
      %s395 = ssub.s32 %s39, %s58
      %s396 = ssub.s32 %s40, %s54
      %s397 = sor.u32 %s395, %s396
      %p398 = scmp.eq.s32.totalorder %s397, 0
      %s400 = sadd.s32 %s399, 1
      %s401 = scalar_select %p398, %s399, %s400
      %p404 = pneg %p398
      %p405 = scmp.eq.s32.totalorder %s32, 1
      %p406 = por %p404, %p405
      %p407 = scmp.ne.s32.totalorder %s399, %s402
      %p408 = scmp.eq.s32.totalorder %s32, 0
      %p409 = por %p407, %p408
      %p410 = scmp.ne.s32.totalorder %s399, %s402
      %p411 = scmp.eq.s32.totalorder %s37, 1
      %p412 = por %p410, %p411
      %p413 = scmp.ne.s32.totalorder %s402, %s403
      %p414 = scmp.eq.s32.totalorder %s37, 0
      %p415 = por %p413, %p414
      %p416 = scmp.ne.s32.totalorder %s402, %s403
      %p417 = scmp.eq.s32.totalorder %s38, 1
      %p418 = por %p416, %p417
      %p420 = scmp.ne.s32.totalorder %s403, %s419
      %p421 = scmp.eq.s32.totalorder %s38, 0
      %p422 = por %p420, %p421
      %p423 = scmp.le.s32.totalorder 1, %s32
      %p424 = scmp.lt.s32.totalorder %s32, 3
      %p425 = pnand %p423, %p424
      %p426 = pneg %p425
      // Predicated region
      $region9: #{tpu_custom_call.1} parent=5 // pred_check
        _
      $region10: #{tpu_custom_call.1} parent=5 // pred_check_branch
        %428 = sbr.rel (%p425) target = $region12
      $region11: #{tpu_custom_call.1} parent=5 // pred_region
        %s429 = ssub.s32 %s32, 1
        // Predicated region
        $region13: #{tpu_custom_call.1} parent=11 // pred_check
          %p430 = pneg %p156
        $region14: #{tpu_custom_call.1} parent=11 // pred_check_branch
          %432 = sbr.rel (%p430) target = $region16
        $region15: #{tpu_custom_call.1} parent=11 // pred_region
          %s434 = ssub.s32 2048, 2048
          %435 = vsyncadd [#allocation13], %s434
          %s436 = sshll.u32 [#allocation12], 4
          %s437 = int_to_ptr.vmem [resolvable:$true] %s436
          %442 = dma.hbm_to_vmem [thread:$0]  %s3, 2048, %s437, [#allocation13], 128, 128, 8
        $region16: #{tpu_custom_call.1} parent=11 // pred_fallthru
          _
        // Predicated region
        $region17: #{tpu_custom_call.1} parent=11 // pred_check
          %p443 = pneg %p177
        $region18: #{tpu_custom_call.1} parent=11 // pred_check_branch
          %445 = sbr.rel (%p443) target = $region20
        $region19: #{tpu_custom_call.1} parent=11 // pred_region
          _
        $region20: #{tpu_custom_call.1} parent=11 // pred_fallthru
          _
        // Predicated region
        $region21: #{tpu_custom_call.1} parent=11 // pred_check
          %p446 = pneg %p198
        $region22: #{tpu_custom_call.1} parent=11 // pred_check_branch
          %448 = sbr.rel (%p446) target = $region24
        $region23: #{tpu_custom_call.1} parent=11 // pred_region
          %s450 = ssub.s32 2048, 2048
          %451 = vsyncadd [#allocation13], %s450
          %s452 = sshll.u32 [#allocation14], 4
          %s453 = int_to_ptr.vmem [resolvable:$true] %s452
          %458 = dma.hbm_to_vmem [thread:$0]  %s5, 2048, %s453, [#allocation13], 128, 128, 8
        $region24: #{tpu_custom_call.1} parent=11 // pred_fallthru
          _
        // Predicated region
        $region25: #{tpu_custom_call.1} parent=11 // pred_check
          %p459 = pneg %p219
        $region26: #{tpu_custom_call.1} parent=11 // pred_check_branch
          %461 = sbr.rel (%p459) target = $region28
        $region27: #{tpu_custom_call.1} parent=11 // pred_region
          _
        $region28: #{tpu_custom_call.1} parent=11 // pred_fallthru
          _
        // Predicated region
        $region29: #{tpu_custom_call.1} parent=11 // pred_check
          %p462 = pneg %p240
        $region30: #{tpu_custom_call.1} parent=11 // pred_check_branch
          %464 = sbr.rel (%p462) target = $region32
        $region31: #{tpu_custom_call.1} parent=11 // pred_region
          _
        $region32: #{tpu_custom_call.1} parent=11 // pred_fallthru
          _
        // Predicated region
        $region33: #{tpu_custom_call.1} parent=11 // pred_check
          %p465 = pneg %p261
        $region34: #{tpu_custom_call.1} parent=11 // pred_check_branch
          %467 = sbr.rel (%p465) target = $region36
        $region35: #{tpu_custom_call.1} parent=11 // pred_region
          _
        $region36: #{tpu_custom_call.1} parent=11 // pred_fallthru
          _
        // Predicated region
        $region37: #{tpu_custom_call.1} parent=11 // pred_check
          %p468 = pneg %p282
        $region38: #{tpu_custom_call.1} parent=11 // pred_check_branch
          %470 = sbr.rel (%p468) target = $region40
        $region39: #{tpu_custom_call.1} parent=11 // pred_region
          %s472 = ssub.s32 4096, 4096
          %473 = vsyncadd [#allocation16], %s472
          %s474 = sshll.u32 [#allocation15], 4
          %s475 = int_to_ptr.vmem [resolvable:$true] %s474
          %480 = dma.hbm_to_vmem [thread:$0]  %s9, 4096, %s475, [#allocation16], 256, 256, 16
        $region40: #{tpu_custom_call.1} parent=11 // pred_fallthru
          _
        // Predicated region
        $region41: #{tpu_custom_call.1} parent=11 // pred_check
          %p481 = pneg %p303
        $region42: #{tpu_custom_call.1} parent=11 // pred_check_branch
          %483 = sbr.rel (%p481) target = $region44
        $region43: #{tpu_custom_call.1} parent=11 // pred_region
          _
        $region44: #{tpu_custom_call.1} parent=11 // pred_fallthru
          _
        // Predicated region
        $region45: #{tpu_custom_call.1} parent=11 // pred_check
          %p484 = pneg %p324
        $region46: #{tpu_custom_call.1} parent=11 // pred_check_branch
          %486 = sbr.rel (%p484) target = $region48
        $region47: #{tpu_custom_call.1} parent=11 // pred_region
          %s488 = ssub.s32 4096, 4096
          %489 = vsyncadd [#allocation16], %s488
          %s490 = sshll.u32 [#allocation17], 4
          %s491 = int_to_ptr.vmem [resolvable:$true] %s490
          %496 = dma.hbm_to_vmem [thread:$0]  %s11, 4096, %s491, [#allocation16], 128, 128, 8
        $region48: #{tpu_custom_call.1} parent=11 // pred_fallthru
          _
        // Predicated region
        $region49: #{tpu_custom_call.1} parent=11 // pred_check
          %p497 = pneg %p345
        $region50: #{tpu_custom_call.1} parent=11 // pred_check_branch
          %499 = sbr.rel (%p497) target = $region52
        $region51: #{tpu_custom_call.1} parent=11 // pred_region
          _
        $region52: #{tpu_custom_call.1} parent=11 // pred_fallthru
          _
        // Predicated region
        $region53: #{tpu_custom_call.1} parent=11 // pred_check
          %p500 = pneg %p366
        $region54: #{tpu_custom_call.1} parent=11 // pred_check_branch
          %502 = sbr.rel (%p500) target = $region56
        $region55: #{tpu_custom_call.1} parent=11 // pred_region
          _
        $region56: #{tpu_custom_call.1} parent=11 // pred_fallthru
          _
        // Predicated region
        $region57: #{tpu_custom_call.1} parent=11 // pred_check
          %p503 = pneg %p387
        $region58: #{tpu_custom_call.1} parent=11 // pred_check_branch
          %505 = sbr.rel (%p503) target = $region60
        $region59: #{tpu_custom_call.1} parent=11 // pred_region
          _
        $region60: #{tpu_custom_call.1} parent=11 // pred_fallthru
          _
      $region12: #{tpu_custom_call.1} parent=5 // pred_fallthru
        _
      %p506 = scmp.lt.s32.totalorder %s32, 2
      // Predicated region
      $region61: #{tpu_custom_call.1} parent=5 // pred_check
        %p507 = pneg %p506
      $region62: #{tpu_custom_call.1} parent=5 // pred_check_branch
        %509 = sbr.rel (%p507) target = $region64
      $region63: #{tpu_custom_call.1} parent=5 // pred_region
        // Predicated region
        $region65: #{tpu_custom_call.1} parent=63 // pred_check
          %p510 = pneg %p73
        $region66: #{tpu_custom_call.1} parent=63 // pred_check_branch
          %512 = sbr.rel (%p510) target = $region68
        $region67: #{tpu_custom_call.1} parent=63 // pred_region
          %s513 = sand.u32 %s63, 1
          %s514 = scalar_lea.sflag [#allocation7], %s513
          %s515 = sand.u32 %s63, 1
          %s516 = smul.addr %s515, 8
          %s517 = scalar_lea.vmem [#allocation6], %s516
          %s519 = ssub.s32 128, 128
          %520 = vsyncadd %s514, %s519
          %s521 = sadd.s32 %s40, %s39
          %s522 = smul.addr %s521, 128
          %s523 = scalar_lea.hbm %s0, %s522
          %s525 = sshll.u32 %s517, 4
          %s526 = int_to_ptr.vmem [resolvable:$true] %s525
          %528 = dma.hbm_to_vmem [thread:$0]  %s523, 128, %s526, %s514
        $region68: #{tpu_custom_call.1} parent=63 // pred_fallthru
          _
        // Predicated region
        $region69: #{tpu_custom_call.1} parent=63 // pred_check
          %p529 = pneg %p101
        $region70: #{tpu_custom_call.1} parent=63 // pred_check_branch
          %531 = sbr.rel (%p529) target = $region72
        $region71: #{tpu_custom_call.1} parent=63 // pred_region
          %s532 = sand.u32 %s32, 1
          %s533 = scalar_lea.sflag [#allocation10], %s532
          %s534 = sand.u32 %s91, 1
          %s535 = smul.addr %s534, 8
          %s536 = scalar_lea.vmem [#allocation9], %s535
          %s538 = ssub.s32 128, 128
          %539 = vsyncadd %s533, %s538
          %s540 = sadd.s32 %s41, %s39
          %s541 = smul.addr %s540, 128
          %s542 = scalar_lea.hbm %s1, %s541
          %s544 = sshll.u32 %s536, 4
          %s545 = int_to_ptr.vmem [resolvable:$true] %s544
          %547 = dma.hbm_to_vmem [thread:$0]  %s542, 128, %s545, %s533
        $region72: #{tpu_custom_call.1} parent=63 // pred_fallthru
          _
        // Predicated region
        $region73: #{tpu_custom_call.1} parent=63 // pred_check
          %p548 = pneg %p129
        $region74: #{tpu_custom_call.1} parent=63 // pred_check_branch
          %550 = sbr.rel (%p548) target = $region76
        $region75: #{tpu_custom_call.1} parent=63 // pred_region
          %s551 = sand.u32 %s32, 1
          %s552 = scalar_lea.sflag [#allocation10], %s551
          %s553 = sand.u32 %s119, 1
          %s554 = smul.addr %s553, 8
          %s555 = scalar_lea.vmem [#allocation11], %s554
          %s557 = ssub.s32 128, 128
          %558 = vsyncadd %s552, %s557
          %s559 = sadd.s32 %s41, %s39
          %s560 = smul.addr %s559, 128
          %s561 = scalar_lea.hbm %s2, %s560
          %s563 = sshll.u32 %s555, 4
          %s564 = int_to_ptr.vmem [resolvable:$true] %s563
          %566 = dma.hbm_to_vmem [thread:$0]  %s561, 128, %s564, %s552
        $region76: #{tpu_custom_call.1} parent=63 // pred_fallthru
          _
      $region64: #{tpu_custom_call.1} parent=5 // pred_fallthru
        _
      %p567 = scmp.le.s32.totalorder 1, %s32
      %p568 = scmp.lt.s32.totalorder %s32, 3
      %p569 = pnand %p567, %p568
      %p570 = pneg %p569
      // Predicated region
      $region77: #{tpu_custom_call.1} parent=5 // pred_check
        _
      $region78: #{tpu_custom_call.1} parent=5 // pred_check_branch
        %572 = sbr.rel (%p569) target = $region80
      $region79: #{tpu_custom_call.1} parent=5 // pred_region
        %s573 = ssub.s32 %s32, 1
        %s574 = sand.u32 %s66, 1
        %s575 = scalar_lea.sflag [#allocation7], %s574
        %s576 = sand.u32 %s66, 1
        %s577 = smul.addr %s576, 8
        %s578 = scalar_lea.vmem [#allocation6], %s577
        // Predicated region
        $region81: #{tpu_custom_call.1} parent=79 // pred_check
          %p579 = pneg %p79
        $region82: #{tpu_custom_call.1} parent=79 // pred_check_branch
          %581 = sbr.rel (%p579) target = $region84
        $region83: #{tpu_custom_call.1} parent=79 // pred_region
          %582 = dma.done %s575, 128
        $region84: #{tpu_custom_call.1} parent=79 // pred_fallthru
          _
        %s583 = sand.u32 %s37, 1
        %s584 = scalar_lea.sflag [#allocation10], %s583
        %s585 = sand.u32 %s94, 1
        %s586 = smul.addr %s585, 8
        %s587 = scalar_lea.vmem [#allocation9], %s586
        // Predicated region
        $region85: #{tpu_custom_call.1} parent=79 // pred_check
          %p588 = pneg %p107
        $region86: #{tpu_custom_call.1} parent=79 // pred_check_branch
          %590 = sbr.rel (%p588) target = $region88
        $region87: #{tpu_custom_call.1} parent=79 // pred_region
          %591 = dma.done %s584, 128
        $region88: #{tpu_custom_call.1} parent=79 // pred_fallthru
          _
        %s592 = sand.u32 %s37, 1
        %s593 = scalar_lea.sflag [#allocation10], %s592
        %s594 = sand.u32 %s122, 1
        %s595 = smul.addr %s594, 8
        %s596 = scalar_lea.vmem [#allocation11], %s595
        // Predicated region
        $region89: #{tpu_custom_call.1} parent=79 // pred_check
          %p597 = pneg %p135
        $region90: #{tpu_custom_call.1} parent=79 // pred_check_branch
          %599 = sbr.rel (%p597) target = $region92
        $region91: #{tpu_custom_call.1} parent=79 // pred_region
          %600 = dma.done %s593, 128
        $region92: #{tpu_custom_call.1} parent=79 // pred_fallthru
          _
        // Predicated region
        $region93: #{tpu_custom_call.1} parent=79 // pred_check
          %p601 = pneg %p156
        $region94: #{tpu_custom_call.1} parent=79 // pred_check_branch
          %603 = sbr.rel (%p601) target = $region96
        $region95: #{tpu_custom_call.1} parent=79 // pred_region
          %604 = dma.done [#allocation13], 2048
        $region96: #{tpu_custom_call.1} parent=79 // pred_fallthru
          _
        // Predicated region
        $region97: #{tpu_custom_call.1} parent=79 // pred_check
          %p605 = pneg %p198
        $region98: #{tpu_custom_call.1} parent=79 // pred_check_branch
          %607 = sbr.rel (%p605) target = $region100
        $region99: #{tpu_custom_call.1} parent=79 // pred_region
          %608 = dma.done [#allocation13], 2048
        $region100: #{tpu_custom_call.1} parent=79 // pred_fallthru
          _
        // Predicated region
        $region101: #{tpu_custom_call.1} parent=79 // pred_check
          %p609 = pneg %p282
        $region102: #{tpu_custom_call.1} parent=79 // pred_check_branch
          %611 = sbr.rel (%p609) target = $region104
        $region103: #{tpu_custom_call.1} parent=79 // pred_region
          %612 = dma.done [#allocation16], 4096
        $region104: #{tpu_custom_call.1} parent=79 // pred_fallthru
          _
        // Predicated region
        $region105: #{tpu_custom_call.1} parent=79 // pred_check
          %p613 = pneg %p324
        $region106: #{tpu_custom_call.1} parent=79 // pred_check_branch
          %615 = sbr.rel (%p613) target = $region108
        $region107: #{tpu_custom_call.1} parent=79 // pred_region
          %616 = dma.done [#allocation16], 4096
        $region108: #{tpu_custom_call.1} parent=79 // pred_fallthru
          _
        %s617 = sand.u32 %s66, 1
        %s618 = scalar_lea.sflag [#allocation7], %s617
        %s619 = sand.u32 %s66, 1
        %s620 = smul.addr %s619, 8
        %s621 = scalar_lea.vmem [#allocation6], %s620
        %p622 = pneg %p79
        %p623 = pneg %p76
        %s624 = sand.u32 %s37, 1
        %s625 = scalar_lea.sflag [#allocation10], %s624
        %s626 = sand.u32 %s94, 1
        %s627 = smul.addr %s626, 8
        %s628 = scalar_lea.vmem [#allocation9], %s627
        %p629 = pneg %p107
        %p630 = pneg %p104
        %s631 = sand.u32 %s37, 1
        %s632 = scalar_lea.sflag [#allocation10], %s631
        %s633 = sand.u32 %s122, 1
        %s634 = smul.addr %s633, 8
        %s635 = scalar_lea.vmem [#allocation11], %s634
        %p636 = pneg %p135
        %p637 = pneg %p132
        %p638 = pneg %p156
        %p639 = pneg %p153
        %p640 = pneg %p177
        %p641 = pneg %p174
        %p642 = pneg %p198
        %p643 = pneg %p195
        %p644 = pneg %p219
        %p645 = pneg %p216
        %p646 = pneg %p240
        %p647 = pneg %p237
        %p648 = pneg %p261
        %p649 = pneg %p258
        %p650 = pneg %p282
        %p651 = pneg %p279
        %p652 = pneg %p303
        %p653 = pneg %p300
        %p654 = pneg %p324
        %p655 = pneg %p321
        %p656 = pneg %p345
        %p657 = pneg %p342
        %p658 = pneg %p366
        %p659 = pneg %p363
        %p660 = pneg %p387
        %p661 = pneg %p384
        %p662 = pneg %p415
        %p663 = pneg %p412
        %s664 = sand.u32 %s402, 1
        %s665 = scalar_lea.sflag [#allocation8], %s664
        %s666 = sand.u32 %s402, 1
        %s667 = smul.addr %s666, 8
        %s668 = scalar_lea.vmem [#allocation18], %s667
        %p669 = scmp.eq.s32.totalorder %s44, 0
        // Predicated region
        $region109: #{tpu_custom_call.1} parent=79 // pred_check
          %p670 = pneg %p669
        $region110: #{tpu_custom_call.1} parent=79 // pred_check_branch
          %672 = sbr.rel (%p670) target = $region112
        $region111: #{tpu_custom_call.1} parent=79 // pred_region
          %v673 = vld [vmem:[%s578] sm:$0xff]
          %v674 = vld [vmem:[#allocation12] sm:$0xff]
          %v675 = vld [vmem:[#allocation12 + $0x8] sm:$0xff]
          %v676 = vld [vmem:[#allocation12 + $0x10] sm:$0xff]
          %v677 = vld [vmem:[#allocation12 + $0x18] sm:$0xff]
          %v678 = vld [vmem:[#allocation12 + $0x20] sm:$0xff]
          %v679 = vld [vmem:[#allocation12 + $0x28] sm:$0xff]
          %v680 = vld [vmem:[#allocation12 + $0x30] sm:$0xff]
          %v681 = vld [vmem:[#allocation12 + $0x38] sm:$0xff]
          %v682 = vld [vmem:[#allocation12 + $0x40] sm:$0xff]
          %v683 = vld [vmem:[#allocation12 + $0x48] sm:$0xff]
          %v684 = vld [vmem:[#allocation12 + $0x50] sm:$0xff]
          %v685 = vld [vmem:[#allocation12 + $0x58] sm:$0xff]
          %v686 = vld [vmem:[#allocation12 + $0x60] sm:$0xff]
          %v687 = vld [vmem:[#allocation12 + $0x68] sm:$0xff]
          %v688 = vld [vmem:[#allocation12 + $0x70] sm:$0xff]
          %v689 = vld [vmem:[#allocation12 + $0x78] sm:$0xff]
          %v690 = vld [vmem:[%s4] sm:$0x1]
          %v692 = vlaneseq
          %v693 = vshrl.u32 %v692, 7
          %v694 = vsub.s32 0, %v693
          %v695 = vrot.slane %v690, %v694
          %697 = vmatprep.subr.mxu0 0.0
          %698 = vmatpush1.msra.mxu0 %v689
          %699 = vmatprep.subr.mxu0 0.0
          %700 = vmatpush1.msra.mxu0 %v688
          %701 = vmatprep.subr.mxu0 0.0
          %702 = vmatpush1.msra.mxu0 %v687
          %703 = vmatprep.subr.mxu0 0.0
          %704 = vmatpush1.msra.mxu0 %v686
          %705 = vmatprep.subr.mxu0 0.0
          %706 = vmatpush1.msra.mxu0 %v685
          %707 = vmatprep.subr.mxu0 0.0
          %708 = vmatpush1.msra.mxu0 %v684
          %709 = vmatprep.subr.mxu0 0.0
          %710 = vmatpush1.msra.mxu0 %v683
          %711 = vmatprep.subr.mxu0 0.0
          %712 = vmatpush1.msra.mxu0 %v682
          %713 = vmatprep.subr.mxu0 0.0
          %714 = vmatpush1.msra.mxu0 %v681
          %715 = vmatprep.subr.mxu0 0.0
          %716 = vmatpush1.msra.mxu0 %v680
          %717 = vmatprep.subr.mxu0 0.0
          %718 = vmatpush1.msra.mxu0 %v679
          %719 = vmatprep.subr.mxu0 0.0
          %720 = vmatpush1.msra.mxu0 %v678
          %721 = vmatprep.subr.mxu0 0.0
          %722 = vmatpush1.msra.mxu0 %v677
          %723 = vmatprep.subr.mxu0 0.0
          %724 = vmatpush1.msra.mxu0 %v676
          %725 = vmatprep.subr.mxu0 0.0
          %726 = vmatpush1.msra.mxu0 %v675
          %727 = vmatprep.subr.mxu0 0.0
          %728 = vmatpush1.msra.mxu0 %v674
          %729 = vmatprep.subr.mxu0 0.0
          %730 = vmatpush2.msra.mxu0 0.0
          %731 = vmatprep.subr.mxu0 0.0
          %732 = vmatpush2.msra.mxu0 0.0
          %733 = vmatprep.subr.mxu0 0.0
          %734 = vmatpush2.msra.mxu0 0.0
          %735 = vmatprep.subr.mxu0 0.0
          %736 = vmatpush2.msra.mxu0 0.0
          %737 = vmatprep.subr.mxu0 0.0
          %738 = vmatpush2.msra.mxu0 0.0
          %739 = vmatprep.subr.mxu0 0.0
          %740 = vmatpush2.msra.mxu0 0.0
          %741 = vmatprep.subr.mxu0 0.0
          %742 = vmatpush2.msra.mxu0 0.0
          %743 = vmatprep.subr.mxu0 0.0
          %744 = vmatpush2.msra.mxu0 0.0
          %745 = vmatprep.subr.mxu0 0.0
          %746 = vmatpush2.msra.mxu0 0.0
          %747 = vmatprep.subr.mxu0 0.0
          %748 = vmatpush2.msra.mxu0 0.0
          %749 = vmatprep.subr.mxu0 0.0
          %750 = vmatpush2.msra.mxu0 0.0
          %751 = vmatprep.subr.mxu0 0.0
          %752 = vmatpush2.msra.mxu0 0.0
          %753 = vmatprep.subr.mxu0 0.0
          %754 = vmatpush2.msra.mxu0 0.0
          %755 = vmatprep.subr.mxu0 0.0
          %756 = vmatpush2.msra.mxu0 0.0
          %757 = vmatprep.subr.mxu0 0.0
          %758 = vmatpush2.msra.mxu0 0.0
          %759 = vmatprep.subr.mxu0 0.0
          %760 = vmatpush2.msra.mxu0 0.0
          %761 = vmatprep.mubr.f32.mxu0 0.0
          %762 = vmatmul.mubr.f32.gmra.mxu0 %v673
          %v763 = vpop.f32.mrf.mxu0
          %v764 = vadd.f32 %v695, %v763
          %v765 = vpop.f32.mrf.mxu0
          %766 = vdwg.mxu0
          %v767 = vmul.f32 %v764, 0.17677669
          %769 = vrot.lane.b32.xlu0 %v767, 96
          %v770 = vpop.permute.xlu0 %769
          %772 = vrot.lane.b32.xlu0 %v767, 64
          %v773 = vpop.permute.xlu0 %772
          %775 = vrot.lane.b32.xlu0 %v767, 32
          %v776 = vpop.permute.xlu0 %775
          %v778 = vcombine.low %v767, %v773
          %v779 = vcombine.high %v767, %v773
          %v781 = vunpack.c.l.s4 1983009808
          %v782 = vunpack.c.0.s8 %v781
          %v783 = vlaneseq
          %v784 = vshrl.u32 %v783, 7
          %v785 = vsub.s32 %v782, %v784
          %v786 = vrot.slane %v778, %v785
          %v788 = vunpack.c.l.s4 1983009808
          %v789 = vunpack.c.0.s8 %v788
          %v790 = vlaneseq
          %v791 = vshrl.u32 %v790, 7
          %v792 = vsub.s32 %v789, %v791
          %v793 = vrot.slane %v779, %v792
          %v794 = vcombine.low %v770, %v776
          %v795 = vcombine.high %v770, %v776
          %v797 = vunpack.c.l.s4 1983009808
          %v798 = vunpack.c.0.s8 %v797
          %v799 = vlaneseq
          %v800 = vshrl.u32 %v799, 7
          %v801 = vsub.s32 %v798, %v800
          %v802 = vrot.slane %v794, %v801
          %v804 = vunpack.c.l.s4 1983009808
          %v805 = vunpack.c.0.s8 %v804
          %v806 = vlaneseq
          %v807 = vshrl.u32 %v806, 7
          %v808 = vsub.s32 %v805, %v807
          %v809 = vrot.slane %v795, %v808
          %v810 = vcombine.low %v786, %v802
          %v811 = vcombine.high %v786, %v802
          %v813 = vunpack.c.l.s4 1934713408
          %v814 = vunpack.c.0.s8 %v813
          %v815 = vlaneseq
          %v816 = vshrl.u32 %v815, 7
          %v817 = vsub.s32 %v814, %v816
          %v818 = vrot.slane %v810, %v817
          %v820 = vunpack.c.l.s4 1934713408
          %v821 = vunpack.c.0.s8 %v820
          %v822 = vlaneseq
          %v823 = vshrl.u32 %v822, 7
          %v824 = vsub.s32 %v821, %v823
          %v825 = vrot.slane %v811, %v824
          %v826 = vcombine.low %v793, %v809
          %v827 = vcombine.high %v793, %v809
          %v829 = vunpack.c.l.s4 1934713408
          %v830 = vunpack.c.0.s8 %v829
          %v831 = vlaneseq
          %v832 = vshrl.u32 %v831, 7
          %v833 = vsub.s32 %v830, %v832
          %v834 = vrot.slane %v826, %v833
          %v836 = vunpack.c.l.s4 1934713408
          %v837 = vunpack.c.0.s8 %v836
          %v838 = vlaneseq
          %v839 = vshrl.u32 %v838, 7
          %v840 = vsub.s32 %v837, %v839
          %v841 = vrot.slane %v827, %v840
          %v842 = vcombine.high %v818, 0.0
          %v843 = vcombine.high %v825, 0.0
          %v844 = vcombine.high %v834, 0.0
          %v845 = vcombine.high %v841, 0.0
          %v846 = vcombine.low %v818, %v825
          %v848 = vunpack.c.l.s4 1983009808
          %v849 = vunpack.c.0.s8 %v848
          %v850 = vlaneseq
          %v851 = vshrl.u32 %v850, 7
          %v852 = vsub.s32 %v849, %v851
          %v853 = vrot.slane %v846, %v852
          %v854 = vcombine.low %v842, %v843
          %v856 = vunpack.c.l.s4 1983009808
          %v857 = vunpack.c.0.s8 %v856
          %v858 = vlaneseq
          %v859 = vshrl.u32 %v858, 7
          %v860 = vsub.s32 %v857, %v859
          %v861 = vrot.slane %v854, %v860
          %v862 = vcombine.low %v834, %v841
          %v864 = vunpack.c.l.s4 1983009808
          %v865 = vunpack.c.0.s8 %v864
          %v866 = vlaneseq
          %v867 = vshrl.u32 %v866, 7
          %v868 = vsub.s32 %v865, %v867
          %v869 = vrot.slane %v862, %v868
          %v870 = vcombine.low %v844, %v845
          %v872 = vunpack.c.l.s4 1983009808
          %v873 = vunpack.c.0.s8 %v872
          %v874 = vlaneseq
          %v875 = vshrl.u32 %v874, 7
          %v876 = vsub.s32 %v873, %v875
          %v877 = vrot.slane %v870, %v876
          %v878 = vcombine.low %v853, %v861
          %v879 = vcombine.high %v853, %v861
          %v881 = vunpack.c.l.s4 1934713408
          %v882 = vunpack.c.0.s8 %v881
          %v883 = vlaneseq
          %v884 = vshrl.u32 %v883, 7
          %v885 = vsub.s32 %v882, %v884
          %v886 = vrot.slane %v878, %v885
          %v888 = vunpack.c.l.s4 1934713408
          %v889 = vunpack.c.0.s8 %v888
          %v890 = vlaneseq
          %v891 = vshrl.u32 %v890, 7
          %v892 = vsub.s32 %v889, %v891
          %v893 = vrot.slane %v879, %v892
          %v894 = vcombine.low %v869, %v877
          %v895 = vcombine.high %v869, %v877
          %v897 = vunpack.c.l.s4 1934713408
          %v898 = vunpack.c.0.s8 %v897
          %v899 = vlaneseq
          %v900 = vshrl.u32 %v899, 7
          %v901 = vsub.s32 %v898, %v900
          %v902 = vrot.slane %v894, %v901
          %v904 = vunpack.c.l.s4 1934713408
          %v905 = vunpack.c.0.s8 %v904
          %v906 = vlaneseq
          %v907 = vshrl.u32 %v906, 7
          %v908 = vsub.s32 %v905, %v907
          %v909 = vrot.slane %v895, %v908
          %v910 = vcombine.low %v886, %v902
          %v911 = vcombine.high %v886, %v902
          %v912 = vcombine.low %v893, %v909
          %v913 = vcombine.high %v893, %v909
          %vm914 = vcmask 261120
          %915 = vst.msk [vmem:[#allocation2] sm:$0xff] %vm914, %v910
          %916 = vst.msk [vmem:[#allocation2 + $0x8] sm:$0xff] %vm914, %v911
          %917 = vst.msk [vmem:[#allocation2 + $0x10] sm:$0xff] %vm914, %v912
          %918 = vst.msk [vmem:[#allocation2 + $0x18] sm:$0xff] %vm914, %v913
          %vm919 = vcmask 7168
          %920 = vst.msk [vmem:[#allocation3] sm:$0xff] %vm919, -inf
          %921 = vst.msk [vmem:[#allocation3 + $0x8] sm:$0xff] %vm919, -inf
          %922 = vst.msk [vmem:[#allocation3 + $0x10] sm:$0xff] %vm919, -inf
          %923 = vst.msk [vmem:[#allocation3 + $0x18] sm:$0xff] %vm919, -inf
          %924 = vst.msk [vmem:[#allocation4] sm:$0xff] %vm919, 0.0
          %925 = vst.msk [vmem:[#allocation4 + $0x8] sm:$0xff] %vm919, 0.0
          %926 = vst.msk [vmem:[#allocation4 + $0x10] sm:$0xff] %vm919, 0.0
          %927 = vst.msk [vmem:[#allocation4 + $0x18] sm:$0xff] %vm919, 0.0
          %928 = vst.msk [vmem:[#allocation5] sm:$0xff] %vm914, 0.0
          %929 = vst.msk [vmem:[#allocation5 + $0x8] sm:$0xff] %vm914, 0.0
          %930 = vst.msk [vmem:[#allocation5 + $0x10] sm:$0xff] %vm914, 0.0
          %931 = vst.msk [vmem:[#allocation5 + $0x18] sm:$0xff] %vm914, 0.0
        $region112: #{tpu_custom_call.1} parent=79 // pred_fallthru
          _
        %v932 = vld [vmem:[%s587] sm:$0xff]
        %934 = vrot.lane.b32.xlu0 %v932, 96
        %v935 = vpop.permute.xlu0 %934
        %937 = vrot.lane.b32.xlu0 %v932, 64
        %v938 = vpop.permute.xlu0 %937
        %940 = vrot.lane.b32.xlu0 %v932, 32
        %v941 = vpop.permute.xlu0 %940
        %v943 = vcombine.low %v932, %v938
        %v944 = vcombine.high %v932, %v938
        %v946 = vunpack.c.l.s4 1983009808
        %v947 = vunpack.c.0.s8 %v946
        %v948 = vlaneseq
        %v949 = vshrl.u32 %v948, 7
        %v950 = vsub.s32 %v947, %v949
        %v951 = vrot.slane %v943, %v950
        %v953 = vunpack.c.l.s4 1983009808
        %v954 = vunpack.c.0.s8 %v953
        %v955 = vlaneseq
        %v956 = vshrl.u32 %v955, 7
        %v957 = vsub.s32 %v954, %v956
        %v958 = vrot.slane %v944, %v957
        %v959 = vcombine.low %v935, %v941
        %v960 = vcombine.high %v935, %v941
        %v962 = vunpack.c.l.s4 1983009808
        %v963 = vunpack.c.0.s8 %v962
        %v964 = vlaneseq
        %v965 = vshrl.u32 %v964, 7
        %v966 = vsub.s32 %v963, %v965
        %v967 = vrot.slane %v959, %v966
        %v969 = vunpack.c.l.s4 1983009808
        %v970 = vunpack.c.0.s8 %v969
        %v971 = vlaneseq
        %v972 = vshrl.u32 %v971, 7
        %v973 = vsub.s32 %v970, %v972
        %v974 = vrot.slane %v960, %v973
        %v975 = vcombine.low %v951, %v967
        %v976 = vcombine.high %v951, %v967
        %v978 = vunpack.c.l.s4 1934713408
        %v979 = vunpack.c.0.s8 %v978
        %v980 = vlaneseq
        %v981 = vshrl.u32 %v980, 7
        %v982 = vsub.s32 %v979, %v981
        %v983 = vrot.slane %v975, %v982
        %v985 = vunpack.c.l.s4 1934713408
        %v986 = vunpack.c.0.s8 %v985
        %v987 = vlaneseq
        %v988 = vshrl.u32 %v987, 7
        %v989 = vsub.s32 %v986, %v988
        %v990 = vrot.slane %v976, %v989
        %v991 = vcombine.low %v958, %v974
        %v992 = vcombine.high %v958, %v974
        %v994 = vunpack.c.l.s4 1934713408
        %v995 = vunpack.c.0.s8 %v994
        %v996 = vlaneseq
        %v997 = vshrl.u32 %v996, 7
        %v998 = vsub.s32 %v995, %v997
        %v999 = vrot.slane %v991, %v998
        %v1001 = vunpack.c.l.s4 1934713408
        %v1002 = vunpack.c.0.s8 %v1001
        %v1003 = vlaneseq
        %v1004 = vshrl.u32 %v1003, 7
        %v1005 = vsub.s32 %v1002, %v1004
        %v1006 = vrot.slane %v992, %v1005
        %v1007 = vcombine.high %v983, 0.0
        %v1008 = vcombine.high %v990, 0.0
        %v1009 = vcombine.high %v999, 0.0
        %v1010 = vcombine.high %v1006, 0.0
        %v1011 = vcombine.low %v983, %v990
        %v1013 = vunpack.c.l.s4 1983009808
        %v1014 = vunpack.c.0.s8 %v1013
        %v1015 = vlaneseq
        %v1016 = vshrl.u32 %v1015, 7
        %v1017 = vsub.s32 %v1014, %v1016
        %v1018 = vrot.slane %v1011, %v1017
        %v1019 = vcombine.low %v1007, %v1008
        %v1021 = vunpack.c.l.s4 1983009808
        %v1022 = vunpack.c.0.s8 %v1021
        %v1023 = vlaneseq
        %v1024 = vshrl.u32 %v1023, 7
        %v1025 = vsub.s32 %v1022, %v1024
        %v1026 = vrot.slane %v1019, %v1025
        %v1027 = vcombine.low %v999, %v1006
        %v1029 = vunpack.c.l.s4 1983009808
        %v1030 = vunpack.c.0.s8 %v1029
        %v1031 = vlaneseq
        %v1032 = vshrl.u32 %v1031, 7
        %v1033 = vsub.s32 %v1030, %v1032
        %v1034 = vrot.slane %v1027, %v1033
        %v1035 = vcombine.low %v1009, %v1010
        %v1037 = vunpack.c.l.s4 1983009808
        %v1038 = vunpack.c.0.s8 %v1037
        %v1039 = vlaneseq
        %v1040 = vshrl.u32 %v1039, 7
        %v1041 = vsub.s32 %v1038, %v1040
        %v1042 = vrot.slane %v1035, %v1041
        %v1043 = vcombine.low %v1018, %v1026
        %v1044 = vcombine.high %v1018, %v1026
        %v1046 = vunpack.c.l.s4 1934713408
        %v1047 = vunpack.c.0.s8 %v1046
        %v1048 = vlaneseq
        %v1049 = vshrl.u32 %v1048, 7
        %v1050 = vsub.s32 %v1047, %v1049
        %v1051 = vrot.slane %v1043, %v1050
        %v1053 = vunpack.c.l.s4 1934713408
        %v1054 = vunpack.c.0.s8 %v1053
        %v1055 = vlaneseq
        %v1056 = vshrl.u32 %v1055, 7
        %v1057 = vsub.s32 %v1054, %v1056
        %v1058 = vrot.slane %v1044, %v1057
        %v1059 = vcombine.low %v1034, %v1042
        %v1060 = vcombine.high %v1034, %v1042
        %v1062 = vunpack.c.l.s4 1934713408
        %v1063 = vunpack.c.0.s8 %v1062
        %v1064 = vlaneseq
        %v1065 = vshrl.u32 %v1064, 7
        %v1066 = vsub.s32 %v1063, %v1065
        %v1067 = vrot.slane %v1059, %v1066
        %v1069 = vunpack.c.l.s4 1934713408
        %v1070 = vunpack.c.0.s8 %v1069
        %v1071 = vlaneseq
        %v1072 = vshrl.u32 %v1071, 7
        %v1073 = vsub.s32 %v1070, %v1072
        %v1074 = vrot.slane %v1060, %v1073
        %v1075 = vcombine.low %v1051, %v1067
        %v1076 = vcombine.high %v1051, %v1067
        %v1077 = vcombine.low %v1058, %v1074
        %v1078 = vcombine.high %v1058, %v1074
        %v1079 = vld [vmem:[%s596] sm:$0xff]
        %1081 = vrot.lane.b32.xlu0 %v1079, 96
        %v1082 = vpop.permute.xlu0 %1081
        %1084 = vrot.lane.b32.xlu0 %v1079, 64
        %v1085 = vpop.permute.xlu0 %1084
        %1087 = vrot.lane.b32.xlu0 %v1079, 32
        %v1088 = vpop.permute.xlu0 %1087
        %v1090 = vcombine.low %v1079, %v1085
        %v1091 = vcombine.high %v1079, %v1085
        %v1093 = vunpack.c.l.s4 1983009808
        %v1094 = vunpack.c.0.s8 %v1093
        %v1095 = vlaneseq
        %v1096 = vshrl.u32 %v1095, 7
        %v1097 = vsub.s32 %v1094, %v1096
        %v1098 = vrot.slane %v1090, %v1097
        %v1100 = vunpack.c.l.s4 1983009808
        %v1101 = vunpack.c.0.s8 %v1100
        %v1102 = vlaneseq
        %v1103 = vshrl.u32 %v1102, 7
        %v1104 = vsub.s32 %v1101, %v1103
        %v1105 = vrot.slane %v1091, %v1104
        %v1106 = vcombine.low %v1082, %v1088
        %v1107 = vcombine.high %v1082, %v1088
        %v1109 = vunpack.c.l.s4 1983009808
        %v1110 = vunpack.c.0.s8 %v1109
        %v1111 = vlaneseq
        %v1112 = vshrl.u32 %v1111, 7
        %v1113 = vsub.s32 %v1110, %v1112
        %v1114 = vrot.slane %v1106, %v1113
        %v1116 = vunpack.c.l.s4 1983009808
        %v1117 = vunpack.c.0.s8 %v1116
        %v1118 = vlaneseq
        %v1119 = vshrl.u32 %v1118, 7
        %v1120 = vsub.s32 %v1117, %v1119
        %v1121 = vrot.slane %v1107, %v1120
        %v1122 = vcombine.low %v1098, %v1114
        %v1123 = vcombine.high %v1098, %v1114
        %v1125 = vunpack.c.l.s4 1934713408
        %v1126 = vunpack.c.0.s8 %v1125
        %v1127 = vlaneseq
        %v1128 = vshrl.u32 %v1127, 7
        %v1129 = vsub.s32 %v1126, %v1128
        %v1130 = vrot.slane %v1122, %v1129
        %v1132 = vunpack.c.l.s4 1934713408
        %v1133 = vunpack.c.0.s8 %v1132
        %v1134 = vlaneseq
        %v1135 = vshrl.u32 %v1134, 7
        %v1136 = vsub.s32 %v1133, %v1135
        %v1137 = vrot.slane %v1123, %v1136
        %v1138 = vcombine.low %v1105, %v1121
        %v1139 = vcombine.high %v1105, %v1121
        %v1141 = vunpack.c.l.s4 1934713408
        %v1142 = vunpack.c.0.s8 %v1141
        %v1143 = vlaneseq
        %v1144 = vshrl.u32 %v1143, 7
        %v1145 = vsub.s32 %v1142, %v1144
        %v1146 = vrot.slane %v1138, %v1145
        %v1148 = vunpack.c.l.s4 1934713408
        %v1149 = vunpack.c.0.s8 %v1148
        %v1150 = vlaneseq
        %v1151 = vshrl.u32 %v1150, 7
        %v1152 = vsub.s32 %v1149, %v1151
        %v1153 = vrot.slane %v1139, %v1152
        %v1154 = vcombine.high %v1130, 0.0
        %v1155 = vcombine.high %v1137, 0.0
        %v1156 = vcombine.high %v1146, 0.0
        %v1157 = vcombine.high %v1153, 0.0
        %v1158 = vcombine.low %v1130, %v1137
        %v1160 = vunpack.c.l.s4 1983009808
        %v1161 = vunpack.c.0.s8 %v1160
        %v1162 = vlaneseq
        %v1163 = vshrl.u32 %v1162, 7
        %v1164 = vsub.s32 %v1161, %v1163
        %v1165 = vrot.slane %v1158, %v1164
        %v1166 = vcombine.low %v1154, %v1155
        %v1168 = vunpack.c.l.s4 1983009808
        %v1169 = vunpack.c.0.s8 %v1168
        %v1170 = vlaneseq
        %v1171 = vshrl.u32 %v1170, 7
        %v1172 = vsub.s32 %v1169, %v1171
        %v1173 = vrot.slane %v1166, %v1172
        %v1174 = vcombine.low %v1146, %v1153
        %v1176 = vunpack.c.l.s4 1983009808
        %v1177 = vunpack.c.0.s8 %v1176
        %v1178 = vlaneseq
        %v1179 = vshrl.u32 %v1178, 7
        %v1180 = vsub.s32 %v1177, %v1179
        %v1181 = vrot.slane %v1174, %v1180
        %v1182 = vcombine.low %v1156, %v1157
        %v1184 = vunpack.c.l.s4 1983009808
        %v1185 = vunpack.c.0.s8 %v1184
        %v1186 = vlaneseq
        %v1187 = vshrl.u32 %v1186, 7
        %v1188 = vsub.s32 %v1185, %v1187
        %v1189 = vrot.slane %v1182, %v1188
        %v1190 = vcombine.low %v1165, %v1173
        %v1191 = vcombine.high %v1165, %v1173
        %v1193 = vunpack.c.l.s4 1934713408
        %v1194 = vunpack.c.0.s8 %v1193
        %v1195 = vlaneseq
        %v1196 = vshrl.u32 %v1195, 7
        %v1197 = vsub.s32 %v1194, %v1196
        %v1198 = vrot.slane %v1190, %v1197
        %v1200 = vunpack.c.l.s4 1934713408
        %v1201 = vunpack.c.0.s8 %v1200
        %v1202 = vlaneseq
        %v1203 = vshrl.u32 %v1202, 7
        %v1204 = vsub.s32 %v1201, %v1203
        %v1205 = vrot.slane %v1191, %v1204
        %v1206 = vcombine.low %v1181, %v1189
        %v1207 = vcombine.high %v1181, %v1189
        %v1209 = vunpack.c.l.s4 1934713408
        %v1210 = vunpack.c.0.s8 %v1209
        %v1211 = vlaneseq
        %v1212 = vshrl.u32 %v1211, 7
        %v1213 = vsub.s32 %v1210, %v1212
        %v1214 = vrot.slane %v1206, %v1213
        %v1216 = vunpack.c.l.s4 1934713408
        %v1217 = vunpack.c.0.s8 %v1216
        %v1218 = vlaneseq
        %v1219 = vshrl.u32 %v1218, 7
        %v1220 = vsub.s32 %v1217, %v1219
        %v1221 = vrot.slane %v1207, %v1220
        %v1222 = vcombine.low %v1198, %v1214
        %v1223 = vcombine.high %v1198, %v1214
        %v1224 = vcombine.low %v1205, %v1221
        %v1225 = vcombine.high %v1205, %v1221
        %v1226 = vld [vmem:[#allocation2] sm:$0xff]
        %v1227 = vld [vmem:[#allocation2 + $0x8] sm:$0xff]
        %v1228 = vld [vmem:[#allocation2 + $0x10] sm:$0xff]
        %v1229 = vld [vmem:[#allocation2 + $0x18] sm:$0xff]
        %vm1230 = vcmask 261120
        %v1232 = vsel %vm1230, %v1226, 0
        %v1235 = vsel %vm1230, %v1075, 0
        %1237 = vmatprep.subr.mxu0 0.0
        %1238 = vmatpush1.xpose.msra.mxu0 0.0
        %1239 = vmatprep.subr.mxu0 0.0
        %1240 = vmatpush1.xpose.msra.mxu0 0.0
        %1241 = vmatprep.subr.mxu0 0.0
        %1242 = vmatpush1.xpose.msra.mxu0 0.0
        %1243 = vmatprep.subr.mxu0 0.0
        %1244 = vmatpush1.xpose.msra.mxu0 0.0
        %1245 = vmatprep.subr.mxu0 0.0
        %1246 = vmatpush1.xpose.msra.mxu0 0.0
        %1247 = vmatprep.subr.mxu0 0.0
        %1248 = vmatpush1.xpose.msra.mxu0 0.0
        %1249 = vmatprep.subr.mxu0 0.0
        %1250 = vmatpush1.xpose.msra.mxu0 0.0
        %1251 = vmatprep.subr.mxu0 0.0
        %1252 = vmatpush1.xpose.msra.mxu0 0.0
        %1253 = vmatprep.subr.mxu0 0.0
        %1254 = vmatpush1.xpose.msra.mxu0 0.0
        %1255 = vmatprep.subr.mxu0 0.0
        %1256 = vmatpush1.xpose.msra.mxu0 0.0
        %1257 = vmatprep.subr.mxu0 0.0
        %1258 = vmatpush1.xpose.msra.mxu0 0.0
        %1259 = vmatprep.subr.mxu0 0.0
        %1260 = vmatpush1.xpose.msra.mxu0 0.0
        %1261 = vmatprep.subr.mxu0 0.0
        %1262 = vmatpush1.xpose.msra.mxu0 0.0
        %1263 = vmatprep.subr.mxu0 0.0
        %1264 = vmatpush1.xpose.msra.mxu0 0.0
        %1265 = vmatprep.subr.mxu0 0.0
        %1266 = vmatpush1.xpose.msra.mxu0 0.0
        %1267 = vmatprep.subr.mxu0 0.0
        %1268 = vmatpush1.xpose.msra.mxu0 %v1235
        %1269 = vmatprep.subr.mxu0 0.0
        %1270 = vmatpush2.xpose.msra.mxu0 0.0
        %1271 = vmatprep.subr.mxu0 0.0
        %1272 = vmatpush2.xpose.msra.mxu0 0.0
        %1273 = vmatprep.subr.mxu0 0.0
        %1274 = vmatpush2.xpose.msra.mxu0 0.0
        %1275 = vmatprep.subr.mxu0 0.0
        %1276 = vmatpush2.xpose.msra.mxu0 0.0
        %1277 = vmatprep.subr.mxu0 0.0
        %1278 = vmatpush2.xpose.msra.mxu0 0.0
        %1279 = vmatprep.subr.mxu0 0.0
        %1280 = vmatpush2.xpose.msra.mxu0 0.0
        %1281 = vmatprep.subr.mxu0 0.0
        %1282 = vmatpush2.xpose.msra.mxu0 0.0
        %1283 = vmatprep.subr.mxu0 0.0
        %1284 = vmatpush2.xpose.msra.mxu0 0.0
        %1285 = vmatprep.subr.mxu0 0.0
        %1286 = vmatpush2.xpose.msra.mxu0 0.0
        %1287 = vmatprep.subr.mxu0 0.0
        %1288 = vmatpush2.xpose.msra.mxu0 0.0
        %1289 = vmatprep.subr.mxu0 0.0
        %1290 = vmatpush2.xpose.msra.mxu0 0.0
        %1291 = vmatprep.subr.mxu0 0.0
        %1292 = vmatpush2.xpose.msra.mxu0 0.0
        %1293 = vmatprep.subr.mxu0 0.0
        %1294 = vmatpush2.xpose.msra.mxu0 0.0
        %1295 = vmatprep.subr.mxu0 0.0
        %1296 = vmatpush2.xpose.msra.mxu0 0.0
        %1297 = vmatprep.subr.mxu0 0.0
        %1298 = vmatpush2.xpose.msra.mxu0 0.0
        %1299 = vmatprep.subr.mxu0 0.0
        %1300 = vmatpush2.xpose.msra.mxu0 0.0
        %1301 = vmatprep.mubr.f32.mxu0 0.0
        %1302 = vmatmul.mubr.f32.gmra.mxu0 %v1232
        %v1303 = vpop.f32.mrf.mxu0
        %v1304 = vadd.f32 0.0, %v1303
        %v1305 = vpop.f32.mrf.mxu0
        %1306 = vdwg.mxu0
        %v1308 = vsel %vm1230, %v1227, 0
        %v1311 = vsel %vm1230, %v1076, 0
        %1313 = vmatprep.subr.mxu0 0.0
        %1314 = vmatpush1.xpose.msra.mxu0 0.0
        %1315 = vmatprep.subr.mxu0 0.0
        %1316 = vmatpush1.xpose.msra.mxu0 0.0
        %1317 = vmatprep.subr.mxu0 0.0
        %1318 = vmatpush1.xpose.msra.mxu0 0.0
        %1319 = vmatprep.subr.mxu0 0.0
        %1320 = vmatpush1.xpose.msra.mxu0 0.0
        %1321 = vmatprep.subr.mxu0 0.0
        %1322 = vmatpush1.xpose.msra.mxu0 0.0
        %1323 = vmatprep.subr.mxu0 0.0
        %1324 = vmatpush1.xpose.msra.mxu0 0.0
        %1325 = vmatprep.subr.mxu0 0.0
        %1326 = vmatpush1.xpose.msra.mxu0 0.0
        %1327 = vmatprep.subr.mxu0 0.0
        %1328 = vmatpush1.xpose.msra.mxu0 0.0
        %1329 = vmatprep.subr.mxu0 0.0
        %1330 = vmatpush1.xpose.msra.mxu0 0.0
        %1331 = vmatprep.subr.mxu0 0.0
        %1332 = vmatpush1.xpose.msra.mxu0 0.0
        %1333 = vmatprep.subr.mxu0 0.0
        %1334 = vmatpush1.xpose.msra.mxu0 0.0
        %1335 = vmatprep.subr.mxu0 0.0
        %1336 = vmatpush1.xpose.msra.mxu0 0.0
        %1337 = vmatprep.subr.mxu0 0.0
        %1338 = vmatpush1.xpose.msra.mxu0 0.0
        %1339 = vmatprep.subr.mxu0 0.0
        %1340 = vmatpush1.xpose.msra.mxu0 0.0
        %1341 = vmatprep.subr.mxu0 0.0
        %1342 = vmatpush1.xpose.msra.mxu0 0.0
        %1343 = vmatprep.subr.mxu0 0.0
        %1344 = vmatpush1.xpose.msra.mxu0 %v1311
        %1345 = vmatprep.subr.mxu0 0.0
        %1346 = vmatpush2.xpose.msra.mxu0 0.0
        %1347 = vmatprep.subr.mxu0 0.0
        %1348 = vmatpush2.xpose.msra.mxu0 0.0
        %1349 = vmatprep.subr.mxu0 0.0
        %1350 = vmatpush2.xpose.msra.mxu0 0.0
        %1351 = vmatprep.subr.mxu0 0.0
        %1352 = vmatpush2.xpose.msra.mxu0 0.0
        %1353 = vmatprep.subr.mxu0 0.0
        %1354 = vmatpush2.xpose.msra.mxu0 0.0
        %1355 = vmatprep.subr.mxu0 0.0
        %1356 = vmatpush2.xpose.msra.mxu0 0.0
        %1357 = vmatprep.subr.mxu0 0.0
        %1358 = vmatpush2.xpose.msra.mxu0 0.0
        %1359 = vmatprep.subr.mxu0 0.0
        %1360 = vmatpush2.xpose.msra.mxu0 0.0
        %1361 = vmatprep.subr.mxu0 0.0
        %1362 = vmatpush2.xpose.msra.mxu0 0.0
        %1363 = vmatprep.subr.mxu0 0.0
        %1364 = vmatpush2.xpose.msra.mxu0 0.0
        %1365 = vmatprep.subr.mxu0 0.0
        %1366 = vmatpush2.xpose.msra.mxu0 0.0
        %1367 = vmatprep.subr.mxu0 0.0
        %1368 = vmatpush2.xpose.msra.mxu0 0.0
        %1369 = vmatprep.subr.mxu0 0.0
        %1370 = vmatpush2.xpose.msra.mxu0 0.0
        %1371 = vmatprep.subr.mxu0 0.0
        %1372 = vmatpush2.xpose.msra.mxu0 0.0
        %1373 = vmatprep.subr.mxu0 0.0
        %1374 = vmatpush2.xpose.msra.mxu0 0.0
        %1375 = vmatprep.subr.mxu0 0.0
        %1376 = vmatpush2.xpose.msra.mxu0 0.0
        %1377 = vmatprep.mubr.f32.mxu0 0.0
        %1378 = vmatmul.mubr.f32.gmra.mxu0 %v1308
        %v1379 = vpop.f32.mrf.mxu0
        %v1380 = vadd.f32 0.0, %v1379
        %v1381 = vpop.f32.mrf.mxu0
        %1382 = vdwg.mxu0
        %v1384 = vsel %vm1230, %v1228, 0
        %v1387 = vsel %vm1230, %v1077, 0
        %1389 = vmatprep.subr.mxu0 0.0
        %1390 = vmatpush1.xpose.msra.mxu0 0.0
        %1391 = vmatprep.subr.mxu0 0.0
        %1392 = vmatpush1.xpose.msra.mxu0 0.0
        %1393 = vmatprep.subr.mxu0 0.0
        %1394 = vmatpush1.xpose.msra.mxu0 0.0
        %1395 = vmatprep.subr.mxu0 0.0
        %1396 = vmatpush1.xpose.msra.mxu0 0.0
        %1397 = vmatprep.subr.mxu0 0.0
        %1398 = vmatpush1.xpose.msra.mxu0 0.0
        %1399 = vmatprep.subr.mxu0 0.0
        %1400 = vmatpush1.xpose.msra.mxu0 0.0
        %1401 = vmatprep.subr.mxu0 0.0
        %1402 = vmatpush1.xpose.msra.mxu0 0.0
        %1403 = vmatprep.subr.mxu0 0.0
        %1404 = vmatpush1.xpose.msra.mxu0 0.0
        %1405 = vmatprep.subr.mxu0 0.0
        %1406 = vmatpush1.xpose.msra.mxu0 0.0
        %1407 = vmatprep.subr.mxu0 0.0
        %1408 = vmatpush1.xpose.msra.mxu0 0.0
        %1409 = vmatprep.subr.mxu0 0.0
        %1410 = vmatpush1.xpose.msra.mxu0 0.0
        %1411 = vmatprep.subr.mxu0 0.0
        %1412 = vmatpush1.xpose.msra.mxu0 0.0
        %1413 = vmatprep.subr.mxu0 0.0
        %1414 = vmatpush1.xpose.msra.mxu0 0.0
        %1415 = vmatprep.subr.mxu0 0.0
        %1416 = vmatpush1.xpose.msra.mxu0 0.0
        %1417 = vmatprep.subr.mxu0 0.0
        %1418 = vmatpush1.xpose.msra.mxu0 0.0
        %1419 = vmatprep.subr.mxu0 0.0
        %1420 = vmatpush1.xpose.msra.mxu0 %v1387
        %1421 = vmatprep.subr.mxu0 0.0
        %1422 = vmatpush2.xpose.msra.mxu0 0.0
        %1423 = vmatprep.subr.mxu0 0.0
        %1424 = vmatpush2.xpose.msra.mxu0 0.0
        %1425 = vmatprep.subr.mxu0 0.0
        %1426 = vmatpush2.xpose.msra.mxu0 0.0
        %1427 = vmatprep.subr.mxu0 0.0
        %1428 = vmatpush2.xpose.msra.mxu0 0.0
        %1429 = vmatprep.subr.mxu0 0.0
        %1430 = vmatpush2.xpose.msra.mxu0 0.0
        %1431 = vmatprep.subr.mxu0 0.0
        %1432 = vmatpush2.xpose.msra.mxu0 0.0
        %1433 = vmatprep.subr.mxu0 0.0
        %1434 = vmatpush2.xpose.msra.mxu0 0.0
        %1435 = vmatprep.subr.mxu0 0.0
        %1436 = vmatpush2.xpose.msra.mxu0 0.0
        %1437 = vmatprep.subr.mxu0 0.0
        %1438 = vmatpush2.xpose.msra.mxu0 0.0
        %1439 = vmatprep.subr.mxu0 0.0
        %1440 = vmatpush2.xpose.msra.mxu0 0.0
        %1441 = vmatprep.subr.mxu0 0.0
        %1442 = vmatpush2.xpose.msra.mxu0 0.0
        %1443 = vmatprep.subr.mxu0 0.0
        %1444 = vmatpush2.xpose.msra.mxu0 0.0
        %1445 = vmatprep.subr.mxu0 0.0
        %1446 = vmatpush2.xpose.msra.mxu0 0.0
        %1447 = vmatprep.subr.mxu0 0.0
        %1448 = vmatpush2.xpose.msra.mxu0 0.0
        %1449 = vmatprep.subr.mxu0 0.0
        %1450 = vmatpush2.xpose.msra.mxu0 0.0
        %1451 = vmatprep.subr.mxu0 0.0
        %1452 = vmatpush2.xpose.msra.mxu0 0.0
        %1453 = vmatprep.mubr.f32.mxu0 0.0
        %1454 = vmatmul.mubr.f32.gmra.mxu0 %v1384
        %v1455 = vpop.f32.mrf.mxu0
        %v1456 = vadd.f32 0.0, %v1455
        %v1457 = vpop.f32.mrf.mxu0
        %1458 = vdwg.mxu0
        %v1460 = vsel %vm1230, %v1229, 0
        %v1463 = vsel %vm1230, %v1078, 0
        %1465 = vmatprep.subr.mxu0 0.0
        %1466 = vmatpush1.xpose.msra.mxu0 0.0
        %1467 = vmatprep.subr.mxu0 0.0
        %1468 = vmatpush1.xpose.msra.mxu0 0.0
        %1469 = vmatprep.subr.mxu0 0.0
        %1470 = vmatpush1.xpose.msra.mxu0 0.0
        %1471 = vmatprep.subr.mxu0 0.0
        %1472 = vmatpush1.xpose.msra.mxu0 0.0
        %1473 = vmatprep.subr.mxu0 0.0
        %1474 = vmatpush1.xpose.msra.mxu0 0.0
        %1475 = vmatprep.subr.mxu0 0.0
        %1476 = vmatpush1.xpose.msra.mxu0 0.0
        %1477 = vmatprep.subr.mxu0 0.0
        %1478 = vmatpush1.xpose.msra.mxu0 0.0
        %1479 = vmatprep.subr.mxu0 0.0
        %1480 = vmatpush1.xpose.msra.mxu0 0.0
        %1481 = vmatprep.subr.mxu0 0.0
        %1482 = vmatpush1.xpose.msra.mxu0 0.0
        %1483 = vmatprep.subr.mxu0 0.0
        %1484 = vmatpush1.xpose.msra.mxu0 0.0
        %1485 = vmatprep.subr.mxu0 0.0
        %1486 = vmatpush1.xpose.msra.mxu0 0.0
        %1487 = vmatprep.subr.mxu0 0.0
        %1488 = vmatpush1.xpose.msra.mxu0 0.0
        %1489 = vmatprep.subr.mxu0 0.0
        %1490 = vmatpush1.xpose.msra.mxu0 0.0
        %1491 = vmatprep.subr.mxu0 0.0
        %1492 = vmatpush1.xpose.msra.mxu0 0.0
        %1493 = vmatprep.subr.mxu0 0.0
        %1494 = vmatpush1.xpose.msra.mxu0 0.0
        %1495 = vmatprep.subr.mxu0 0.0
        %1496 = vmatpush1.xpose.msra.mxu0 %v1463
        %1497 = vmatprep.subr.mxu0 0.0
        %1498 = vmatpush2.xpose.msra.mxu0 0.0
        %1499 = vmatprep.subr.mxu0 0.0
        %1500 = vmatpush2.xpose.msra.mxu0 0.0
        %1501 = vmatprep.subr.mxu0 0.0
        %1502 = vmatpush2.xpose.msra.mxu0 0.0
        %1503 = vmatprep.subr.mxu0 0.0
        %1504 = vmatpush2.xpose.msra.mxu0 0.0
        %1505 = vmatprep.subr.mxu0 0.0
        %1506 = vmatpush2.xpose.msra.mxu0 0.0
        %1507 = vmatprep.subr.mxu0 0.0
        %1508 = vmatpush2.xpose.msra.mxu0 0.0
        %1509 = vmatprep.subr.mxu0 0.0
        %1510 = vmatpush2.xpose.msra.mxu0 0.0
        %1511 = vmatprep.subr.mxu0 0.0
        %1512 = vmatpush2.xpose.msra.mxu0 0.0
        %1513 = vmatprep.subr.mxu0 0.0
        %1514 = vmatpush2.xpose.msra.mxu0 0.0
        %1515 = vmatprep.subr.mxu0 0.0
        %1516 = vmatpush2.xpose.msra.mxu0 0.0
        %1517 = vmatprep.subr.mxu0 0.0
        %1518 = vmatpush2.xpose.msra.mxu0 0.0
        %1519 = vmatprep.subr.mxu0 0.0
        %1520 = vmatpush2.xpose.msra.mxu0 0.0
        %1521 = vmatprep.subr.mxu0 0.0
        %1522 = vmatpush2.xpose.msra.mxu0 0.0
        %1523 = vmatprep.subr.mxu0 0.0
        %1524 = vmatpush2.xpose.msra.mxu0 0.0
        %1525 = vmatprep.subr.mxu0 0.0
        %1526 = vmatpush2.xpose.msra.mxu0 0.0
        %1527 = vmatprep.subr.mxu0 0.0
        %1528 = vmatpush2.xpose.msra.mxu0 0.0
        %1529 = vmatprep.mubr.f32.mxu0 0.0
        %1530 = vmatmul.mubr.f32.gmra.mxu0 %v1460
        %v1531 = vpop.f32.mrf.mxu0
        %v1532 = vadd.f32 0.0, %v1531
        %v1533 = vpop.f32.mrf.mxu0
        %1534 = vdwg.mxu0
        %v1535 = vld [vmem:[#allocation3] sm:$0xff]
        %v1536 = vld [vmem:[#allocation3 + $0x8] sm:$0xff]
        %v1537 = vld [vmem:[#allocation3 + $0x10] sm:$0xff]
        %v1538 = vld [vmem:[#allocation3 + $0x18] sm:$0xff]
        %vm1539 = vcmask 64512
        %v1540 = vsel %vm1539, %v1304, -inf
        %1541 = vmax.xlane.f32.xlu0 %v1540
        %v1542 = vpop.xlane.xlu0 %1541
        %v1543 = vsel %vm1539, %v1380, -inf
        %1544 = vmax.xlane.f32.xlu0 %v1543
        %v1545 = vpop.xlane.xlu0 %1544
        %v1546 = vsel %vm1539, %v1456, -inf
        %1547 = vmax.xlane.f32.xlu0 %v1546
        %v1548 = vpop.xlane.xlu0 %1547
        %v1549 = vsel %vm1539, %v1532, -inf
        %1550 = vmax.xlane.f32.xlu0 %v1549
        %v1551 = vpop.xlane.xlu0 %1550
        %v1552 = vmax.f32 %v1535, %v1542
        %v1553 = vmax.f32 %v1536, %v1545
        %v1554 = vmax.f32 %v1537, %v1548
        %v1555 = vmax.f32 %v1538, %v1551
        %v1556 = vsub.f32 %v1535, %v1552
        %v1557 = vsub.f32 %v1536, %v1553
        %v1558 = vsub.f32 %v1537, %v1554
        %v1559 = vsub.f32 %v1538, %v1555
        %v1560 = vmul.f32 %v1556, 1.442695
        %v1561 = vpow.pop %v1560
        %v1562 = vmul.f32 %v1557, 1.442695
        %v1563 = vpow.pop %v1562
        %v1564 = vmul.f32 %v1558, 1.442695
        %v1565 = vpow.pop %v1564
        %v1566 = vmul.f32 %v1559, 1.442695
        %v1567 = vpow.pop %v1566
        %1569 = vset.pattern.permute.xlu0 0
        %1570 = vperm.xlu0 %1569, %v1552
        %v1571 = vpop.permute.xlu0 %1570
        %1574 = vset.pattern.permute.xlu0 0
        %1575 = vperm.xlu0 %1574, %v1553
        %v1576 = vpop.permute.xlu0 %1575
        %1579 = vset.pattern.permute.xlu0 0
        %1580 = vperm.xlu0 %1579, %v1554
        %v1581 = vpop.permute.xlu0 %1580
        %1584 = vset.pattern.permute.xlu0 0
        %1585 = vperm.xlu0 %1584, %v1555
        %v1586 = vpop.permute.xlu0 %1585
        %v1588 = vsub.f32 %v1304, %v1571
        %v1589 = vsub.f32 %v1380, %v1576
        %v1590 = vsub.f32 %v1456, %v1581
        %v1591 = vsub.f32 %v1532, %v1586
        %v1592 = vmul.f32 %v1588, 1.442695
        %v1593 = vpow.pop %v1592
        %v1594 = vmul.f32 %v1589, 1.442695
        %v1595 = vpow.pop %v1594
        %v1596 = vmul.f32 %v1590, 1.442695
        %v1597 = vpow.pop %v1596
        %v1598 = vmul.f32 %v1591, 1.442695
        %v1599 = vpow.pop %v1598
        %v1600 = vld [vmem:[#allocation4] sm:$0xff]
        %v1601 = vld [vmem:[#allocation4 + $0x8] sm:$0xff]
        %v1602 = vld [vmem:[#allocation4 + $0x10] sm:$0xff]
        %v1603 = vld [vmem:[#allocation4 + $0x18] sm:$0xff]
        %v1604 = vmul.f32 %v1561, %v1600
        %v1605 = vmul.f32 %v1563, %v1601
        %v1606 = vmul.f32 %v1565, %v1602
        %v1607 = vmul.f32 %v1567, %v1603
        %v1608 = vsel %vm1539, %v1593, 0.0
        %1609 = vadd.xlane.f32.xlu0 %v1608
        %v1610 = vpop.xlane.xlu0 %1609
        %v1611 = vsel %vm1539, %v1595, 0.0
        %1612 = vadd.xlane.f32.xlu0 %v1611
        %v1613 = vpop.xlane.xlu0 %1612
        %v1614 = vsel %vm1539, %v1597, 0.0
        %1615 = vadd.xlane.f32.xlu0 %v1614
        %v1616 = vpop.xlane.xlu0 %1615
        %v1617 = vsel %vm1539, %v1599, 0.0
        %1618 = vadd.xlane.f32.xlu0 %v1617
        %v1619 = vpop.xlane.xlu0 %1618
        %v1620 = vadd.f32 %v1604, %v1610
        %v1621 = vadd.f32 %v1605, %v1613
        %v1622 = vadd.f32 %v1606, %v1616
        %v1623 = vadd.f32 %v1607, %v1619
        %vm1624 = vcmask 7168
        %1625 = vst.msk [vmem:[#allocation4] sm:$0xff] %vm1624, %v1620
        %1626 = vst.msk [vmem:[#allocation4 + $0x8] sm:$0xff] %vm1624, %v1621
        %1627 = vst.msk [vmem:[#allocation4 + $0x10] sm:$0xff] %vm1624, %v1622
        %1628 = vst.msk [vmem:[#allocation4 + $0x18] sm:$0xff] %vm1624, %v1623
        %v1629 = vld [vmem:[#allocation5] sm:$0xff]
        %v1630 = vld [vmem:[#allocation5 + $0x8] sm:$0xff]
        %v1631 = vld [vmem:[#allocation5 + $0x10] sm:$0xff]
        %v1632 = vld [vmem:[#allocation5 + $0x18] sm:$0xff]
        %1634 = vset.pattern.permute.xlu0 0
        %1635 = vperm.xlu0 %1634, %v1561
        %v1636 = vpop.permute.xlu0 %1635
        %1639 = vset.pattern.permute.xlu0 0
        %1640 = vperm.xlu0 %1639, %v1563
        %v1641 = vpop.permute.xlu0 %1640
        %1644 = vset.pattern.permute.xlu0 0
        %1645 = vperm.xlu0 %1644, %v1565
        %v1646 = vpop.permute.xlu0 %1645
        %1649 = vset.pattern.permute.xlu0 0
        %1650 = vperm.xlu0 %1649, %v1567
        %v1651 = vpop.permute.xlu0 %1650
        %v1653 = vmul.f32 %v1636, %v1629
        %v1654 = vmul.f32 %v1641, %v1630
        %v1655 = vmul.f32 %v1646, %v1631
        %v1656 = vmul.f32 %v1651, %v1632
        %v1658 = vsel %vm1539, %v1593, 0
        %1660 = vmatprep.subr.mxu0 0.0
        %1661 = vmatpush1.msra.mxu0 0.0
        %1662 = vmatprep.subr.mxu0 0.0
        %1663 = vmatpush1.msra.mxu0 0.0
        %1664 = vmatprep.subr.mxu0 0.0
        %1665 = vmatpush1.msra.mxu0 0.0
        %1666 = vmatprep.subr.mxu0 0.0
        %1667 = vmatpush1.msra.mxu0 0.0
        %1668 = vmatprep.subr.mxu0 0.0
        %1669 = vmatpush1.msra.mxu0 0.0
        %1670 = vmatprep.subr.mxu0 0.0
        %1671 = vmatpush1.msra.mxu0 0.0
        %1672 = vmatprep.subr.mxu0 0.0
        %1673 = vmatpush1.msra.mxu0 0.0
        %1674 = vmatprep.subr.mxu0 0.0
        %1675 = vmatpush1.msra.mxu0 0.0
        %1676 = vmatprep.subr.mxu0 0.0
        %1677 = vmatpush1.msra.mxu0 0.0
        %1678 = vmatprep.subr.mxu0 0.0
        %1679 = vmatpush1.msra.mxu0 0.0
        %1680 = vmatprep.subr.mxu0 0.0
        %1681 = vmatpush1.msra.mxu0 0.0
        %1682 = vmatprep.subr.mxu0 0.0
        %1683 = vmatpush1.msra.mxu0 0.0
        %1684 = vmatprep.subr.mxu0 0.0
        %1685 = vmatpush1.msra.mxu0 0.0
        %1686 = vmatprep.subr.mxu0 0.0
        %1687 = vmatpush1.msra.mxu0 0.0
        %1688 = vmatprep.subr.mxu0 0.0
        %1689 = vmatpush1.msra.mxu0 0.0
        %1690 = vmatprep.subr.mxu0 0.0
        %1691 = vmatpush1.msra.mxu0 %v1222
        %1692 = vmatprep.subr.mxu0 0.0
        %1693 = vmatpush2.msra.mxu0 0.0
        %1694 = vmatprep.subr.mxu0 0.0
        %1695 = vmatpush2.msra.mxu0 0.0
        %1696 = vmatprep.subr.mxu0 0.0
        %1697 = vmatpush2.msra.mxu0 0.0
        %1698 = vmatprep.subr.mxu0 0.0
        %1699 = vmatpush2.msra.mxu0 0.0
        %1700 = vmatprep.subr.mxu0 0.0
        %1701 = vmatpush2.msra.mxu0 0.0
        %1702 = vmatprep.subr.mxu0 0.0
        %1703 = vmatpush2.msra.mxu0 0.0
        %1704 = vmatprep.subr.mxu0 0.0
        %1705 = vmatpush2.msra.mxu0 0.0
        %1706 = vmatprep.subr.mxu0 0.0
        %1707 = vmatpush2.msra.mxu0 0.0
        %1708 = vmatprep.subr.mxu0 0.0
        %1709 = vmatpush2.msra.mxu0 0.0
        %1710 = vmatprep.subr.mxu0 0.0
        %1711 = vmatpush2.msra.mxu0 0.0
        %1712 = vmatprep.subr.mxu0 0.0
        %1713 = vmatpush2.msra.mxu0 0.0
        %1714 = vmatprep.subr.mxu0 0.0
        %1715 = vmatpush2.msra.mxu0 0.0
        %1716 = vmatprep.subr.mxu0 0.0
        %1717 = vmatpush2.msra.mxu0 0.0
        %1718 = vmatprep.subr.mxu0 0.0
        %1719 = vmatpush2.msra.mxu0 0.0
        %1720 = vmatprep.subr.mxu0 0.0
        %1721 = vmatpush2.msra.mxu0 0.0
        %1722 = vmatprep.subr.mxu0 0.0
        %1723 = vmatpush2.msra.mxu0 0.0
        %1724 = vmatprep.mubr.f32.mxu0 0.0
        %1725 = vmatmul.mubr.f32.gmra.mxu0 %v1658
        %v1726 = vpop.f32.mrf.mxu0
        %v1727 = vadd.f32 0.0, %v1726
        %v1728 = vpop.f32.mrf.mxu0
        %1729 = vdwg.mxu0
        %v1731 = vsel %vm1539, %v1595, 0
        %1733 = vmatprep.subr.mxu0 0.0
        %1734 = vmatpush1.msra.mxu0 0.0
        %1735 = vmatprep.subr.mxu0 0.0
        %1736 = vmatpush1.msra.mxu0 0.0
        %1737 = vmatprep.subr.mxu0 0.0
        %1738 = vmatpush1.msra.mxu0 0.0
        %1739 = vmatprep.subr.mxu0 0.0
        %1740 = vmatpush1.msra.mxu0 0.0
        %1741 = vmatprep.subr.mxu0 0.0
        %1742 = vmatpush1.msra.mxu0 0.0
        %1743 = vmatprep.subr.mxu0 0.0
        %1744 = vmatpush1.msra.mxu0 0.0
        %1745 = vmatprep.subr.mxu0 0.0
        %1746 = vmatpush1.msra.mxu0 0.0
        %1747 = vmatprep.subr.mxu0 0.0
        %1748 = vmatpush1.msra.mxu0 0.0
        %1749 = vmatprep.subr.mxu0 0.0
        %1750 = vmatpush1.msra.mxu0 0.0
        %1751 = vmatprep.subr.mxu0 0.0
        %1752 = vmatpush1.msra.mxu0 0.0
        %1753 = vmatprep.subr.mxu0 0.0
        %1754 = vmatpush1.msra.mxu0 0.0
        %1755 = vmatprep.subr.mxu0 0.0
        %1756 = vmatpush1.msra.mxu0 0.0
        %1757 = vmatprep.subr.mxu0 0.0
        %1758 = vmatpush1.msra.mxu0 0.0
        %1759 = vmatprep.subr.mxu0 0.0
        %1760 = vmatpush1.msra.mxu0 0.0
        %1761 = vmatprep.subr.mxu0 0.0
        %1762 = vmatpush1.msra.mxu0 0.0
        %1763 = vmatprep.subr.mxu0 0.0
        %1764 = vmatpush1.msra.mxu0 %v1223
        %1765 = vmatprep.subr.mxu0 0.0
        %1766 = vmatpush2.msra.mxu0 0.0
        %1767 = vmatprep.subr.mxu0 0.0
        %1768 = vmatpush2.msra.mxu0 0.0
        %1769 = vmatprep.subr.mxu0 0.0
        %1770 = vmatpush2.msra.mxu0 0.0
        %1771 = vmatprep.subr.mxu0 0.0
        %1772 = vmatpush2.msra.mxu0 0.0
        %1773 = vmatprep.subr.mxu0 0.0
        %1774 = vmatpush2.msra.mxu0 0.0
        %1775 = vmatprep.subr.mxu0 0.0
        %1776 = vmatpush2.msra.mxu0 0.0
        %1777 = vmatprep.subr.mxu0 0.0
        %1778 = vmatpush2.msra.mxu0 0.0
        %1779 = vmatprep.subr.mxu0 0.0
        %1780 = vmatpush2.msra.mxu0 0.0
        %1781 = vmatprep.subr.mxu0 0.0
        %1782 = vmatpush2.msra.mxu0 0.0
        %1783 = vmatprep.subr.mxu0 0.0
        %1784 = vmatpush2.msra.mxu0 0.0
        %1785 = vmatprep.subr.mxu0 0.0
        %1786 = vmatpush2.msra.mxu0 0.0
        %1787 = vmatprep.subr.mxu0 0.0
        %1788 = vmatpush2.msra.mxu0 0.0
        %1789 = vmatprep.subr.mxu0 0.0
        %1790 = vmatpush2.msra.mxu0 0.0
        %1791 = vmatprep.subr.mxu0 0.0
        %1792 = vmatpush2.msra.mxu0 0.0
        %1793 = vmatprep.subr.mxu0 0.0
        %1794 = vmatpush2.msra.mxu0 0.0
        %1795 = vmatprep.subr.mxu0 0.0
        %1796 = vmatpush2.msra.mxu0 0.0
        %1797 = vmatprep.mubr.f32.mxu0 0.0
        %1798 = vmatmul.mubr.f32.gmra.mxu0 %v1731
        %v1799 = vpop.f32.mrf.mxu0
        %v1800 = vadd.f32 0.0, %v1799
        %v1801 = vpop.f32.mrf.mxu0
        %1802 = vdwg.mxu0
        %v1804 = vsel %vm1539, %v1597, 0
        %1806 = vmatprep.subr.mxu0 0.0
        %1807 = vmatpush1.msra.mxu0 0.0
        %1808 = vmatprep.subr.mxu0 0.0
        %1809 = vmatpush1.msra.mxu0 0.0
        %1810 = vmatprep.subr.mxu0 0.0
        %1811 = vmatpush1.msra.mxu0 0.0
        %1812 = vmatprep.subr.mxu0 0.0
        %1813 = vmatpush1.msra.mxu0 0.0
        %1814 = vmatprep.subr.mxu0 0.0
        %1815 = vmatpush1.msra.mxu0 0.0
        %1816 = vmatprep.subr.mxu0 0.0
        %1817 = vmatpush1.msra.mxu0 0.0
        %1818 = vmatprep.subr.mxu0 0.0
        %1819 = vmatpush1.msra.mxu0 0.0
        %1820 = vmatprep.subr.mxu0 0.0
        %1821 = vmatpush1.msra.mxu0 0.0
        %1822 = vmatprep.subr.mxu0 0.0
        %1823 = vmatpush1.msra.mxu0 0.0
        %1824 = vmatprep.subr.mxu0 0.0
        %1825 = vmatpush1.msra.mxu0 0.0
        %1826 = vmatprep.subr.mxu0 0.0
        %1827 = vmatpush1.msra.mxu0 0.0
        %1828 = vmatprep.subr.mxu0 0.0
        %1829 = vmatpush1.msra.mxu0 0.0
        %1830 = vmatprep.subr.mxu0 0.0
        %1831 = vmatpush1.msra.mxu0 0.0
        %1832 = vmatprep.subr.mxu0 0.0
        %1833 = vmatpush1.msra.mxu0 0.0
        %1834 = vmatprep.subr.mxu0 0.0
        %1835 = vmatpush1.msra.mxu0 0.0
        %1836 = vmatprep.subr.mxu0 0.0
        %1837 = vmatpush1.msra.mxu0 %v1224
        %1838 = vmatprep.subr.mxu0 0.0
        %1839 = vmatpush2.msra.mxu0 0.0
        %1840 = vmatprep.subr.mxu0 0.0
        %1841 = vmatpush2.msra.mxu0 0.0
        %1842 = vmatprep.subr.mxu0 0.0
        %1843 = vmatpush2.msra.mxu0 0.0
        %1844 = vmatprep.subr.mxu0 0.0
        %1845 = vmatpush2.msra.mxu0 0.0
        %1846 = vmatprep.subr.mxu0 0.0
        %1847 = vmatpush2.msra.mxu0 0.0
        %1848 = vmatprep.subr.mxu0 0.0
        %1849 = vmatpush2.msra.mxu0 0.0
        %1850 = vmatprep.subr.mxu0 0.0
        %1851 = vmatpush2.msra.mxu0 0.0
        %1852 = vmatprep.subr.mxu0 0.0
        %1853 = vmatpush2.msra.mxu0 0.0
        %1854 = vmatprep.subr.mxu0 0.0
        %1855 = vmatpush2.msra.mxu0 0.0
        %1856 = vmatprep.subr.mxu0 0.0
        %1857 = vmatpush2.msra.mxu0 0.0
        %1858 = vmatprep.subr.mxu0 0.0
        %1859 = vmatpush2.msra.mxu0 0.0
        %1860 = vmatprep.subr.mxu0 0.0
        %1861 = vmatpush2.msra.mxu0 0.0
        %1862 = vmatprep.subr.mxu0 0.0
        %1863 = vmatpush2.msra.mxu0 0.0
        %1864 = vmatprep.subr.mxu0 0.0
        %1865 = vmatpush2.msra.mxu0 0.0
        %1866 = vmatprep.subr.mxu0 0.0
        %1867 = vmatpush2.msra.mxu0 0.0
        %1868 = vmatprep.subr.mxu0 0.0
        %1869 = vmatpush2.msra.mxu0 0.0
        %1870 = vmatprep.mubr.f32.mxu0 0.0
        %1871 = vmatmul.mubr.f32.gmra.mxu0 %v1804
        %v1872 = vpop.f32.mrf.mxu0
        %v1873 = vadd.f32 0.0, %v1872
        %v1874 = vpop.f32.mrf.mxu0
        %1875 = vdwg.mxu0
        %v1877 = vsel %vm1539, %v1599, 0
        %1879 = vmatprep.subr.mxu0 0.0
        %1880 = vmatpush1.msra.mxu0 0.0
        %1881 = vmatprep.subr.mxu0 0.0
        %1882 = vmatpush1.msra.mxu0 0.0
        %1883 = vmatprep.subr.mxu0 0.0
        %1884 = vmatpush1.msra.mxu0 0.0
        %1885 = vmatprep.subr.mxu0 0.0
        %1886 = vmatpush1.msra.mxu0 0.0
        %1887 = vmatprep.subr.mxu0 0.0
        %1888 = vmatpush1.msra.mxu0 0.0
        %1889 = vmatprep.subr.mxu0 0.0
        %1890 = vmatpush1.msra.mxu0 0.0
        %1891 = vmatprep.subr.mxu0 0.0
        %1892 = vmatpush1.msra.mxu0 0.0
        %1893 = vmatprep.subr.mxu0 0.0
        %1894 = vmatpush1.msra.mxu0 0.0
        %1895 = vmatprep.subr.mxu0 0.0
        %1896 = vmatpush1.msra.mxu0 0.0
        %1897 = vmatprep.subr.mxu0 0.0
        %1898 = vmatpush1.msra.mxu0 0.0
        %1899 = vmatprep.subr.mxu0 0.0
        %1900 = vmatpush1.msra.mxu0 0.0
        %1901 = vmatprep.subr.mxu0 0.0
        %1902 = vmatpush1.msra.mxu0 0.0
        %1903 = vmatprep.subr.mxu0 0.0
        %1904 = vmatpush1.msra.mxu0 0.0
        %1905 = vmatprep.subr.mxu0 0.0
        %1906 = vmatpush1.msra.mxu0 0.0
        %1907 = vmatprep.subr.mxu0 0.0
        %1908 = vmatpush1.msra.mxu0 0.0
        %1909 = vmatprep.subr.mxu0 0.0
        %1910 = vmatpush1.msra.mxu0 %v1225
        %1911 = vmatprep.subr.mxu0 0.0
        %1912 = vmatpush2.msra.mxu0 0.0
        %1913 = vmatprep.subr.mxu0 0.0
        %1914 = vmatpush2.msra.mxu0 0.0
        %1915 = vmatprep.subr.mxu0 0.0
        %1916 = vmatpush2.msra.mxu0 0.0
        %1917 = vmatprep.subr.mxu0 0.0
        %1918 = vmatpush2.msra.mxu0 0.0
        %1919 = vmatprep.subr.mxu0 0.0
        %1920 = vmatpush2.msra.mxu0 0.0
        %1921 = vmatprep.subr.mxu0 0.0
        %1922 = vmatpush2.msra.mxu0 0.0
        %1923 = vmatprep.subr.mxu0 0.0
        %1924 = vmatpush2.msra.mxu0 0.0
        %1925 = vmatprep.subr.mxu0 0.0
        %1926 = vmatpush2.msra.mxu0 0.0
        %1927 = vmatprep.subr.mxu0 0.0
        %1928 = vmatpush2.msra.mxu0 0.0
        %1929 = vmatprep.subr.mxu0 0.0
        %1930 = vmatpush2.msra.mxu0 0.0
        %1931 = vmatprep.subr.mxu0 0.0
        %1932 = vmatpush2.msra.mxu0 0.0
        %1933 = vmatprep.subr.mxu0 0.0
        %1934 = vmatpush2.msra.mxu0 0.0
        %1935 = vmatprep.subr.mxu0 0.0
        %1936 = vmatpush2.msra.mxu0 0.0
        %1937 = vmatprep.subr.mxu0 0.0
        %1938 = vmatpush2.msra.mxu0 0.0
        %1939 = vmatprep.subr.mxu0 0.0
        %1940 = vmatpush2.msra.mxu0 0.0
        %1941 = vmatprep.subr.mxu0 0.0
        %1942 = vmatpush2.msra.mxu0 0.0
        %1943 = vmatprep.mubr.f32.mxu0 0.0
        %1944 = vmatmul.mubr.f32.gmra.mxu0 %v1877
        %v1945 = vpop.f32.mrf.mxu0
        %v1946 = vadd.f32 0.0, %v1945
        %v1947 = vpop.f32.mrf.mxu0
        %1948 = vdwg.mxu0
        %v1949 = vadd.f32 %v1653, %v1727
        %v1950 = vadd.f32 %v1654, %v1800
        %v1951 = vadd.f32 %v1655, %v1873
        %v1952 = vadd.f32 %v1656, %v1946
        %1953 = vst.msk [vmem:[#allocation5] sm:$0xff] %vm1230, %v1949
        %1954 = vst.msk [vmem:[#allocation5 + $0x8] sm:$0xff] %vm1230, %v1950
        %1955 = vst.msk [vmem:[#allocation5 + $0x10] sm:$0xff] %vm1230, %v1951
        %1956 = vst.msk [vmem:[#allocation5 + $0x18] sm:$0xff] %vm1230, %v1952
        %1957 = vst.msk [vmem:[#allocation3] sm:$0xff] %vm1624, %v1552
        %1958 = vst.msk [vmem:[#allocation3 + $0x8] sm:$0xff] %vm1624, %v1553
        %1959 = vst.msk [vmem:[#allocation3 + $0x10] sm:$0xff] %vm1624, %v1554
        %1960 = vst.msk [vmem:[#allocation3 + $0x18] sm:$0xff] %vm1624, %v1555
        // Predicated region
        $region113: #{tpu_custom_call.1} parent=79 // pred_check
          %p1961 = pneg %p669
        $region114: #{tpu_custom_call.1} parent=79 // pred_check_branch
          %1963 = sbr.rel (%p1961) target = $region116
        $region115: #{tpu_custom_call.1} parent=79 // pred_region
          %v1964 = vld [vmem:[#allocation5] sm:$0xff]
          %v1965 = vld [vmem:[#allocation5 + $0x8] sm:$0xff]
          %v1966 = vld [vmem:[#allocation5 + $0x10] sm:$0xff]
          %v1967 = vld [vmem:[#allocation5 + $0x18] sm:$0xff]
          %v1968 = vld [vmem:[#allocation4] sm:$0xff]
          %v1969 = vld [vmem:[#allocation4 + $0x8] sm:$0xff]
          %v1970 = vld [vmem:[#allocation4 + $0x10] sm:$0xff]
          %v1971 = vld [vmem:[#allocation4 + $0x18] sm:$0xff]
          %v1972 = vrcp.pop %v1968
          %v1973 = vmul.f32 1.0, %v1972
          %v1974 = vrcp.pop %v1969
          %v1975 = vmul.f32 1.0, %v1974
          %v1976 = vrcp.pop %v1970
          %v1977 = vmul.f32 1.0, %v1976
          %v1978 = vrcp.pop %v1971
          %v1979 = vmul.f32 1.0, %v1978
          %1981 = vset.pattern.permute.xlu0 0
          %1982 = vperm.xlu0 %1981, %v1973
          %v1983 = vpop.permute.xlu0 %1982
          %1986 = vset.pattern.permute.xlu0 0
          %1987 = vperm.xlu0 %1986, %v1975
          %v1988 = vpop.permute.xlu0 %1987
          %1991 = vset.pattern.permute.xlu0 0
          %1992 = vperm.xlu0 %1991, %v1977
          %v1993 = vpop.permute.xlu0 %1992
          %1996 = vset.pattern.permute.xlu0 0
          %1997 = vperm.xlu0 %1996, %v1979
          %v1998 = vpop.permute.xlu0 %1997
          %v2000 = vmul.f32 %v1964, %v1983
          %v2001 = vmul.f32 %v1965, %v1988
          %v2002 = vmul.f32 %v1966, %v1993
          %v2003 = vmul.f32 %v1967, %v1998
          %v2004 = vcombine.low %v2000, %v2002
          %v2005 = vcombine.high %v2000, %v2002
          %v2007 = vunpack.c.l.s4 1983009808
          %v2008 = vunpack.c.0.s8 %v2007
          %v2009 = vlaneseq
          %v2010 = vshrl.u32 %v2009, 7
          %v2011 = vsub.s32 %v2008, %v2010
          %v2012 = vrot.slane %v2004, %v2011
          %v2014 = vunpack.c.l.s4 1983009808
          %v2015 = vunpack.c.0.s8 %v2014
          %v2016 = vlaneseq
          %v2017 = vshrl.u32 %v2016, 7
          %v2018 = vsub.s32 %v2015, %v2017
          %v2019 = vrot.slane %v2005, %v2018
          %v2020 = vcombine.low %v2001, %v2003
          %v2021 = vcombine.high %v2001, %v2003
          %v2023 = vunpack.c.l.s4 1983009808
          %v2024 = vunpack.c.0.s8 %v2023
          %v2025 = vlaneseq
          %v2026 = vshrl.u32 %v2025, 7
          %v2027 = vsub.s32 %v2024, %v2026
          %v2028 = vrot.slane %v2020, %v2027
          %v2030 = vunpack.c.l.s4 1983009808
          %v2031 = vunpack.c.0.s8 %v2030
          %v2032 = vlaneseq
          %v2033 = vshrl.u32 %v2032, 7
          %v2034 = vsub.s32 %v2031, %v2033
          %v2035 = vrot.slane %v2021, %v2034
          %v2036 = vcombine.low %v2012, %v2028
          %v2037 = vcombine.high %v2012, %v2028
          %v2039 = vunpack.c.l.s4 1934713408
          %v2040 = vunpack.c.0.s8 %v2039
          %v2041 = vlaneseq
          %v2042 = vshrl.u32 %v2041, 7
          %v2043 = vsub.s32 %v2040, %v2042
          %v2044 = vrot.slane %v2036, %v2043
          %v2046 = vunpack.c.l.s4 1934713408
          %v2047 = vunpack.c.0.s8 %v2046
          %v2048 = vlaneseq
          %v2049 = vshrl.u32 %v2048, 7
          %v2050 = vsub.s32 %v2047, %v2049
          %v2051 = vrot.slane %v2037, %v2050
          %v2052 = vcombine.low %v2019, %v2035
          %v2053 = vcombine.high %v2019, %v2035
          %v2055 = vunpack.c.l.s4 1934713408
          %v2056 = vunpack.c.0.s8 %v2055
          %v2057 = vlaneseq
          %v2058 = vshrl.u32 %v2057, 7
          %v2059 = vsub.s32 %v2056, %v2058
          %v2060 = vrot.slane %v2052, %v2059
          %v2062 = vunpack.c.l.s4 1934713408
          %v2063 = vunpack.c.0.s8 %v2062
          %v2064 = vlaneseq
          %v2065 = vshrl.u32 %v2064, 7
          %v2066 = vsub.s32 %v2063, %v2065
          %v2067 = vrot.slane %v2053, %v2066
          %v2068 = vcombine.high %v2044, 0.0
          %v2069 = vcombine.high %v2051, 0.0
          %v2070 = vcombine.high %v2060, 0.0
          %v2071 = vcombine.high %v2067, 0.0
          %v2072 = vcombine.low %v2044, %v2051
          %v2074 = vunpack.c.l.s4 1983009808
          %v2075 = vunpack.c.0.s8 %v2074
          %v2076 = vlaneseq
          %v2077 = vshrl.u32 %v2076, 7
          %v2078 = vsub.s32 %v2075, %v2077
          %v2079 = vrot.slane %v2072, %v2078
          %v2080 = vcombine.low %v2068, %v2069
          %v2082 = vunpack.c.l.s4 1983009808
          %v2083 = vunpack.c.0.s8 %v2082
          %v2084 = vlaneseq
          %v2085 = vshrl.u32 %v2084, 7
          %v2086 = vsub.s32 %v2083, %v2085
          %v2087 = vrot.slane %v2080, %v2086
          %v2088 = vcombine.low %v2060, %v2067
          %v2090 = vunpack.c.l.s4 1983009808
          %v2091 = vunpack.c.0.s8 %v2090
          %v2092 = vlaneseq
          %v2093 = vshrl.u32 %v2092, 7
          %v2094 = vsub.s32 %v2091, %v2093
          %v2095 = vrot.slane %v2088, %v2094
          %v2096 = vcombine.low %v2070, %v2071
          %v2098 = vunpack.c.l.s4 1983009808
          %v2099 = vunpack.c.0.s8 %v2098
          %v2100 = vlaneseq
          %v2101 = vshrl.u32 %v2100, 7
          %v2102 = vsub.s32 %v2099, %v2101
          %v2103 = vrot.slane %v2096, %v2102
          %v2104 = vcombine.low %v2079, %v2087
          %v2105 = vcombine.high %v2079, %v2087
          %v2107 = vunpack.c.l.s4 1934713408
          %v2108 = vunpack.c.0.s8 %v2107
          %v2109 = vlaneseq
          %v2110 = vshrl.u32 %v2109, 7
          %v2111 = vsub.s32 %v2108, %v2110
          %v2112 = vrot.slane %v2104, %v2111
          %v2114 = vunpack.c.l.s4 1934713408
          %v2115 = vunpack.c.0.s8 %v2114
          %v2116 = vlaneseq
          %v2117 = vshrl.u32 %v2116, 7
          %v2118 = vsub.s32 %v2115, %v2117
          %v2119 = vrot.slane %v2105, %v2118
          %v2120 = vcombine.low %v2095, %v2103
          %v2121 = vcombine.high %v2095, %v2103
          %v2123 = vunpack.c.l.s4 1934713408
          %v2124 = vunpack.c.0.s8 %v2123
          %v2125 = vlaneseq
          %v2126 = vshrl.u32 %v2125, 7
          %v2127 = vsub.s32 %v2124, %v2126
          %v2128 = vrot.slane %v2120, %v2127
          %v2130 = vunpack.c.l.s4 1934713408
          %v2131 = vunpack.c.0.s8 %v2130
          %v2132 = vlaneseq
          %v2133 = vshrl.u32 %v2132, 7
          %v2134 = vsub.s32 %v2131, %v2133
          %v2135 = vrot.slane %v2121, %v2134
          %v2136 = vcombine.low %v2112, %v2128
          %v2137 = vcombine.high %v2112, %v2128
          %v2138 = vcombine.low %v2119, %v2135
          %v2139 = vcombine.high %v2119, %v2135
          %2141 = vrot.lane.b32.xlu0 %v2137, 32
          %v2142 = vpop.permute.xlu0 %2141
          %2145 = vrot.lane.b32.xlu0 %v2138, 64
          %v2146 = vpop.permute.xlu0 %2145
          %2149 = vrot.lane.b32.xlu0 %v2139, 96
          %v2150 = vpop.permute.xlu0 %2149
          %v2152 = vsel %vm1230, %v2136, %v2142
          %vm2153 = vcmask 523264
          %v2154 = vsel %vm2153, %v2152, %v2146
          %vm2155 = vcmask 785408
          %v2156 = vsel %vm2155, %v2154, %v2150
          %v2157 = vld [vmem:[#allocation14] sm:$0xff]
          %v2158 = vld [vmem:[#allocation14 + $0x8] sm:$0xff]
          %v2159 = vld [vmem:[#allocation14 + $0x10] sm:$0xff]
          %v2160 = vld [vmem:[#allocation14 + $0x18] sm:$0xff]
          %v2161 = vld [vmem:[#allocation14 + $0x20] sm:$0xff]
          %v2162 = vld [vmem:[#allocation14 + $0x28] sm:$0xff]
          %v2163 = vld [vmem:[#allocation14 + $0x30] sm:$0xff]
          %v2164 = vld [vmem:[#allocation14 + $0x38] sm:$0xff]
          %v2165 = vld [vmem:[#allocation14 + $0x40] sm:$0xff]
          %v2166 = vld [vmem:[#allocation14 + $0x48] sm:$0xff]
          %v2167 = vld [vmem:[#allocation14 + $0x50] sm:$0xff]
          %v2168 = vld [vmem:[#allocation14 + $0x58] sm:$0xff]
          %v2169 = vld [vmem:[#allocation14 + $0x60] sm:$0xff]
          %v2170 = vld [vmem:[#allocation14 + $0x68] sm:$0xff]
          %v2171 = vld [vmem:[#allocation14 + $0x70] sm:$0xff]
          %v2172 = vld [vmem:[#allocation14 + $0x78] sm:$0xff]
          %v2173 = vld [vmem:[%s6] sm:$0x1]
          %v2175 = vlaneseq
          %v2176 = vshrl.u32 %v2175, 7
          %v2177 = vsub.s32 0, %v2176
          %v2178 = vrot.slane %v2173, %v2177
          %2180 = vmatprep.subr.mxu0 0.0
          %2181 = vmatpush1.msra.mxu0 %v2172
          %2182 = vmatprep.subr.mxu0 0.0
          %2183 = vmatpush1.msra.mxu0 %v2171
          %2184 = vmatprep.subr.mxu0 0.0
          %2185 = vmatpush1.msra.mxu0 %v2170
          %2186 = vmatprep.subr.mxu0 0.0
          %2187 = vmatpush1.msra.mxu0 %v2169
          %2188 = vmatprep.subr.mxu0 0.0
          %2189 = vmatpush1.msra.mxu0 %v2168
          %2190 = vmatprep.subr.mxu0 0.0
          %2191 = vmatpush1.msra.mxu0 %v2167
          %2192 = vmatprep.subr.mxu0 0.0
          %2193 = vmatpush1.msra.mxu0 %v2166
          %2194 = vmatprep.subr.mxu0 0.0
          %2195 = vmatpush1.msra.mxu0 %v2165
          %2196 = vmatprep.subr.mxu0 0.0
          %2197 = vmatpush1.msra.mxu0 %v2164
          %2198 = vmatprep.subr.mxu0 0.0
          %2199 = vmatpush1.msra.mxu0 %v2163
          %2200 = vmatprep.subr.mxu0 0.0
          %2201 = vmatpush1.msra.mxu0 %v2162
          %2202 = vmatprep.subr.mxu0 0.0
          %2203 = vmatpush1.msra.mxu0 %v2161
          %2204 = vmatprep.subr.mxu0 0.0
          %2205 = vmatpush1.msra.mxu0 %v2160
          %2206 = vmatprep.subr.mxu0 0.0
          %2207 = vmatpush1.msra.mxu0 %v2159
          %2208 = vmatprep.subr.mxu0 0.0
          %2209 = vmatpush1.msra.mxu0 %v2158
          %2210 = vmatprep.subr.mxu0 0.0
          %2211 = vmatpush1.msra.mxu0 %v2157
          %2212 = vmatprep.subr.mxu0 0.0
          %2213 = vmatpush2.msra.mxu0 0.0
          %2214 = vmatprep.subr.mxu0 0.0
          %2215 = vmatpush2.msra.mxu0 0.0
          %2216 = vmatprep.subr.mxu0 0.0
          %2217 = vmatpush2.msra.mxu0 0.0
          %2218 = vmatprep.subr.mxu0 0.0
          %2219 = vmatpush2.msra.mxu0 0.0
          %2220 = vmatprep.subr.mxu0 0.0
          %2221 = vmatpush2.msra.mxu0 0.0
          %2222 = vmatprep.subr.mxu0 0.0
          %2223 = vmatpush2.msra.mxu0 0.0
          %2224 = vmatprep.subr.mxu0 0.0
          %2225 = vmatpush2.msra.mxu0 0.0
          %2226 = vmatprep.subr.mxu0 0.0
          %2227 = vmatpush2.msra.mxu0 0.0
          %2228 = vmatprep.subr.mxu0 0.0
          %2229 = vmatpush2.msra.mxu0 0.0
          %2230 = vmatprep.subr.mxu0 0.0
          %2231 = vmatpush2.msra.mxu0 0.0
          %2232 = vmatprep.subr.mxu0 0.0
          %2233 = vmatpush2.msra.mxu0 0.0
          %2234 = vmatprep.subr.mxu0 0.0
          %2235 = vmatpush2.msra.mxu0 0.0
          %2236 = vmatprep.subr.mxu0 0.0
          %2237 = vmatpush2.msra.mxu0 0.0
          %2238 = vmatprep.subr.mxu0 0.0
          %2239 = vmatpush2.msra.mxu0 0.0
          %2240 = vmatprep.subr.mxu0 0.0
          %2241 = vmatpush2.msra.mxu0 0.0
          %2242 = vmatprep.subr.mxu0 0.0
          %2243 = vmatpush2.msra.mxu0 0.0
          %2244 = vmatprep.mubr.f32.mxu0 0.0
          %2245 = vmatmul.mubr.f32.gmra.mxu0 %v2156
          %v2246 = vpop.f32.mrf.mxu0
          %v2247 = vadd.f32 %v2178, %v2246
          %v2248 = vpop.f32.mrf.mxu0
          %2249 = vdwg.mxu0
          %v2250 = vld [vmem:[%s578] sm:$0xff]
          %v2251 = vadd.f32 %v2250, %v2247
          %v2252 = vld [vmem:[%s7] sm:$0x1]
          %v2253 = vld [vmem:[%s8] sm:$0x1]
          %2254 = vadd.xlane.f32.xlu0 %v2251
          %v2255 = vpop.xlane.xlu0 %2254
          %v2256 = vrcp.pop 128.0
          %v2257 = vmul.f32 %v2255, %v2256
          %v2258 = vsub.f32 %v2251, %v2257
          %v2259 = vmul.f32 %v2258, %v2258
          %2260 = vadd.xlane.f32.xlu0 %v2259
          %v2261 = vpop.xlane.xlu0 %2260
          %v2262 = vmul.f32 %v2261, %v2256
          %v2263 = vadd.f32 %v2262, 1e-05
          %v2264 = vrsqrt.pop %v2263
          %v2265 = vmul.f32 %v2258, %v2264
          %v2267 = vlaneseq
          %v2268 = vshrl.u32 %v2267, 7
          %v2269 = vsub.s32 0, %v2268
          %v2270 = vrot.slane %v2252, %v2269
          %v2272 = vmul.f32 %v2265, %v2270
          %v2274 = vlaneseq
          %v2275 = vshrl.u32 %v2274, 7
          %v2276 = vsub.s32 0, %v2275
          %v2277 = vrot.slane %v2253, %v2276
          %v2279 = vadd.f32 %v2272, %v2277
          %v2280 = vld [vmem:[#allocation15] sm:$0xff]
          %v2281 = vld [vmem:[#allocation15 + $0x8] sm:$0xff]
          %v2282 = vld [vmem:[#allocation15 + $0x10] sm:$0xff]
          %v2283 = vld [vmem:[#allocation15 + $0x18] sm:$0xff]
          %v2284 = vld [vmem:[#allocation15 + $0x20] sm:$0xff]
          %v2285 = vld [vmem:[#allocation15 + $0x28] sm:$0xff]
          %v2286 = vld [vmem:[#allocation15 + $0x30] sm:$0xff]
          %v2287 = vld [vmem:[#allocation15 + $0x38] sm:$0xff]
          %v2288 = vld [vmem:[#allocation15 + $0x40] sm:$0xff]
          %v2289 = vld [vmem:[#allocation15 + $0x48] sm:$0xff]
          %v2290 = vld [vmem:[#allocation15 + $0x50] sm:$0xff]
          %v2291 = vld [vmem:[#allocation15 + $0x58] sm:$0xff]
          %v2292 = vld [vmem:[#allocation15 + $0x60] sm:$0xff]
          %v2293 = vld [vmem:[#allocation15 + $0x68] sm:$0xff]
          %v2294 = vld [vmem:[#allocation15 + $0x70] sm:$0xff]
          %v2295 = vld [vmem:[#allocation15 + $0x78] sm:$0xff]
          %v2296 = vld [vmem:[#allocation15 + $0x80] sm:$0xff]
          %v2297 = vld [vmem:[#allocation15 + $0x88] sm:$0xff]
          %v2298 = vld [vmem:[#allocation15 + $0x90] sm:$0xff]
          %v2299 = vld [vmem:[#allocation15 + $0x98] sm:$0xff]
          %v2300 = vld [vmem:[#allocation15 + $0xa0] sm:$0xff]
          %v2301 = vld [vmem:[#allocation15 + $0xa8] sm:$0xff]
          %v2302 = vld [vmem:[#allocation15 + $0xb0] sm:$0xff]
          %v2303 = vld [vmem:[#allocation15 + $0xb8] sm:$0xff]
          %v2304 = vld [vmem:[#allocation15 + $0xc0] sm:$0xff]
          %v2305 = vld [vmem:[#allocation15 + $0xc8] sm:$0xff]
          %v2306 = vld [vmem:[#allocation15 + $0xd0] sm:$0xff]
          %v2307 = vld [vmem:[#allocation15 + $0xd8] sm:$0xff]
          %v2308 = vld [vmem:[#allocation15 + $0xe0] sm:$0xff]
          %v2309 = vld [vmem:[#allocation15 + $0xe8] sm:$0xff]
          %v2310 = vld [vmem:[#allocation15 + $0xf0] sm:$0xff]
          %v2311 = vld [vmem:[#allocation15 + $0xf8] sm:$0xff]
          %v2312 = vld [vmem:[%s10] sm:$0x3]
          %v2314 = vlaneseq
          %v2315 = vshrl.u32 %v2314, 7
          %v2316 = vsub.s32 0, %v2315
          %v2317 = vrot.slane %v2312, %v2316
          %v2318 = vlaneseq
          %v2319 = vshrl.u32 %v2318, 7
          %v2320 = vsub.s32 1, %v2319
          %v2321 = vrot.slane %v2312, %v2320
          %2324 = vmatprep.subr.mxu0 %v2311
          %2325 = vmatpush1.msra.mxu0 %v2310
          %2326 = vmatprep.subr.mxu0 %v2309
          %2327 = vmatpush1.msra.mxu0 %v2308
          %2328 = vmatprep.subr.mxu0 %v2307
          %2329 = vmatpush1.msra.mxu0 %v2306
          %2330 = vmatprep.subr.mxu0 %v2305
          %2331 = vmatpush1.msra.mxu0 %v2304
          %2332 = vmatprep.subr.mxu0 %v2303
          %2333 = vmatpush1.msra.mxu0 %v2302
          %2334 = vmatprep.subr.mxu0 %v2301
          %2335 = vmatpush1.msra.mxu0 %v2300
          %2336 = vmatprep.subr.mxu0 %v2299
          %2337 = vmatpush1.msra.mxu0 %v2298
          %2338 = vmatprep.subr.mxu0 %v2297
          %2339 = vmatpush1.msra.mxu0 %v2296
          %2340 = vmatprep.subr.mxu0 %v2295
          %2341 = vmatpush1.msra.mxu0 %v2294
          %2342 = vmatprep.subr.mxu0 %v2293
          %2343 = vmatpush1.msra.mxu0 %v2292
          %2344 = vmatprep.subr.mxu0 %v2291
          %2345 = vmatpush1.msra.mxu0 %v2290
          %2346 = vmatprep.subr.mxu0 %v2289
          %2347 = vmatpush1.msra.mxu0 %v2288
          %2348 = vmatprep.subr.mxu0 %v2287
          %2349 = vmatpush1.msra.mxu0 %v2286
          %2350 = vmatprep.subr.mxu0 %v2285
          %2351 = vmatpush1.msra.mxu0 %v2284
          %2352 = vmatprep.subr.mxu0 %v2283
          %2353 = vmatpush1.msra.mxu0 %v2282
          %2354 = vmatprep.subr.mxu0 %v2281
          %2355 = vmatpush1.msra.mxu0 %v2280
          %2356 = vmatprep.subr.mxu0 0.0
          %2357 = vmatpush2.msra.mxu0 0.0
          %2358 = vmatprep.subr.mxu0 0.0
          %2359 = vmatpush2.msra.mxu0 0.0
          %2360 = vmatprep.subr.mxu0 0.0
          %2361 = vmatpush2.msra.mxu0 0.0
          %2362 = vmatprep.subr.mxu0 0.0
          %2363 = vmatpush2.msra.mxu0 0.0
          %2364 = vmatprep.subr.mxu0 0.0
          %2365 = vmatpush2.msra.mxu0 0.0
          %2366 = vmatprep.subr.mxu0 0.0
          %2367 = vmatpush2.msra.mxu0 0.0
          %2368 = vmatprep.subr.mxu0 0.0
          %2369 = vmatpush2.msra.mxu0 0.0
          %2370 = vmatprep.subr.mxu0 0.0
          %2371 = vmatpush2.msra.mxu0 0.0
          %2372 = vmatprep.subr.mxu0 0.0
          %2373 = vmatpush2.msra.mxu0 0.0
          %2374 = vmatprep.subr.mxu0 0.0
          %2375 = vmatpush2.msra.mxu0 0.0
          %2376 = vmatprep.subr.mxu0 0.0
          %2377 = vmatpush2.msra.mxu0 0.0
          %2378 = vmatprep.subr.mxu0 0.0
          %2379 = vmatpush2.msra.mxu0 0.0
          %2380 = vmatprep.subr.mxu0 0.0
          %2381 = vmatpush2.msra.mxu0 0.0
          %2382 = vmatprep.subr.mxu0 0.0
          %2383 = vmatpush2.msra.mxu0 0.0
          %2384 = vmatprep.subr.mxu0 0.0
          %2385 = vmatpush2.msra.mxu0 0.0
          %2386 = vmatprep.subr.mxu0 0.0
          %2387 = vmatpush2.msra.mxu0 0.0
          %2388 = vmatprep.mubr.f32.mxu0 0.0
          %2389 = vmatmul.mubr.f32.gmra.mxu0 %v2279
          %v2390 = vpop.f32.mrf.mxu0
          %v2391 = vadd.f32 %v2317, %v2390
          %v2392 = vpop.f32.mrf.mxu0
          %v2393 = vadd.f32 %v2321, %v2392
          %2394 = vdwg.mxu0
          %v2395 = vmax.f32 %v2391, 0.0
          %v2396 = vmax.f32 %v2393, 0.0
          %v2397 = vld [vmem:[#allocation17] sm:$0xff]
          %v2398 = vld [vmem:[#allocation17 + $0x8] sm:$0xff]
          %v2399 = vld [vmem:[#allocation17 + $0x10] sm:$0xff]
          %v2400 = vld [vmem:[#allocation17 + $0x18] sm:$0xff]
          %v2401 = vld [vmem:[#allocation17 + $0x20] sm:$0xff]
          %v2402 = vld [vmem:[#allocation17 + $0x28] sm:$0xff]
          %v2403 = vld [vmem:[#allocation17 + $0x30] sm:$0xff]
          %v2404 = vld [vmem:[#allocation17 + $0x38] sm:$0xff]
          %v2405 = vld [vmem:[#allocation17 + $0x40] sm:$0xff]
          %v2406 = vld [vmem:[#allocation17 + $0x48] sm:$0xff]
          %v2407 = vld [vmem:[#allocation17 + $0x50] sm:$0xff]
          %v2408 = vld [vmem:[#allocation17 + $0x58] sm:$0xff]
          %v2409 = vld [vmem:[#allocation17 + $0x60] sm:$0xff]
          %v2410 = vld [vmem:[#allocation17 + $0x68] sm:$0xff]
          %v2411 = vld [vmem:[#allocation17 + $0x70] sm:$0xff]
          %v2412 = vld [vmem:[#allocation17 + $0x78] sm:$0xff]
          %v2413 = vld [vmem:[#allocation17 + $0x80] sm:$0xff]
          %v2414 = vld [vmem:[#allocation17 + $0x88] sm:$0xff]
          %v2415 = vld [vmem:[#allocation17 + $0x90] sm:$0xff]
          %v2416 = vld [vmem:[#allocation17 + $0x98] sm:$0xff]
          %v2417 = vld [vmem:[#allocation17 + $0xa0] sm:$0xff]
          %v2418 = vld [vmem:[#allocation17 + $0xa8] sm:$0xff]
          %v2419 = vld [vmem:[#allocation17 + $0xb0] sm:$0xff]
          %v2420 = vld [vmem:[#allocation17 + $0xb8] sm:$0xff]
          %v2421 = vld [vmem:[#allocation17 + $0xc0] sm:$0xff]
          %v2422 = vld [vmem:[#allocation17 + $0xc8] sm:$0xff]
          %v2423 = vld [vmem:[#allocation17 + $0xd0] sm:$0xff]
          %v2424 = vld [vmem:[#allocation17 + $0xd8] sm:$0xff]
          %v2425 = vld [vmem:[#allocation17 + $0xe0] sm:$0xff]
          %v2426 = vld [vmem:[#allocation17 + $0xe8] sm:$0xff]
          %v2427 = vld [vmem:[#allocation17 + $0xf0] sm:$0xff]
          %v2428 = vld [vmem:[#allocation17 + $0xf8] sm:$0xff]
          %v2429 = vld [vmem:[%s12] sm:$0x1]
          %v2431 = vlaneseq
          %v2432 = vshrl.u32 %v2431, 7
          %v2433 = vsub.s32 0, %v2432
          %v2434 = vrot.slane %v2429, %v2433
          %2436 = vmatprep.subr.mxu0 0.0
          %2437 = vmatpush1.msra.mxu0 %v2412
          %2438 = vmatprep.subr.mxu0 0.0
          %2439 = vmatpush1.msra.mxu0 %v2411
          %2440 = vmatprep.subr.mxu0 0.0
          %2441 = vmatpush1.msra.mxu0 %v2410
          %2442 = vmatprep.subr.mxu0 0.0
          %2443 = vmatpush1.msra.mxu0 %v2409
          %2444 = vmatprep.subr.mxu0 0.0
          %2445 = vmatpush1.msra.mxu0 %v2408
          %2446 = vmatprep.subr.mxu0 0.0
          %2447 = vmatpush1.msra.mxu0 %v2407
          %2448 = vmatprep.subr.mxu0 0.0
          %2449 = vmatpush1.msra.mxu0 %v2406
          %2450 = vmatprep.subr.mxu0 0.0
          %2451 = vmatpush1.msra.mxu0 %v2405
          %2452 = vmatprep.subr.mxu0 0.0
          %2453 = vmatpush1.msra.mxu0 %v2404
          %2454 = vmatprep.subr.mxu0 0.0
          %2455 = vmatpush1.msra.mxu0 %v2403
          %2456 = vmatprep.subr.mxu0 0.0
          %2457 = vmatpush1.msra.mxu0 %v2402
          %2458 = vmatprep.subr.mxu0 0.0
          %2459 = vmatpush1.msra.mxu0 %v2401
          %2460 = vmatprep.subr.mxu0 0.0
          %2461 = vmatpush1.msra.mxu0 %v2400
          %2462 = vmatprep.subr.mxu0 0.0
          %2463 = vmatpush1.msra.mxu0 %v2399
          %2464 = vmatprep.subr.mxu0 0.0
          %2465 = vmatpush1.msra.mxu0 %v2398
          %2466 = vmatprep.subr.mxu0 0.0
          %2467 = vmatpush1.msra.mxu0 %v2397
          %2468 = vmatprep.subr.mxu0 0.0
          %2469 = vmatpush2.msra.mxu0 %v2428
          %2470 = vmatprep.subr.mxu0 0.0
          %2471 = vmatpush2.msra.mxu0 %v2427
          %2472 = vmatprep.subr.mxu0 0.0
          %2473 = vmatpush2.msra.mxu0 %v2426
          %2474 = vmatprep.subr.mxu0 0.0
          %2475 = vmatpush2.msra.mxu0 %v2425
          %2476 = vmatprep.subr.mxu0 0.0
          %2477 = vmatpush2.msra.mxu0 %v2424
          %2478 = vmatprep.subr.mxu0 0.0
          %2479 = vmatpush2.msra.mxu0 %v2423
          %2480 = vmatprep.subr.mxu0 0.0
          %2481 = vmatpush2.msra.mxu0 %v2422
          %2482 = vmatprep.subr.mxu0 0.0
          %2483 = vmatpush2.msra.mxu0 %v2421
          %2484 = vmatprep.subr.mxu0 0.0
          %2485 = vmatpush2.msra.mxu0 %v2420
          %2486 = vmatprep.subr.mxu0 0.0
          %2487 = vmatpush2.msra.mxu0 %v2419
          %2488 = vmatprep.subr.mxu0 0.0
          %2489 = vmatpush2.msra.mxu0 %v2418
          %2490 = vmatprep.subr.mxu0 0.0
          %2491 = vmatpush2.msra.mxu0 %v2417
          %2492 = vmatprep.subr.mxu0 0.0
          %2493 = vmatpush2.msra.mxu0 %v2416
          %2494 = vmatprep.subr.mxu0 0.0
          %2495 = vmatpush2.msra.mxu0 %v2415
          %2496 = vmatprep.subr.mxu0 0.0
          %2497 = vmatpush2.msra.mxu0 %v2414
          %2498 = vmatprep.subr.mxu0 0.0
          %2499 = vmatpush2.msra.mxu0 %v2413
          %2500 = vmatprep.mubr.f32.mxu0 %v2396
          %2501 = vmatmul.mubr.f32.gmra.mxu0 %v2395
          %v2502 = vpop.f32.mrf.mxu0
          %v2503 = vadd.f32 %v2434, %v2502
          %v2504 = vpop.f32.mrf.mxu0
          %2505 = vdwg.mxu0
          %v2506 = vadd.f32 %v2279, %v2503
          %v2507 = vld [vmem:[%s13] sm:$0x1]
          %v2508 = vld [vmem:[%s14] sm:$0x1]
          %2509 = vadd.xlane.f32.xlu0 %v2506
          %v2510 = vpop.xlane.xlu0 %2509
          %v2511 = vmul.f32 %v2510, %v2256
          %v2512 = vsub.f32 %v2506, %v2511
          %v2513 = vmul.f32 %v2512, %v2512
          %2514 = vadd.xlane.f32.xlu0 %v2513
          %v2515 = vpop.xlane.xlu0 %2514
          %v2516 = vmul.f32 %v2515, %v2256
          %v2517 = vadd.f32 %v2516, 1e-05
          %v2518 = vrsqrt.pop %v2517
          %v2519 = vmul.f32 %v2512, %v2518
          %v2521 = vlaneseq
          %v2522 = vshrl.u32 %v2521, 7
          %v2523 = vsub.s32 0, %v2522
          %v2524 = vrot.slane %v2507, %v2523
          %v2526 = vmul.f32 %v2519, %v2524
          %v2528 = vlaneseq
          %v2529 = vshrl.u32 %v2528, 7
          %v2530 = vsub.s32 0, %v2529
          %v2531 = vrot.slane %v2508, %v2530
          %v2533 = vadd.f32 %v2526, %v2531
          %2534 = vst [vmem:[%s668] sm:$0xff] %v2533
        $region116: #{tpu_custom_call.1} parent=79 // pred_fallthru
          _
        %s2535 = sand.u32 %s402, 1
        %s2536 = scalar_lea.sflag [#allocation8], %s2535
        %s2537 = sand.u32 %s402, 1
        %s2538 = smul.addr %s2537, 8
        %s2539 = scalar_lea.vmem [#allocation18], %s2538
        // Predicated region
        $region117: #{tpu_custom_call.1} parent=79 // pred_check
          %p2540 = pneg %p412
        $region118: #{tpu_custom_call.1} parent=79 // pred_check_branch
          %2542 = sbr.rel (%p2540) target = $region120
        $region119: #{tpu_custom_call.1} parent=79 // pred_region
          %s2544 = ssub.s32 128, 128
          %2545 = vsyncadd %s2536, %s2544
          %s2546 = sadd.s32 %s43, %s42
          %s2547 = smul.addr %s2546, 128
          %s2548 = scalar_lea.hbm %s15, %s2547
          %s2550 = sshll.u32 %s2539, 4
          %s2551 = int_to_ptr.vmem [resolvable:$true] %s2550
          %2553 = dma.vmem_to_hbm [thread:$0]  %s2551, 128, %s2548, %s2536
        $region120: #{tpu_custom_call.1} parent=79 // pred_fallthru
          _
      $region80: #{tpu_custom_call.1} parent=5 // pred_fallthru
        _
      %p2554 = scmp.le.s32.totalorder 2, %s32
      // Predicated region
      $region121: #{tpu_custom_call.1} parent=5 // pred_check
        %p2555 = pneg %p2554
      $region122: #{tpu_custom_call.1} parent=5 // pred_check_branch
        %2557 = sbr.rel (%p2555) target = $region124
      $region123: #{tpu_custom_call.1} parent=5 // pred_region
        %s2558 = ssub.s32 %s32, 2
        // Predicated region
        $region125: #{tpu_custom_call.1} parent=123 // pred_check
          %p2559 = pneg %p418
        $region126: #{tpu_custom_call.1} parent=123 // pred_check_branch
          %2561 = sbr.rel (%p2559) target = $region128
        $region127: #{tpu_custom_call.1} parent=123 // pred_region
          %s2562 = sand.u32 %s403, 1
          %s2563 = scalar_lea.sflag [#allocation8], %s2562
          %s2564 = sand.u32 %s403, 1
          %s2565 = smul.addr %s2564, 8
          %s2566 = scalar_lea.vmem [#allocation18], %s2565
          %2567 = dma.done %s2563, 128
        $region128: #{tpu_custom_call.1} parent=123 // pred_fallthru
          _
      $region124: #{tpu_custom_call.1} parent=5 // pred_fallthru
        _
    $region6: #{tpu_custom_call.1} parent=1 // loop_footer
      %s36 = sadd.s32 1, %s32
    $region7: #{tpu_custom_call.1} parent=1 // loop_footer_branch
      %31 = sbr.rel target = $region3
    $region8: #{tpu_custom_call.1} parent=1 // loop_exit
      _
    %2568 = vsyncpa [#allocation7], 1
    %s2569 = scalar_lea.sflag [#allocation7], 1
    %2570 = vsyncpa %s2569, 1
    %2571 = vsyncpa [#allocation10], 1
    %s2572 = scalar_lea.sflag [#allocation10], 1
    %2573 = vsyncpa %s2572, 1
    %2574 = vsyncpa [#allocation13], 1
    %2575 = vsyncpa [#allocation16], 1
    %2576 = vsyncpa [#allocation8], 1
    %s2577 = scalar_lea.sflag [#allocation8], 1
    %2578 = vsyncpa %s2577, 1

// kernel: tpu_custom_call.1
$region0: #{tpu_custom_call.1}
  #allocation0 [shape = 'u32[]', space=smem, size = 0x4, offset = 0x4, fixed_abs, tag = 'smem constant byte address 0x4 - core index']
  #allocation1 [shape = 'u32[144,128]{1,0:T(1,128)}', space=vmem, size = 0x12000, scoped, tag = 'internal scratch']
  #allocation2 [shape = 'f32[4,8,32]{2,1,0:T(8,128)}', space=vmem, size = 0x4000, scoped, tag = 'scratch operand']
  #allocation3 [shape = 'f32[4,8,1]{2,1,0:T(8,128)}', space=vmem, size = 0x4000, scoped, tag = 'scratch operand']
  #allocation4 [shape = 'f32[4,8,1]{2,1,0:T(8,128)}', space=vmem, size = 0x4000, scoped, tag = 'scratch operand']
  #allocation5 [shape = 'f32[4,8,32]{2,1,0:T(8,128)}', space=vmem, size = 0x4000, scoped, tag = 'scratch operand']
  %s0 = inlined_call_operand.hbm [shape: f32[2,8,128], index: 0, kind: input, shape index: {}]
  %s1 = inlined_call_operand.hbm [shape: f32[2,8,128], index: 1, kind: input, shape index: {}]
  %s2 = inlined_call_operand.hbm [shape: f32[2,8,128], index: 2, kind: input, shape index: {}]
  %s3 = inlined_call_operand.hbm [shape: f32[128,128], index: 3, kind: input, shape index: {}]
  %s4 = inlined_call_operand.vmem [shape: f32[1,128], index: 4, kind: input, shape index: {}]
  %s5 = inlined_call_operand.hbm [shape: f32[128,128], index: 5, kind: input, shape index: {}]
  %s6 = inlined_call_operand.vmem [shape: f32[1,128], index: 6, kind: input, shape index: {}]
  %s7 = inlined_call_operand.vmem [shape: f32[1,128], index: 7, kind: input, shape index: {}]
  %s8 = inlined_call_operand.vmem [shape: f32[1,128], index: 8, kind: input, shape index: {}]
  %s9 = inlined_call_operand.hbm [shape: f32[128,256], index: 9, kind: input, shape index: {}]
  %s10 = inlined_call_operand.vmem [shape: f32[1,256], index: 10, kind: input, shape index: {}]
  %s11 = inlined_call_operand.hbm [shape: f32[256,128], index: 11, kind: input, shape index: {}]
  %s12 = inlined_call_operand.vmem [shape: f32[1,128], index: 12, kind: input, shape index: {}]
  %s13 = inlined_call_operand.vmem [shape: f32[1,128], index: 13, kind: input, shape index: {}]
  %s14 = inlined_call_operand.vmem [shape: f32[1,128], index: 14, kind: input, shape index: {}]
  %s15 = inlined_call_operand.hbm [shape: f32[2,8,128], index: 15, kind: output, shape index: {}]
  %s16 = sld [smem:[#allocation0]]
  $region129: #{tpu_custom_call.1} parent=0
    _
  %s18 = ssub.s32 1, %s16
  %s19 = scalar_select 0, %s18, %s16
  $region1: #{tpu_custom_call.1} parent=0
    #allocation6 [shape = 'u8[8192]{0}', space=vmem, size = 0x2000, scoped, tag = 'input window, operand 0']
    #allocation7 [shape = 's32[2]{0}', space=sflag, size = 0x8, scoped, tag = 'scoped memory for tpu_custom_call.1']
    #allocation8 [shape = 's32[2]{0}', space=sflag, size = 0x8, scoped, tag = 'scoped memory for tpu_custom_call.1']
    #allocation9 [shape = 'u8[8192]{0}', space=vmem, size = 0x2000, scoped, tag = 'input window, operand 1']
    #allocation10 [shape = 's32[2]{0}', space=sflag, size = 0x8, scoped, tag = 'scoped memory for tpu_custom_call.1']
    #allocation11 [shape = 'u8[8192]{0}', space=vmem, size = 0x2000, scoped, tag = 'input window, operand 2']
    #allocation12 [shape = 'u8[65536]{0}', space=vmem, size = 0x10000, scoped, tag = 'input window, operand 3, single buffered']
    #allocation13 [shape = 's32[1]{0}', space=sflag, size = 0x4, scoped, tag = 'scoped memory for tpu_custom_call.1']
    #allocation14 [shape = 'u8[65536]{0}', space=vmem, size = 0x10000, scoped, tag = 'input window, operand 5, single buffered']
    #allocation15 [shape = 'u8[131072]{0}', space=vmem, size = 0x20000, scoped, tag = 'input window, operand 9, single buffered']
    #allocation16 [shape = 's32[1]{0}', space=sflag, size = 0x4, scoped, tag = 'scoped memory for tpu_custom_call.1']
    #allocation17 [shape = 'u8[131072]{0}', space=vmem, size = 0x20000, scoped, tag = 'input window, operand 11, single buffered']
    #allocation18 [shape = 'u8[8192]{0}', space=vmem, size = 0x2000, scoped, tag = 'output window, operand 0']
    %20 = vsyncpa [#allocation7], 0
    %s21 = scalar_lea.sflag [#allocation7], 1
    %22 = vsyncpa %s21, 0
    %23 = vsyncpa [#allocation10], 0
    %s24 = scalar_lea.sflag [#allocation10], 1
    %25 = vsyncpa %s24, 0
    %26 = vsyncpa [#allocation13], 0
    %27 = vsyncpa [#allocation16], 0
    %28 = vsyncpa [#allocation8], 0
    %s29 = scalar_lea.sflag [#allocation8], 1
    %30 = vsyncpa %s29, 0
    loop: start=0, step=1, limit=4
    $region2: #{tpu_custom_call.1} parent=1 // loop_pre_header
      _
    $region3: #{tpu_custom_call.1} parent=1 // loop_header
      %s32 = sphi 0, %s36
      %p33 = scmp.ge.s32.totalorder %s32, 4
      %s39 = sphi 0, %s58
      %s40 = sphi 0, %s54
      %s41 = sphi 0, %s50
      %s42 = sphi 0, %s39
      %s43 = sphi 0, %s40
      %s44 = sphi 0, %s41
      %s45 = sphi 0, %s42
      %s46 = sphi 0, %s43
      %s47 = sphi 0, %s44
      %s63 = sphi 0, %s65
      %s66 = sphi 0, %s63
      %s67 = sphi 0, %s66
      %s83 = sphi 0, %s67
      %s91 = sphi 0, %s93
      %s94 = sphi 0, %s91
      %s95 = sphi 0, %s94
      %s111 = sphi 0, %s95
      %s119 = sphi 0, %s121
      %s122 = sphi 0, %s119
      %s123 = sphi 0, %s122
      %s139 = sphi 0, %s123
      %s143 = sphi 0, %s143
      %s145 = sphi 0, %s143
      %s146 = sphi 0, %s145
      %s160 = sphi 0, %s146
      %s164 = sphi 0, %s164
      %s166 = sphi 0, %s164
      %s167 = sphi 0, %s166
      %s181 = sphi 0, %s167
      %s185 = sphi 0, %s185
      %s187 = sphi 0, %s185
      %s188 = sphi 0, %s187
      %s202 = sphi 0, %s188
      %s206 = sphi 0, %s206
      %s208 = sphi 0, %s206
      %s209 = sphi 0, %s208
      %s223 = sphi 0, %s209
      %s227 = sphi 0, %s227
      %s229 = sphi 0, %s227
      %s230 = sphi 0, %s229
      %s244 = sphi 0, %s230
      %s248 = sphi 0, %s248
      %s250 = sphi 0, %s248
      %s251 = sphi 0, %s250
      %s265 = sphi 0, %s251
      %s269 = sphi 0, %s269
      %s271 = sphi 0, %s269
      %s272 = sphi 0, %s271
      %s286 = sphi 0, %s272
      %s290 = sphi 0, %s290
      %s292 = sphi 0, %s290
      %s293 = sphi 0, %s292
      %s307 = sphi 0, %s293
      %s311 = sphi 0, %s311
      %s313 = sphi 0, %s311
      %s314 = sphi 0, %s313
      %s328 = sphi 0, %s314
      %s332 = sphi 0, %s332
      %s334 = sphi 0, %s332
      %s335 = sphi 0, %s334
      %s349 = sphi 0, %s335
      %s353 = sphi 0, %s353
      %s355 = sphi 0, %s353
      %s356 = sphi 0, %s355
      %s370 = sphi 0, %s356
      %s374 = sphi 0, %s374
      %s376 = sphi 0, %s374
      %s377 = sphi 0, %s376
      %s391 = sphi 0, %s377
      %s399 = sphi 0, %s401
      %s402 = sphi 0, %s399
      %s403 = sphi 0, %s402
      %s419 = sphi 0, %s403
    $region4: #{tpu_custom_call.1} parent=1 // loop_header_branch
      %35 = sbr.rel (%p33) target = $region8
    $region5: #{tpu_custom_call.1} parent=1 // loop_body
      %s37 = ssub.s32 %s32, 1
      %s38 = ssub.s32 %s32, 2
      %s48 = sadd.s32 1, %s41
      %p49 = scmp.ge.s32.totalorder %s48, 1
      %s50 = scalar_select %p49, 0, %s48
      %s51 = sadd.s32 1, %s40
      %s52 = scalar_select %p49, %s51, %s40
      %p53 = scmp.ge.s32.totalorder %s52, 1
      %s54 = scalar_select %p53, 0, %s52
      %s55 = sadd.s32 1, %s39
      %s56 = scalar_select %p53, %s55, %s39
      %p57 = scmp.ge.s32.totalorder %s56, 2
      %s58 = scalar_select %p57, 0, %s56
      %s59 = ssub.s32 %s39, %s58
      %s60 = ssub.s32 %s40, %s54
      %s61 = sor.u32 %s59, %s60
      %p62 = scmp.eq.s32.totalorder %s61, 0
      %s64 = sadd.s32 %s63, 1
      %s65 = scalar_select %p62, %s63, %s64
      %p68 = pneg %p62
      %p69 = scmp.eq.s32.totalorder %s32, 1
      %p70 = por %p68, %p69
      %p71 = scmp.ne.s32.totalorder %s63, %s66
      %p72 = scmp.eq.s32.totalorder %s32, 0
      %p73 = por %p71, %p72
      %p74 = scmp.ne.s32.totalorder %s63, %s66
      %p75 = scmp.eq.s32.totalorder %s37, 1
      %p76 = por %p74, %p75
      %p77 = scmp.ne.s32.totalorder %s66, %s67
      %p78 = scmp.eq.s32.totalorder %s37, 0
      %p79 = por %p77, %p78
      %p80 = scmp.ne.s32.totalorder %s66, %s67
      %p81 = scmp.eq.s32.totalorder %s38, 1
      %p82 = por %p80, %p81
      %p84 = scmp.ne.s32.totalorder %s67, %s83
      %p85 = scmp.eq.s32.totalorder %s38, 0
      %p86 = por %p84, %p85
      %s87 = ssub.s32 %s39, %s58
      %s88 = ssub.s32 %s41, %s50
      %s89 = sor.u32 %s87, %s88
      %p90 = scmp.eq.s32.totalorder %s89, 0
      %s92 = sadd.s32 %s91, 1
      %s93 = scalar_select %p90, %s91, %s92
      %p96 = pneg %p90
      %p97 = scmp.eq.s32.totalorder %s32, 1
      %p98 = por %p96, %p97
      %p99 = scmp.ne.s32.totalorder %s91, %s94
      %p100 = scmp.eq.s32.totalorder %s32, 0
      %p101 = por %p99, %p100
      %p102 = scmp.ne.s32.totalorder %s91, %s94
      %p103 = scmp.eq.s32.totalorder %s37, 1
      %p104 = por %p102, %p103
      %p105 = scmp.ne.s32.totalorder %s94, %s95
      %p106 = scmp.eq.s32.totalorder %s37, 0
      %p107 = por %p105, %p106
      %p108 = scmp.ne.s32.totalorder %s94, %s95
      %p109 = scmp.eq.s32.totalorder %s38, 1
      %p110 = por %p108, %p109
      %p112 = scmp.ne.s32.totalorder %s95, %s111
      %p113 = scmp.eq.s32.totalorder %s38, 0
      %p114 = por %p112, %p113
      %s115 = ssub.s32 %s39, %s58
      %s116 = ssub.s32 %s41, %s50
      %s117 = sor.u32 %s115, %s116
      %p118 = scmp.eq.s32.totalorder %s117, 0
      %s120 = sadd.s32 %s119, 1
      %s121 = scalar_select %p118, %s119, %s120
      %p124 = pneg %p118
      %p125 = scmp.eq.s32.totalorder %s32, 1
      %p126 = por %p124, %p125
      %p127 = scmp.ne.s32.totalorder %s119, %s122
      %p128 = scmp.eq.s32.totalorder %s32, 0
      %p129 = por %p127, %p128
      %p130 = scmp.ne.s32.totalorder %s119, %s122
      %p131 = scmp.eq.s32.totalorder %s37, 1
      %p132 = por %p130, %p131
      %p133 = scmp.ne.s32.totalorder %s122, %s123
      %p134 = scmp.eq.s32.totalorder %s37, 0
      %p135 = por %p133, %p134
      %p136 = scmp.ne.s32.totalorder %s122, %s123
      %p137 = scmp.eq.s32.totalorder %s38, 1
      %p138 = por %p136, %p137
      %p140 = scmp.ne.s32.totalorder %s123, %s139
      %p141 = scmp.eq.s32.totalorder %s38, 0
      %p142 = por %p140, %p141
      %s144 = sadd.s32 %s143, 1
      %p147 = scmp.eq.s32.totalorder %s32, 1
      %p148 = scmp.ne.s32.totalorder %s143, %s145
      %p149 = scmp.eq.s32.totalorder %s32, 0
      %p150 = por %p148, %p149
      %p151 = scmp.ne.s32.totalorder %s143, %s145
      %p152 = scmp.eq.s32.totalorder %s37, 1
      %p153 = por %p151, %p152
      %p154 = scmp.ne.s32.totalorder %s145, %s146
      %p155 = scmp.eq.s32.totalorder %s37, 0
      %p156 = por %p154, %p155
      %p157 = scmp.ne.s32.totalorder %s145, %s146
      %p158 = scmp.eq.s32.totalorder %s38, 1
      %p159 = por %p157, %p158
      %p161 = scmp.ne.s32.totalorder %s146, %s160
      %p162 = scmp.eq.s32.totalorder %s38, 0
      %p163 = por %p161, %p162
      %s165 = sadd.s32 %s164, 1
      %p168 = scmp.eq.s32.totalorder %s32, 1
      %p169 = scmp.ne.s32.totalorder %s164, %s166
      %p170 = scmp.eq.s32.totalorder %s32, 0
      %p171 = por %p169, %p170
      %p172 = scmp.ne.s32.totalorder %s164, %s166
      %p173 = scmp.eq.s32.totalorder %s37, 1
      %p174 = por %p172, %p173
      %p175 = scmp.ne.s32.totalorder %s166, %s167
      %p176 = scmp.eq.s32.totalorder %s37, 0
      %p177 = por %p175, %p176
      %p178 = scmp.ne.s32.totalorder %s166, %s167
      %p179 = scmp.eq.s32.totalorder %s38, 1
      %p180 = por %p178, %p179
      %p182 = scmp.ne.s32.totalorder %s167, %s181
      %p183 = scmp.eq.s32.totalorder %s38, 0
      %p184 = por %p182, %p183
      %s186 = sadd.s32 %s185, 1
      %p189 = scmp.eq.s32.totalorder %s32, 1
      %p190 = scmp.ne.s32.totalorder %s185, %s187
      %p191 = scmp.eq.s32.totalorder %s32, 0
      %p192 = por %p190, %p191
      %p193 = scmp.ne.s32.totalorder %s185, %s187
      %p194 = scmp.eq.s32.totalorder %s37, 1
      %p195 = por %p193, %p194
      %p196 = scmp.ne.s32.totalorder %s187, %s188
      %p197 = scmp.eq.s32.totalorder %s37, 0
      %p198 = por %p196, %p197
      %p199 = scmp.ne.s32.totalorder %s187, %s188
      %p200 = scmp.eq.s32.totalorder %s38, 1
      %p201 = por %p199, %p200
      %p203 = scmp.ne.s32.totalorder %s188, %s202
      %p204 = scmp.eq.s32.totalorder %s38, 0
      %p205 = por %p203, %p204
      %s207 = sadd.s32 %s206, 1
      %p210 = scmp.eq.s32.totalorder %s32, 1
      %p211 = scmp.ne.s32.totalorder %s206, %s208
      %p212 = scmp.eq.s32.totalorder %s32, 0
      %p213 = por %p211, %p212
      %p214 = scmp.ne.s32.totalorder %s206, %s208
      %p215 = scmp.eq.s32.totalorder %s37, 1
      %p216 = por %p214, %p215
      %p217 = scmp.ne.s32.totalorder %s208, %s209
      %p218 = scmp.eq.s32.totalorder %s37, 0
      %p219 = por %p217, %p218
      %p220 = scmp.ne.s32.totalorder %s208, %s209
      %p221 = scmp.eq.s32.totalorder %s38, 1
      %p222 = por %p220, %p221
      %p224 = scmp.ne.s32.totalorder %s209, %s223
      %p225 = scmp.eq.s32.totalorder %s38, 0
      %p226 = por %p224, %p225
      %s228 = sadd.s32 %s227, 1
      %p231 = scmp.eq.s32.totalorder %s32, 1
      %p232 = scmp.ne.s32.totalorder %s227, %s229
      %p233 = scmp.eq.s32.totalorder %s32, 0
      %p234 = por %p232, %p233
      %p235 = scmp.ne.s32.totalorder %s227, %s229
      %p236 = scmp.eq.s32.totalorder %s37, 1
      %p237 = por %p235, %p236
      %p238 = scmp.ne.s32.totalorder %s229, %s230
      %p239 = scmp.eq.s32.totalorder %s37, 0
      %p240 = por %p238, %p239
      %p241 = scmp.ne.s32.totalorder %s229, %s230
      %p242 = scmp.eq.s32.totalorder %s38, 1
      %p243 = por %p241, %p242
      %p245 = scmp.ne.s32.totalorder %s230, %s244
      %p246 = scmp.eq.s32.totalorder %s38, 0
      %p247 = por %p245, %p246
      %s249 = sadd.s32 %s248, 1
      %p252 = scmp.eq.s32.totalorder %s32, 1
      %p253 = scmp.ne.s32.totalorder %s248, %s250
      %p254 = scmp.eq.s32.totalorder %s32, 0
      %p255 = por %p253, %p254
      %p256 = scmp.ne.s32.totalorder %s248, %s250
      %p257 = scmp.eq.s32.totalorder %s37, 1
      %p258 = por %p256, %p257
      %p259 = scmp.ne.s32.totalorder %s250, %s251
      %p260 = scmp.eq.s32.totalorder %s37, 0
      %p261 = por %p259, %p260
      %p262 = scmp.ne.s32.totalorder %s250, %s251
      %p263 = scmp.eq.s32.totalorder %s38, 1
      %p264 = por %p262, %p263
      %p266 = scmp.ne.s32.totalorder %s251, %s265
      %p267 = scmp.eq.s32.totalorder %s38, 0
      %p268 = por %p266, %p267
      %s270 = sadd.s32 %s269, 1
      %p273 = scmp.eq.s32.totalorder %s32, 1
      %p274 = scmp.ne.s32.totalorder %s269, %s271
      %p275 = scmp.eq.s32.totalorder %s32, 0
      %p276 = por %p274, %p275
      %p277 = scmp.ne.s32.totalorder %s269, %s271
      %p278 = scmp.eq.s32.totalorder %s37, 1
      %p279 = por %p277, %p278
      %p280 = scmp.ne.s32.totalorder %s271, %s272
      %p281 = scmp.eq.s32.totalorder %s37, 0
      %p282 = por %p280, %p281
      %p283 = scmp.ne.s32.totalorder %s271, %s272
      %p284 = scmp.eq.s32.totalorder %s38, 1
      %p285 = por %p283, %p284
      %p287 = scmp.ne.s32.totalorder %s272, %s286
      %p288 = scmp.eq.s32.totalorder %s38, 0
      %p289 = por %p287, %p288
      %s291 = sadd.s32 %s290, 1
      %p294 = scmp.eq.s32.totalorder %s32, 1
      %p295 = scmp.ne.s32.totalorder %s290, %s292
      %p296 = scmp.eq.s32.totalorder %s32, 0
      %p297 = por %p295, %p296
      %p298 = scmp.ne.s32.totalorder %s290, %s292
      %p299 = scmp.eq.s32.totalorder %s37, 1
      %p300 = por %p298, %p299
      %p301 = scmp.ne.s32.totalorder %s292, %s293
      %p302 = scmp.eq.s32.totalorder %s37, 0
      %p303 = por %p301, %p302
      %p304 = scmp.ne.s32.totalorder %s292, %s293
      %p305 = scmp.eq.s32.totalorder %s38, 1
      %p306 = por %p304, %p305
      %p308 = scmp.ne.s32.totalorder %s293, %s307
      %p309 = scmp.eq.s32.totalorder %s38, 0
      %p310 = por %p308, %p309
      %s312 = sadd.s32 %s311, 1
      %p315 = scmp.eq.s32.totalorder %s32, 1
      %p316 = scmp.ne.s32.totalorder %s311, %s313
      %p317 = scmp.eq.s32.totalorder %s32, 0
      %p318 = por %p316, %p317
      %p319 = scmp.ne.s32.totalorder %s311, %s313
      %p320 = scmp.eq.s32.totalorder %s37, 1
      %p321 = por %p319, %p320
      %p322 = scmp.ne.s32.totalorder %s313, %s314
      %p323 = scmp.eq.s32.totalorder %s37, 0
      %p324 = por %p322, %p323
      %p325 = scmp.ne.s32.totalorder %s313, %s314
      %p326 = scmp.eq.s32.totalorder %s38, 1
      %p327 = por %p325, %p326
      %p329 = scmp.ne.s32.totalorder %s314, %s328
      %p330 = scmp.eq.s32.totalorder %s38, 0
      %p331 = por %p329, %p330
      %s333 = sadd.s32 %s332, 1
      %p336 = scmp.eq.s32.totalorder %s32, 1
      %p337 = scmp.ne.s32.totalorder %s332, %s334
      %p338 = scmp.eq.s32.totalorder %s32, 0
      %p339 = por %p337, %p338
      %p340 = scmp.ne.s32.totalorder %s332, %s334
      %p341 = scmp.eq.s32.totalorder %s37, 1
      %p342 = por %p340, %p341
      %p343 = scmp.ne.s32.totalorder %s334, %s335
      %p344 = scmp.eq.s32.totalorder %s37, 0
      %p345 = por %p343, %p344
      %p346 = scmp.ne.s32.totalorder %s334, %s335
      %p347 = scmp.eq.s32.totalorder %s38, 1
      %p348 = por %p346, %p347
      %p350 = scmp.ne.s32.totalorder %s335, %s349
      %p351 = scmp.eq.s32.totalorder %s38, 0
      %p352 = por %p350, %p351
      %s354 = sadd.s32 %s353, 1
      %p357 = scmp.eq.s32.totalorder %s32, 1
      %p358 = scmp.ne.s32.totalorder %s353, %s355
      %p359 = scmp.eq.s32.totalorder %s32, 0
      %p360 = por %p358, %p359
      %p361 = scmp.ne.s32.totalorder %s353, %s355
      %p362 = scmp.eq.s32.totalorder %s37, 1
      %p363 = por %p361, %p362
      %p364 = scmp.ne.s32.totalorder %s355, %s356
      %p365 = scmp.eq.s32.totalorder %s37, 0
      %p366 = por %p364, %p365
      %p367 = scmp.ne.s32.totalorder %s355, %s356
      %p368 = scmp.eq.s32.totalorder %s38, 1
      %p369 = por %p367, %p368
      %p371 = scmp.ne.s32.totalorder %s356, %s370
      %p372 = scmp.eq.s32.totalorder %s38, 0
      %p373 = por %p371, %p372
      %s375 = sadd.s32 %s374, 1
      %p378 = scmp.eq.s32.totalorder %s32, 1
      %p379 = scmp.ne.s32.totalorder %s374, %s376
      %p380 = scmp.eq.s32.totalorder %s32, 0
      %p381 = por %p379, %p380
      %p382 = scmp.ne.s32.totalorder %s374, %s376
      %p383 = scmp.eq.s32.totalorder %s37, 1
      %p384 = por %p382, %p383
      %p385 = scmp.ne.s32.totalorder %s376, %s377
      %p386 = scmp.eq.s32.totalorder %s37, 0
      %p387 = por %p385, %p386
      %p388 = scmp.ne.s32.totalorder %s376, %s377
      %p389 = scmp.eq.s32.totalorder %s38, 1
      %p390 = por %p388, %p389
      %p392 = scmp.ne.s32.totalorder %s377, %s391
      %p393 = scmp.eq.s32.totalorder %s38, 0
      %p394 = por %p392, %p393
      %s395 = ssub.s32 %s39, %s58
      %s396 = ssub.s32 %s40, %s54
      %s397 = sor.u32 %s395, %s396
      %p398 = scmp.eq.s32.totalorder %s397, 0
      %s400 = sadd.s32 %s399, 1
      %s401 = scalar_select %p398, %s399, %s400
      %p404 = pneg %p398
      %p405 = scmp.eq.s32.totalorder %s32, 1
      %p406 = por %p404, %p405
      %p407 = scmp.ne.s32.totalorder %s399, %s402
      %p408 = scmp.eq.s32.totalorder %s32, 0
      %p409 = por %p407, %p408
      %p410 = scmp.ne.s32.totalorder %s399, %s402
      %p411 = scmp.eq.s32.totalorder %s37, 1
      %p412 = por %p410, %p411
      %p413 = scmp.ne.s32.totalorder %s402, %s403
      %p414 = scmp.eq.s32.totalorder %s37, 0
      %p415 = por %p413, %p414
      %p416 = scmp.ne.s32.totalorder %s402, %s403
      %p417 = scmp.eq.s32.totalorder %s38, 1
      %p418 = por %p416, %p417
      %p420 = scmp.ne.s32.totalorder %s403, %s419
      %p421 = scmp.eq.s32.totalorder %s38, 0
      %p422 = por %p420, %p421
      %p423 = scmp.le.s32.totalorder 1, %s32
      %p424 = scmp.lt.s32.totalorder %s32, 3
      %p425 = pnand %p423, %p424
      %p426 = pneg %p425
      // Predicated region
      $region9: #{tpu_custom_call.1} parent=5 // pred_check
        _
      $region10: #{tpu_custom_call.1} parent=5 // pred_check_branch
        %428 = sbr.rel (%p425) target = $region12
      $region11: #{tpu_custom_call.1} parent=5 // pred_region
        %s429 = ssub.s32 %s32, 1
        // Predicated region
        $region13: #{tpu_custom_call.1} parent=11 // pred_check
          %p430 = pneg %p156
        $region14: #{tpu_custom_call.1} parent=11 // pred_check_branch
          %432 = sbr.rel (%p430) target = $region16
        $region15: #{tpu_custom_call.1} parent=11 // pred_region
          %s434 = ssub.s32 2048, 2048
          %435 = vsyncadd [#allocation13], %s434
          %s436 = sshll.u32 [#allocation12], 4
          %s437 = int_to_ptr.vmem [resolvable:$true] %s436
          %442 = dma.hbm_to_vmem [thread:$0]  %s3, 2048, %s437, [#allocation13], 128, 128, 8
        $region16: #{tpu_custom_call.1} parent=11 // pred_fallthru
          _
        // Predicated region
        $region17: #{tpu_custom_call.1} parent=11 // pred_check
          %p443 = pneg %p177
        $region18: #{tpu_custom_call.1} parent=11 // pred_check_branch
          %445 = sbr.rel (%p443) target = $region20
        $region19: #{tpu_custom_call.1} parent=11 // pred_region
          _
        $region20: #{tpu_custom_call.1} parent=11 // pred_fallthru
          _
        // Predicated region
        $region21: #{tpu_custom_call.1} parent=11 // pred_check
          %p446 = pneg %p198
        $region22: #{tpu_custom_call.1} parent=11 // pred_check_branch
          %448 = sbr.rel (%p446) target = $region24
        $region23: #{tpu_custom_call.1} parent=11 // pred_region
          %s450 = ssub.s32 2048, 2048
          %451 = vsyncadd [#allocation13], %s450
          %s452 = sshll.u32 [#allocation14], 4
          %s453 = int_to_ptr.vmem [resolvable:$true] %s452
          %458 = dma.hbm_to_vmem [thread:$0]  %s5, 2048, %s453, [#allocation13], 128, 128, 8
        $region24: #{tpu_custom_call.1} parent=11 // pred_fallthru
          _
        // Predicated region
        $region25: #{tpu_custom_call.1} parent=11 // pred_check
          %p459 = pneg %p219
        $region26: #{tpu_custom_call.1} parent=11 // pred_check_branch
          %461 = sbr.rel (%p459) target = $region28
        $region27: #{tpu_custom_call.1} parent=11 // pred_region
          _
        $region28: #{tpu_custom_call.1} parent=11 // pred_fallthru
          _
        // Predicated region
        $region29: #{tpu_custom_call.1} parent=11 // pred_check
          %p462 = pneg %p240
        $region30: #{tpu_custom_call.1} parent=11 // pred_check_branch
          %464 = sbr.rel (%p462) target = $region32
        $region31: #{tpu_custom_call.1} parent=11 // pred_region
          _
        $region32: #{tpu_custom_call.1} parent=11 // pred_fallthru
          _
        // Predicated region
        $region33: #{tpu_custom_call.1} parent=11 // pred_check
          %p465 = pneg %p261
        $region34: #{tpu_custom_call.1} parent=11 // pred_check_branch
          %467 = sbr.rel (%p465) target = $region36
        $region35: #{tpu_custom_call.1} parent=11 // pred_region
          _
        $region36: #{tpu_custom_call.1} parent=11 // pred_fallthru
          _
        // Predicated region
        $region37: #{tpu_custom_call.1} parent=11 // pred_check
          %p468 = pneg %p282
        $region38: #{tpu_custom_call.1} parent=11 // pred_check_branch
          %470 = sbr.rel (%p468) target = $region40
        $region39: #{tpu_custom_call.1} parent=11 // pred_region
          %s472 = ssub.s32 4096, 4096
          %473 = vsyncadd [#allocation16], %s472
          %s474 = sshll.u32 [#allocation15], 4
          %s475 = int_to_ptr.vmem [resolvable:$true] %s474
          %480 = dma.hbm_to_vmem [thread:$0]  %s9, 4096, %s475, [#allocation16], 256, 256, 16
        $region40: #{tpu_custom_call.1} parent=11 // pred_fallthru
          _
        // Predicated region
        $region41: #{tpu_custom_call.1} parent=11 // pred_check
          %p481 = pneg %p303
        $region42: #{tpu_custom_call.1} parent=11 // pred_check_branch
          %483 = sbr.rel (%p481) target = $region44
        $region43: #{tpu_custom_call.1} parent=11 // pred_region
          _
        $region44: #{tpu_custom_call.1} parent=11 // pred_fallthru
          _
        // Predicated region
        $region45: #{tpu_custom_call.1} parent=11 // pred_check
          %p484 = pneg %p324
        $region46: #{tpu_custom_call.1} parent=11 // pred_check_branch
          %486 = sbr.rel (%p484) target = $region48
        $region47: #{tpu_custom_call.1} parent=11 // pred_region
          %s488 = ssub.s32 4096, 4096
          %489 = vsyncadd [#allocation16], %s488
          %s490 = sshll.u32 [#allocation17], 4
          %s491 = int_to_ptr.vmem [resolvable:$true] %s490
          %496 = dma.hbm_to_vmem [thread:$0]  %s11, 4096, %s491, [#allocation16], 128, 128, 8
        $region48: #{tpu_custom_call.1} parent=11 // pred_fallthru
          _
        // Predicated region
        $region49: #{tpu_custom_call.1} parent=11 // pred_check
          %p497 = pneg %p345
        $region50: #{tpu_custom_call.1} parent=11 // pred_check_branch
          %499 = sbr.rel (%p497) target = $region52
        $region51: #{tpu_custom_call.1} parent=11 // pred_region
          _
        $region52: #{tpu_custom_call.1} parent=11 // pred_fallthru
          _
        // Predicated region
        $region53: #{tpu_custom_call.1} parent=11 // pred_check
          %p500 = pneg %p366
        $region54: #{tpu_custom_call.1} parent=11 // pred_check_branch
          %502 = sbr.rel (%p500) target = $region56
        $region55: #{tpu_custom_call.1} parent=11 // pred_region
          _
        $region56: #{tpu_custom_call.1} parent=11 // pred_fallthru
          _
        // Predicated region
        $region57: #{tpu_custom_call.1} parent=11 // pred_check
          %p503 = pneg %p387
        $region58: #{tpu_custom_call.1} parent=11 // pred_check_branch
          %505 = sbr.rel (%p503) target = $region60
        $region59: #{tpu_custom_call.1} parent=11 // pred_region
          _
        $region60: #{tpu_custom_call.1} parent=11 // pred_fallthru
          _
      $region12: #{tpu_custom_call.1} parent=5 // pred_fallthru
        _
      %p506 = scmp.lt.s32.totalorder %s32, 2
      // Predicated region
      $region61: #{tpu_custom_call.1} parent=5 // pred_check
        %p507 = pneg %p506
      $region62: #{tpu_custom_call.1} parent=5 // pred_check_branch
        %509 = sbr.rel (%p507) target = $region64
      $region63: #{tpu_custom_call.1} parent=5 // pred_region
        // Predicated region
        $region65: #{tpu_custom_call.1} parent=63 // pred_check
          %p510 = pneg %p73
        $region66: #{tpu_custom_call.1} parent=63 // pred_check_branch
          %512 = sbr.rel (%p510) target = $region68
        $region67: #{tpu_custom_call.1} parent=63 // pred_region
          %s513 = sand.u32 %s63, 1
          %s514 = scalar_lea.sflag [#allocation7], %s513
          %s515 = sand.u32 %s63, 1
          %s516 = smul.addr %s515, 8
          %s517 = scalar_lea.vmem [#allocation6], %s516
          %s519 = ssub.s32 128, 128
          %520 = vsyncadd %s514, %s519
          %s521 = sadd.s32 %s40, %s39
          %s522 = smul.addr %s521, 128
          %s523 = scalar_lea.hbm %s0, %s522
          %s525 = sshll.u32 %s517, 4
          %s526 = int_to_ptr.vmem [resolvable:$true] %s525
          %528 = dma.hbm_to_vmem [thread:$0]  %s523, 128, %s526, %s514
        $region68: #{tpu_custom_call.1} parent=63 // pred_fallthru
          _
        // Predicated region
        $region69: #{tpu_custom_call.1} parent=63 // pred_check
          %p529 = pneg %p101
        $region70: #{tpu_custom_call.1} parent=63 // pred_check_branch
          %531 = sbr.rel (%p529) target = $region72
        $region71: #{tpu_custom_call.1} parent=63 // pred_region
          %s532 = sand.u32 %s32, 1
          %s533 = scalar_lea.sflag [#allocation10], %s532
          %s534 = sand.u32 %s91, 1
          %s535 = smul.addr %s534, 8
          %s536 = scalar_lea.vmem [#allocation9], %s535
          %s538 = ssub.s32 128, 128
          %539 = vsyncadd %s533, %s538
          %s540 = sadd.s32 %s41, %s39
          %s541 = smul.addr %s540, 128
          %s542 = scalar_lea.hbm %s1, %s541
          %s544 = sshll.u32 %s536, 4
          %s545 = int_to_ptr.vmem [resolvable:$true] %s544
          %547 = dma.hbm_to_vmem [thread:$0]  %s542, 128, %s545, %s533
        $region72: #{tpu_custom_call.1} parent=63 // pred_fallthru
          _
        // Predicated region
        $region73: #{tpu_custom_call.1} parent=63 // pred_check
          %p548 = pneg %p129
        $region74: #{tpu_custom_call.1} parent=63 // pred_check_branch
          %550 = sbr.rel (%p548) target = $region76
        $region75: #{tpu_custom_call.1} parent=63 // pred_region
          %s551 = sand.u32 %s32, 1
          %s552 = scalar_lea.sflag [#allocation10], %s551
          %s553 = sand.u32 %s119, 1
          %s554 = smul.addr %s553, 8
          %s555 = scalar_lea.vmem [#allocation11], %s554
          %s557 = ssub.s32 128, 128
          %558 = vsyncadd %s552, %s557
          %s559 = sadd.s32 %s41, %s39
          %s560 = smul.addr %s559, 128
          %s561 = scalar_lea.hbm %s2, %s560
          %s563 = sshll.u32 %s555, 4
          %s564 = int_to_ptr.vmem [resolvable:$true] %s563
          %566 = dma.hbm_to_vmem [thread:$0]  %s561, 128, %s564, %s552
        $region76: #{tpu_custom_call.1} parent=63 // pred_fallthru
          _
      $region64: #{tpu_custom_call.1} parent=5 // pred_fallthru
        _
      %p567 = scmp.le.s32.totalorder 1, %s32
      %p568 = scmp.lt.s32.totalorder %s32, 3
      %p569 = pnand %p567, %p568
      %p570 = pneg %p569
      // Predicated region
      $region77: #{tpu_custom_call.1} parent=5 // pred_check
        _
      $region78: #{tpu_custom_call.1} parent=5 // pred_check_branch
        %572 = sbr.rel (%p569) target = $region80
      $region79: #{tpu_custom_call.1} parent=5 // pred_region
        %s573 = ssub.s32 %s32, 1
        %s574 = sand.u32 %s66, 1
        %s575 = scalar_lea.sflag [#allocation7], %s574
        %s576 = sand.u32 %s66, 1
        %s577 = smul.addr %s576, 8
        %s578 = scalar_lea.vmem [#allocation6], %s577
        // Predicated region
        $region81: #{tpu_custom_call.1} parent=79 // pred_check
          %p579 = pneg %p79
        $region82: #{tpu_custom_call.1} parent=79 // pred_check_branch
          %581 = sbr.rel (%p579) target = $region84
        $region83: #{tpu_custom_call.1} parent=79 // pred_region
          %582 = dma.done %s575, 128
        $region84: #{tpu_custom_call.1} parent=79 // pred_fallthru
          _
        %s583 = sand.u32 %s37, 1
        %s584 = scalar_lea.sflag [#allocation10], %s583
        %s585 = sand.u32 %s94, 1
        %s586 = smul.addr %s585, 8
        %s587 = scalar_lea.vmem [#allocation9], %s586
        // Predicated region
        $region85: #{tpu_custom_call.1} parent=79 // pred_check
          %p588 = pneg %p107
        $region86: #{tpu_custom_call.1} parent=79 // pred_check_branch
          %590 = sbr.rel (%p588) target = $region88
        $region87: #{tpu_custom_call.1} parent=79 // pred_region
          %591 = dma.done %s584, 128
        $region88: #{tpu_custom_call.1} parent=79 // pred_fallthru
          _
        %s592 = sand.u32 %s37, 1
        %s593 = scalar_lea.sflag [#allocation10], %s592
        %s594 = sand.u32 %s122, 1
        %s595 = smul.addr %s594, 8
        %s596 = scalar_lea.vmem [#allocation11], %s595
        // Predicated region
        $region89: #{tpu_custom_call.1} parent=79 // pred_check
          %p597 = pneg %p135
        $region90: #{tpu_custom_call.1} parent=79 // pred_check_branch
          %599 = sbr.rel (%p597) target = $region92
        $region91: #{tpu_custom_call.1} parent=79 // pred_region
          %600 = dma.done %s593, 128
        $region92: #{tpu_custom_call.1} parent=79 // pred_fallthru
          _
        // Predicated region
        $region93: #{tpu_custom_call.1} parent=79 // pred_check
          %p601 = pneg %p156
        $region94: #{tpu_custom_call.1} parent=79 // pred_check_branch
          %603 = sbr.rel (%p601) target = $region96
        $region95: #{tpu_custom_call.1} parent=79 // pred_region
          %604 = dma.done [#allocation13], 2048
        $region96: #{tpu_custom_call.1} parent=79 // pred_fallthru
          _
        // Predicated region
        $region97: #{tpu_custom_call.1} parent=79 // pred_check
          %p605 = pneg %p198
        $region98: #{tpu_custom_call.1} parent=79 // pred_check_branch
          %607 = sbr.rel (%p605) target = $region100
        $region99: #{tpu_custom_call.1} parent=79 // pred_region
          %608 = dma.done [#allocation13], 2048
        $region100: #{tpu_custom_call.1} parent=79 // pred_fallthru
          _
        // Predicated region
        $region101: #{tpu_custom_call.1} parent=79 // pred_check
          %p609 = pneg %p282
        $region102: #{tpu_custom_call.1} parent=79 // pred_check_branch
          %611 = sbr.rel (%p609) target = $region104
        $region103: #{tpu_custom_call.1} parent=79 // pred_region
          %612 = dma.done [#allocation16], 4096
        $region104: #{tpu_custom_call.1} parent=79 // pred_fallthru
          _
        // Predicated region
        $region105: #{tpu_custom_call.1} parent=79 // pred_check
          %p613 = pneg %p324
        $region106: #{tpu_custom_call.1} parent=79 // pred_check_branch
          %615 = sbr.rel (%p613) target = $region108
        $region107: #{tpu_custom_call.1} parent=79 // pred_region
          %616 = dma.done [#allocation16], 4096
        $region108: #{tpu_custom_call.1} parent=79 // pred_fallthru
          _
        %s617 = sand.u32 %s66, 1
        %s618 = scalar_lea.sflag [#allocation7], %s617
        %s619 = sand.u32 %s66, 1
        %s620 = smul.addr %s619, 8
        %s621 = scalar_lea.vmem [#allocation6], %s620
        %p622 = pneg %p79
        %p623 = pneg %p76
        %s624 = sand.u32 %s37, 1
        %s625 = scalar_lea.sflag [#allocation10], %s624
        %s626 = sand.u32 %s94, 1
        %s627 = smul.addr %s626, 8
        %s628 = scalar_lea.vmem [#allocation9], %s627
        %p629 = pneg %p107
        %p630 = pneg %p104
        %s631 = sand.u32 %s37, 1
        %s632 = scalar_lea.sflag [#allocation10], %s631
        %s633 = sand.u32 %s122, 1
        %s634 = smul.addr %s633, 8
        %s635 = scalar_lea.vmem [#allocation11], %s634
        %p636 = pneg %p135
        %p637 = pneg %p132
        %p638 = pneg %p156
        %p639 = pneg %p153
        %p640 = pneg %p177
        %p641 = pneg %p174
        %p642 = pneg %p198
        %p643 = pneg %p195
        %p644 = pneg %p219
        %p645 = pneg %p216
        %p646 = pneg %p240
        %p647 = pneg %p237
        %p648 = pneg %p261
        %p649 = pneg %p258
        %p650 = pneg %p282
        %p651 = pneg %p279
        %p652 = pneg %p303
        %p653 = pneg %p300
        %p654 = pneg %p324
        %p655 = pneg %p321
        %p656 = pneg %p345
        %p657 = pneg %p342
        %p658 = pneg %p366
        %p659 = pneg %p363
        %p660 = pneg %p387
        %p661 = pneg %p384
        %p662 = pneg %p415
        %p663 = pneg %p412
        %s664 = sand.u32 %s402, 1
        %s665 = scalar_lea.sflag [#allocation8], %s664
        %s666 = sand.u32 %s402, 1
        %s667 = smul.addr %s666, 8
        %s668 = scalar_lea.vmem [#allocation18], %s667
        %p669 = scmp.eq.s32.totalorder %s44, 0
        // Predicated region
        $region109: #{tpu_custom_call.1} parent=79 // pred_check
          %p670 = pneg %p669
        $region110: #{tpu_custom_call.1} parent=79 // pred_check_branch
          %672 = sbr.rel (%p670) target = $region112
        $region111: #{tpu_custom_call.1} parent=79 // pred_region
          %v673 = vld [vmem:[%s578] sm:$0xff]
          %v674 = vld [vmem:[#allocation12] sm:$0xff]
          %v675 = vld [vmem:[#allocation12 + $0x8] sm:$0xff]
          %v676 = vld [vmem:[#allocation12 + $0x10] sm:$0xff]
          %v677 = vld [vmem:[#allocation12 + $0x18] sm:$0xff]
          %v678 = vld [vmem:[#allocation12 + $0x20] sm:$0xff]
          %v679 = vld [vmem:[#allocation12 + $0x28] sm:$0xff]
          %v680 = vld [vmem:[#allocation12 + $0x30] sm:$0xff]
          %v681 = vld [vmem:[#allocation12 + $0x38] sm:$0xff]
          %v682 = vld [vmem:[#allocation12 + $0x40] sm:$0xff]
          %v683 = vld [vmem:[#allocation12 + $0x48] sm:$0xff]
          %v684 = vld [vmem:[#allocation12 + $0x50] sm:$0xff]
          %v685 = vld [vmem:[#allocation12 + $0x58] sm:$0xff]
          %v686 = vld [vmem:[#allocation12 + $0x60] sm:$0xff]
          %v687 = vld [vmem:[#allocation12 + $0x68] sm:$0xff]
          %v688 = vld [vmem:[#allocation12 + $0x70] sm:$0xff]
          %v689 = vld [vmem:[#allocation12 + $0x78] sm:$0xff]
          %v690 = vld [vmem:[%s4] sm:$0x1]
          %v692 = vlaneseq
          %v693 = vshrl.u32 %v692, 7
          %v694 = vsub.s32 0, %v693
          %v695 = vrot.slane %v690, %v694
          %697 = vmatprep.subr.mxu0 0.0
          %698 = vmatpush1.msra.mxu0 %v689
          %699 = vmatprep.subr.mxu0 0.0
          %700 = vmatpush1.msra.mxu0 %v688
          %701 = vmatprep.subr.mxu0 0.0
          %702 = vmatpush1.msra.mxu0 %v687
          %703 = vmatprep.subr.mxu0 0.0
          %704 = vmatpush1.msra.mxu0 %v686
          %705 = vmatprep.subr.mxu0 0.0
          %706 = vmatpush1.msra.mxu0 %v685
          %707 = vmatprep.subr.mxu0 0.0
          %708 = vmatpush1.msra.mxu0 %v684
          %709 = vmatprep.subr.mxu0 0.0
          %710 = vmatpush1.msra.mxu0 %v683
          %711 = vmatprep.subr.mxu0 0.0
          %712 = vmatpush1.msra.mxu0 %v682
          %713 = vmatprep.subr.mxu0 0.0
          %714 = vmatpush1.msra.mxu0 %v681
          %715 = vmatprep.subr.mxu0 0.0
          %716 = vmatpush1.msra.mxu0 %v680
          %717 = vmatprep.subr.mxu0 0.0
          %718 = vmatpush1.msra.mxu0 %v679
          %719 = vmatprep.subr.mxu0 0.0
          %720 = vmatpush1.msra.mxu0 %v678
          %721 = vmatprep.subr.mxu0 0.0
          %722 = vmatpush1.msra.mxu0 %v677
          %723 = vmatprep.subr.mxu0 0.0
          %724 = vmatpush1.msra.mxu0 %v676
          %725 = vmatprep.subr.mxu0 0.0
          %726 = vmatpush1.msra.mxu0 %v675
          %727 = vmatprep.subr.mxu0 0.0
          %728 = vmatpush1.msra.mxu0 %v674
          %729 = vmatprep.subr.mxu0 0.0
          %730 = vmatpush2.msra.mxu0 0.0
          %731 = vmatprep.subr.mxu0 0.0
          %732 = vmatpush2.msra.mxu0 0.0
          %733 = vmatprep.subr.mxu0 0.0
          %734 = vmatpush2.msra.mxu0 0.0
          %735 = vmatprep.subr.mxu0 0.0
          %736 = vmatpush2.msra.mxu0 0.0
          %737 = vmatprep.subr.mxu0 0.0
          %738 = vmatpush2.msra.mxu0 0.0
          %739 = vmatprep.subr.mxu0 0.0
          %740 = vmatpush2.msra.mxu0 0.0
          %741 = vmatprep.subr.mxu0 0.0
          %742 = vmatpush2.msra.mxu0 0.0
          %743 = vmatprep.subr.mxu0 0.0
          %744 = vmatpush2.msra.mxu0 0.0
          %745 = vmatprep.subr.mxu0 0.0
          %746 = vmatpush2.msra.mxu0 0.0
          %747 = vmatprep.subr.mxu0 0.0
          %748 = vmatpush2.msra.mxu0 0.0
          %749 = vmatprep.subr.mxu0 0.0
          %750 = vmatpush2.msra.mxu0 0.0
          %751 = vmatprep.subr.mxu0 0.0
          %752 = vmatpush2.msra.mxu0 0.0
          %753 = vmatprep.subr.mxu0 0.0
          %754 = vmatpush2.msra.mxu0 0.0
          %755 = vmatprep.subr.mxu0 0.0
          %756 = vmatpush2.msra.mxu0 0.0
          %757 = vmatprep.subr.mxu0 0.0
          %758 = vmatpush2.msra.mxu0 0.0
          %759 = vmatprep.subr.mxu0 0.0
          %760 = vmatpush2.msra.mxu0 0.0
          %761 = vmatprep.mubr.f32.mxu0 0.0
          %762 = vmatmul.mubr.f32.gmra.mxu0 %v673
          %v763 = vpop.f32.mrf.mxu0
          %v764 = vadd.f32 %v695, %v763
          %v765 = vpop.f32.mrf.mxu0
          %766 = vdwg.mxu0
          %v767 = vmul.f32 %v764, 0.17677669
          %769 = vrot.lane.b32.xlu0 %v767, 96
          %v770 = vpop.permute.xlu0 %769
          %772 = vrot.lane.b32.xlu0 %v767, 64
          %v773 = vpop.permute.xlu0 %772
          %775 = vrot.lane.b32.xlu0 %v767, 32
          %v776 = vpop.permute.xlu0 %775
          %v778 = vcombine.low %v767, %v773
          %v779 = vcombine.high %v767, %v773
          %v781 = vunpack.c.l.s4 1983009808
          %v782 = vunpack.c.0.s8 %v781
          %v783 = vlaneseq
          %v784 = vshrl.u32 %v783, 7
          %v785 = vsub.s32 %v782, %v784
          %v786 = vrot.slane %v778, %v785
          %v788 = vunpack.c.l.s4 1983009808
          %v789 = vunpack.c.0.s8 %v788
          %v790 = vlaneseq
          %v791 = vshrl.u32 %v790, 7
          %v792 = vsub.s32 %v789, %v791
          %v793 = vrot.slane %v779, %v792
          %v794 = vcombine.low %v770, %v776
          %v795 = vcombine.high %v770, %v776
          %v797 = vunpack.c.l.s4 1983009808
          %v798 = vunpack.c.0.s8 %v797
          %v799 = vlaneseq
          %v800 = vshrl.u32 %v799, 7
          %v801 = vsub.s32 %v798, %v800
          %v802 = vrot.slane %v794, %v801
          %v804 = vunpack.c.l.s4 1983009808
          %v805 = vunpack.c.0.s8 %v804
          %v806 = vlaneseq
          %v807 = vshrl.u32 %v806, 7
          %v808 = vsub.s32 %v805, %v807
          %v809 = vrot.slane %v795, %v808
          %v810 = vcombine.low %v786, %v802
          %v811 = vcombine.high %v786, %v802
          %v813 = vunpack.c.l.s4 1934713408
          %v814 = vunpack.c.0.s8 %v813
          %v815 = vlaneseq
          %v816 = vshrl.u32 %v815, 7
          %v817 = vsub.s32 %v814, %v816
          %v818 = vrot.slane %v810, %v817
          %v820 = vunpack.c.l.s4 1934713408
          %v821 = vunpack.c.0.s8 %v820
          %v822 = vlaneseq
          %v823 = vshrl.u32 %v822, 7
          %v824 = vsub.s32 %v821, %v823
          %v825 = vrot.slane %v811, %v824
          %v826 = vcombine.low %v793, %v809
          %v827 = vcombine.high %v793, %v809
          %v829 = vunpack.c.l.s4 1934713408
          %v830 = vunpack.c.0.s8 %v829
          %v831 = vlaneseq
          %v832 = vshrl.u32 %v831, 7
          %v833 = vsub.s32 %v830, %v832
          %v834 = vrot.slane %v826, %v833
          %v836 = vunpack.c.l.s4 1934713408
          %v837 = vunpack.c.0.s8 %v836
          %v838 = vlaneseq
          %v839 = vshrl.u32 %v838, 7
          %v840 = vsub.s32 %v837, %v839
          %v841 = vrot.slane %v827, %v840
          %v842 = vcombine.high %v818, 0.0
          %v843 = vcombine.high %v825, 0.0
          %v844 = vcombine.high %v834, 0.0
          %v845 = vcombine.high %v841, 0.0
          %v846 = vcombine.low %v818, %v825
          %v848 = vunpack.c.l.s4 1983009808
          %v849 = vunpack.c.0.s8 %v848
          %v850 = vlaneseq
          %v851 = vshrl.u32 %v850, 7
          %v852 = vsub.s32 %v849, %v851
          %v853 = vrot.slane %v846, %v852
          %v854 = vcombine.low %v842, %v843
          %v856 = vunpack.c.l.s4 1983009808
          %v857 = vunpack.c.0.s8 %v856
          %v858 = vlaneseq
          %v859 = vshrl.u32 %v858, 7
          %v860 = vsub.s32 %v857, %v859
          %v861 = vrot.slane %v854, %v860
          %v862 = vcombine.low %v834, %v841
          %v864 = vunpack.c.l.s4 1983009808
          %v865 = vunpack.c.0.s8 %v864
          %v866 = vlaneseq
          %v867 = vshrl.u32 %v866, 7
          %v868 = vsub.s32 %v865, %v867
          %v869 = vrot.slane %v862, %v868
          %v870 = vcombine.low %v844, %v845
          %v872 = vunpack.c.l.s4 1983009808
          %v873 = vunpack.c.0.s8 %v872
          %v874 = vlaneseq
          %v875 = vshrl.u32 %v874, 7
          %v876 = vsub.s32 %v873, %v875
          %v877 = vrot.slane %v870, %v876
          %v878 = vcombine.low %v853, %v861
          %v879 = vcombine.high %v853, %v861
          %v881 = vunpack.c.l.s4 1934713408
          %v882 = vunpack.c.0.s8 %v881
          %v883 = vlaneseq
          %v884 = vshrl.u32 %v883, 7
          %v885 = vsub.s32 %v882, %v884
          %v886 = vrot.slane %v878, %v885
          %v888 = vunpack.c.l.s4 1934713408
          %v889 = vunpack.c.0.s8 %v888
          %v890 = vlaneseq
          %v891 = vshrl.u32 %v890, 7
          %v892 = vsub.s32 %v889, %v891
          %v893 = vrot.slane %v879, %v892
          %v894 = vcombine.low %v869, %v877
          %v895 = vcombine.high %v869, %v877
          %v897 = vunpack.c.l.s4 1934713408
          %v898 = vunpack.c.0.s8 %v897
          %v899 = vlaneseq
          %v900 = vshrl.u32 %v899, 7
          %v901 = vsub.s32 %v898, %v900
          %v902 = vrot.slane %v894, %v901
          %v904 = vunpack.c.l.s4 1934713408
          %v905 = vunpack.c.0.s8 %v904
          %v906 = vlaneseq
          %v907 = vshrl.u32 %v906, 7
          %v908 = vsub.s32 %v905, %v907
          %v909 = vrot.slane %v895, %v908
          %v910 = vcombine.low %v886, %v902
          %v911 = vcombine.high %v886, %v902
          %v912 = vcombine.low %v893, %v909
          %v913 = vcombine.high %v893, %v909
          %vm914 = vcmask 261120
          %915 = vst.msk [vmem:[#allocation2] sm:$0xff] %vm914, %v910
          %916 = vst.msk [vmem:[#allocation2 + $0x8] sm:$0xff] %vm914, %v911
          %917 = vst.msk [vmem:[#allocation2 + $0x10] sm:$0xff] %vm914, %v912
          %918 = vst.msk [vmem:[#allocation2 + $0x18] sm:$0xff] %vm914, %v913
          %vm919 = vcmask 7168
          %920 = vst.msk [vmem:[#allocation3] sm:$0xff] %vm919, -inf
          %921 = vst.msk [vmem:[#allocation3 + $0x8] sm:$0xff] %vm919, -inf
          %922 = vst.msk [vmem:[#allocation3 + $0x10] sm:$0xff] %vm919, -inf
          %923 = vst.msk [vmem:[#allocation3 + $0x18] sm:$0xff] %vm919, -inf
          %924 = vst.msk [vmem:[#allocation4] sm:$0xff] %vm919, 0.0
          %925 = vst.msk [vmem:[#allocation4 + $0x8] sm:$0xff] %vm919, 0.0
          %926 = vst.msk [vmem:[#allocation4 + $0x10] sm:$0xff] %vm919, 0.0
          %927 = vst.msk [vmem:[#allocation4 + $0x18] sm:$0xff] %vm919, 0.0
          %928 = vst.msk [vmem:[#allocation5] sm:$0xff] %vm914, 0.0
          %929 = vst.msk [vmem:[#allocation5 + $0x8] sm:$0xff] %vm914, 0.0
          %930 = vst.msk [vmem:[#allocation5 + $0x10] sm:$0xff] %vm914, 0.0
          %931 = vst.msk [vmem:[#allocation5 + $0x18] sm:$0xff] %vm914, 0.0
        $region112: #{tpu_custom_call.1} parent=79 // pred_fallthru
          _
        %v932 = vld [vmem:[%s587] sm:$0xff]
        %934 = vrot.lane.b32.xlu0 %v932, 96
        %v935 = vpop.permute.xlu0 %934
        %937 = vrot.lane.b32.xlu0 %v932, 64
        %v938 = vpop.permute.xlu0 %937
        %940 = vrot.lane.b32.xlu0 %v932, 32
        %v941 = vpop.permute.xlu0 %940
        %v943 = vcombine.low %v932, %v938
        %v944 = vcombine.high %v932, %v938
        %v946 = vunpack.c.l.s4 1983009808
        %v947 = vunpack.c.0.s8 %v946
        %v948 = vlaneseq
        %v949 = vshrl.u32 %v948, 7
        %v950 = vsub.s32 %v947, %v949
        %v951 = vrot.slane %v943, %v950
        %v953 = vunpack.c.l.s4 1983009808
        %v954 = vunpack.c.0.s8 %v953
        %v955 = vlaneseq
        %v956 = vshrl.u32 %v955, 7
        %v957 = vsub.s32 %v954, %v956
        %v958 = vrot.slane %v944, %v957
        %v959 = vcombine.low %v935, %v941
        %v960 = vcombine.high %v935, %v941
        %v962 = vunpack.c.l.s4 1983009808
        %v963 = vunpack.c.0.s8 %v962
        %v964 = vlaneseq
        %v965 = vshrl.u32 %v964, 7
        %v966 = vsub.s32 %v963, %v965
        %v967 = vrot.slane %v959, %v966
        %v969 = vunpack.c.l.s4 1983009808
        %v970 = vunpack.c.0.s8 %v969
        %v971 = vlaneseq
        %v972 = vshrl.u32 %v971, 7
        %v973 = vsub.s32 %v970, %v972
        %v974 = vrot.slane %v960, %v973
        %v975 = vcombine.low %v951, %v967
        %v976 = vcombine.high %v951, %v967
        %v978 = vunpack.c.l.s4 1934713408
        %v979 = vunpack.c.0.s8 %v978
        %v980 = vlaneseq
        %v981 = vshrl.u32 %v980, 7
        %v982 = vsub.s32 %v979, %v981
        %v983 = vrot.slane %v975, %v982
        %v985 = vunpack.c.l.s4 1934713408
        %v986 = vunpack.c.0.s8 %v985
        %v987 = vlaneseq
        %v988 = vshrl.u32 %v987, 7
        %v989 = vsub.s32 %v986, %v988
        %v990 = vrot.slane %v976, %v989
        %v991 = vcombine.low %v958, %v974
        %v992 = vcombine.high %v958, %v974
        %v994 = vunpack.c.l.s4 1934713408
        %v995 = vunpack.c.0.s8 %v994
        %v996 = vlaneseq
        %v997 = vshrl.u32 %v996, 7
        %v998 = vsub.s32 %v995, %v997
        %v999 = vrot.slane %v991, %v998
        %v1001 = vunpack.c.l.s4 1934713408
        %v1002 = vunpack.c.0.s8 %v1001
        %v1003 = vlaneseq
        %v1004 = vshrl.u32 %v1003, 7
        %v1005 = vsub.s32 %v1002, %v1004
        %v1006 = vrot.slane %v992, %v1005
        %v1007 = vcombine.high %v983, 0.0
        %v1008 = vcombine.high %v990, 0.0
        %v1009 = vcombine.high %v999, 0.0
        %v1010 = vcombine.high %v1006, 0.0
        %v1011 = vcombine.low %v983, %v990
        %v1013 = vunpack.c.l.s4 1983009808
        %v1014 = vunpack.c.0.s8 %v1013
        %v1015 = vlaneseq
        %v1016 = vshrl.u32 %v1015, 7
        %v1017 = vsub.s32 %v1014, %v1016
        %v1018 = vrot.slane %v1011, %v1017
        %v1019 = vcombine.low %v1007, %v1008
        %v1021 = vunpack.c.l.s4 1983009808
        %v1022 = vunpack.c.0.s8 %v1021
        %v1023 = vlaneseq
        %v1024 = vshrl.u32 %v1023, 7
        %v1025 = vsub.s32 %v1022, %v1024
        %v1026 = vrot.slane %v1019, %v1025
        %v1027 = vcombine.low %v999, %v1006
        %v1029 = vunpack.c.l.s4 1983009808
        %v1030 = vunpack.c.0.s8 %v1029
        %v1031 = vlaneseq
        %v1032 = vshrl.u32 %v1031, 7
        %v1033 = vsub.s32 %v1030, %v1032
        %v1034 = vrot.slane %v1027, %v1033
        %v1035 = vcombine.low %v1009, %v1010
        %v1037 = vunpack.c.l.s4 1983009808
        %v1038 = vunpack.c.0.s8 %v1037
        %v1039 = vlaneseq
        %v1040 = vshrl.u32 %v1039, 7
        %v1041 = vsub.s32 %v1038, %v1040
        %v1042 = vrot.slane %v1035, %v1041
        %v1043 = vcombine.low %v1018, %v1026
        %v1044 = vcombine.high %v1018, %v1026
        %v1046 = vunpack.c.l.s4 1934713408
        %v1047 = vunpack.c.0.s8 %v1046
        %v1048 = vlaneseq
        %v1049 = vshrl.u32 %v1048, 7
        %v1050 = vsub.s32 %v1047, %v1049
        %v1051 = vrot.slane %v1043, %v1050
        %v1053 = vunpack.c.l.s4 1934713408
        %v1054 = vunpack.c.0.s8 %v1053
        %v1055 = vlaneseq
        %v1056 = vshrl.u32 %v1055, 7
        %v1057 = vsub.s32 %v1054, %v1056
        %v1058 = vrot.slane %v1044, %v1057
        %v1059 = vcombine.low %v1034, %v1042
        %v1060 = vcombine.high %v1034, %v1042
        %v1062 = vunpack.c.l.s4 1934713408
        %v1063 = vunpack.c.0.s8 %v1062
        %v1064 = vlaneseq
        %v1065 = vshrl.u32 %v1064, 7
        %v1066 = vsub.s32 %v1063, %v1065
        %v1067 = vrot.slane %v1059, %v1066
        %v1069 = vunpack.c.l.s4 1934713408
        %v1070 = vunpack.c.0.s8 %v1069
        %v1071 = vlaneseq
        %v1072 = vshrl.u32 %v1071, 7
        %v1073 = vsub.s32 %v1070, %v1072
        %v1074 = vrot.slane %v1060, %v1073
        %v1075 = vcombine.low %v1051, %v1067
        %v1076 = vcombine.high %v1051, %v1067
        %v1077 = vcombine.low %v1058, %v1074
        %v1078 = vcombine.high %v1058, %v1074
        %v1079 = vld [vmem:[%s596] sm:$0xff]
        %1081 = vrot.lane.b32.xlu0 %v1079, 96
        %v1082 = vpop.permute.xlu0 %1081
        %1084 = vrot.lane.b32.xlu0 %v1079, 64
        %v1085 = vpop.permute.xlu0 %1084
        %1087 = vrot.lane.b32.xlu0 %v1079, 32
        %v1088 = vpop.permute.xlu0 %1087
        %v1090 = vcombine.low %v1079, %v1085
        %v1091 = vcombine.high %v1079, %v1085
        %v1093 = vunpack.c.l.s4 1983009808
        %v1094 = vunpack.c.0.s8 %v1093
        %v1095 = vlaneseq
        %v1096 = vshrl.u32 %v1095, 7
        %v1097 = vsub.s32 %v1094, %v1096
        %v1098 = vrot.slane %v1090, %v1097
        %v1100 = vunpack.c.l.s4 1983009808
        %v1101 = vunpack.c.0.s8 %v1100
        %v1102 = vlaneseq
        %v1103 = vshrl.u32 %v1102, 7
        %v1104 = vsub.s32 %v1101, %v1103
        %v1105 = vrot.slane %v1091, %v1104
        %v1106 = vcombine.low %v1082, %v1088
        %v1107 = vcombine.high %v1082, %v1088
        %v1109 = vunpack.c.l.s4 1983009808
        %v1110 = vunpack.c.0.s8 %v1109
        %v1111 = vlaneseq
        %v1112 = vshrl.u32 %v1111, 7
        %v1113 = vsub.s32 %v1110, %v1112
        %v1114 = vrot.slane %v1106, %v1113
        %v1116 = vunpack.c.l.s4 1983009808
        %v1117 = vunpack.c.0.s8 %v1116
        %v1118 = vlaneseq
        %v1119 = vshrl.u32 %v1118, 7
        %v1120 = vsub.s32 %v1117, %v1119
        %v1121 = vrot.slane %v1107, %v1120
        %v1122 = vcombine.low %v1098, %v1114
        %v1123 = vcombine.high %v1098, %v1114
        %v1125 = vunpack.c.l.s4 1934713408
        %v1126 = vunpack.c.0.s8 %v1125
        %v1127 = vlaneseq
        %v1128 = vshrl.u32 %v1127, 7
        %v1129 = vsub.s32 %v1126, %v1128
        %v1130 = vrot.slane %v1122, %v1129
        %v1132 = vunpack.c.l.s4 1934713408
        %v1133 = vunpack.c.0.s8 %v1132
        %v1134 = vlaneseq
        %v1135 = vshrl.u32 %v1134, 7
        %v1136 = vsub.s32 %v1133, %v1135
        %v1137 = vrot.slane %v1123, %v1136
        %v1138 = vcombine.low %v1105, %v1121
        %v1139 = vcombine.high %v1105, %v1121
        %v1141 = vunpack.c.l.s4 1934713408
        %v1142 = vunpack.c.0.s8 %v1141
        %v1143 = vlaneseq
        %v1144 = vshrl.u32 %v1143, 7
        %v1145 = vsub.s32 %v1142, %v1144
        %v1146 = vrot.slane %v1138, %v1145
        %v1148 = vunpack.c.l.s4 1934713408
        %v1149 = vunpack.c.0.s8 %v1148
        %v1150 = vlaneseq
        %v1151 = vshrl.u32 %v1150, 7
        %v1152 = vsub.s32 %v1149, %v1151
        %v1153 = vrot.slane %v1139, %v1152
        %v1154 = vcombine.high %v1130, 0.0
        %v1155 = vcombine.high %v1137, 0.0
        %v1156 = vcombine.high %v1146, 0.0
        %v1157 = vcombine.high %v1153, 0.0
        %v1158 = vcombine.low %v1130, %v1137
        %v1160 = vunpack.c.l.s4 1983009808
        %v1161 = vunpack.c.0.s8 %v1160
        %v1162 = vlaneseq
        %v1163 = vshrl.u32 %v1162, 7
        %v1164 = vsub.s32 %v1161, %v1163
        %v1165 = vrot.slane %v1158, %v1164
        %v1166 = vcombine.low %v1154, %v1155
        %v1168 = vunpack.c.l.s4 1983009808
        %v1169 = vunpack.c.0.s8 %v1168
        %v1170 = vlaneseq
        %v1171 = vshrl.u32 %v1170, 7
        %v1172 = vsub.s32 %v1169, %v1171
        %v1173 = vrot.slane %v1166, %v1172
        %v1174 = vcombine.low %v1146, %v1153
        %v1176 = vunpack.c.l.s4 1983009808
        %v1177 = vunpack.c.0.s8 %v1176
        %v1178 = vlaneseq
        %v1179 = vshrl.u32 %v1178, 7
        %v1180 = vsub.s32 %v1177, %v1179
        %v1181 = vrot.slane %v1174, %v1180
        %v1182 = vcombine.low %v1156, %v1157
        %v1184 = vunpack.c.l.s4 1983009808
        %v1185 = vunpack.c.0.s8 %v1184
        %v1186 = vlaneseq
        %v1187 = vshrl.u32 %v1186, 7
        %v1188 = vsub.s32 %v1185, %v1187
        %v1189 = vrot.slane %v1182, %v1188
        %v1190 = vcombine.low %v1165, %v1173
        %v1191 = vcombine.high %v1165, %v1173
        %v1193 = vunpack.c.l.s4 1934713408
        %v1194 = vunpack.c.0.s8 %v1193
        %v1195 = vlaneseq
        %v1196 = vshrl.u32 %v1195, 7
        %v1197 = vsub.s32 %v1194, %v1196
        %v1198 = vrot.slane %v1190, %v1197
        %v1200 = vunpack.c.l.s4 1934713408
        %v1201 = vunpack.c.0.s8 %v1200
        %v1202 = vlaneseq
        %v1203 = vshrl.u32 %v1202, 7
        %v1204 = vsub.s32 %v1201, %v1203
        %v1205 = vrot.slane %v1191, %v1204
        %v1206 = vcombine.low %v1181, %v1189
        %v1207 = vcombine.high %v1181, %v1189
        %v1209 = vunpack.c.l.s4 1934713408
        %v1210 = vunpack.c.0.s8 %v1209
        %v1211 = vlaneseq
        %v1212 = vshrl.u32 %v1211, 7
        %v1213 = vsub.s32 %v1210, %v1212
        %v1214 = vrot.slane %v1206, %v1213
        %v1216 = vunpack.c.l.s4 1934713408
        %v1217 = vunpack.c.0.s8 %v1216
        %v1218 = vlaneseq
        %v1219 = vshrl.u32 %v1218, 7
        %v1220 = vsub.s32 %v1217, %v1219
        %v1221 = vrot.slane %v1207, %v1220
        %v1222 = vcombine.low %v1198, %v1214
        %v1223 = vcombine.high %v1198, %v1214
        %v1224 = vcombine.low %v1205, %v1221
        %v1225 = vcombine.high %v1205, %v1221
        %v1226 = vld [vmem:[#allocation2] sm:$0xff]
        %v1227 = vld [vmem:[#allocation2 + $0x8] sm:$0xff]
        %v1228 = vld [vmem:[#allocation2 + $0x10] sm:$0xff]
        %v1229 = vld [vmem:[#allocation2 + $0x18] sm:$0xff]
        %vm1230 = vcmask 261120
        %v1232 = vsel %vm1230, %v1226, 0
        %v1235 = vsel %vm1230, %v1075, 0
        %1237 = vmatprep.subr.mxu0 0.0
        %1238 = vmatpush1.xpose.msra.mxu0 0.0
        %1239 = vmatprep.subr.mxu0 0.0
        %1240 = vmatpush1.xpose.msra.mxu0 0.0
        %1241 = vmatprep.subr.mxu0 0.0
        %1242 = vmatpush1.xpose.msra.mxu0 0.0
        %1243 = vmatprep.subr.mxu0 0.0
        %1244 = vmatpush1.xpose.msra.mxu0 0.0
        %1245 = vmatprep.subr.mxu0 0.0
        %1246 = vmatpush1.xpose.msra.mxu0 0.0
        %1247 = vmatprep.subr.mxu0 0.0
        %1248 = vmatpush1.xpose.msra.mxu0 0.0
        %1249 = vmatprep.subr.mxu0 0.0
        %1250 = vmatpush1.xpose.msra.mxu0 0.0
        %1251 = vmatprep.subr.mxu0 0.0
        %1252 = vmatpush1.xpose.msra.mxu0 0.0
        %1253 = vmatprep.subr.mxu0 0.0
        %1254 = vmatpush1.xpose.msra.mxu0 0.0
        %1255 = vmatprep.subr.mxu0 0.0
        %1256 = vmatpush1.xpose.msra.mxu0 0.0
        %1257 = vmatprep.subr.mxu0 0.0
        %1258 = vmatpush1.xpose.msra.mxu0 0.0
        %1259 = vmatprep.subr.mxu0 0.0
        %1260 = vmatpush1.xpose.msra.mxu0 0.0
        %1261 = vmatprep.subr.mxu0 0.0
        %1262 = vmatpush1.xpose.msra.mxu0 0.0
        %1263 = vmatprep.subr.mxu0 0.0
        %1264 = vmatpush1.xpose.msra.mxu0 0.0
        %1265 = vmatprep.subr.mxu0 0.0
        %1266 = vmatpush1.xpose.msra.mxu0 0.0
        %1267 = vmatprep.subr.mxu0 0.0
        %1268 = vmatpush1.xpose.msra.mxu0 %v1235
        %1269 = vmatprep.subr.mxu0 0.0
        %1270 = vmatpush2.xpose.msra.mxu0 0.0
        %1271 = vmatprep.subr.mxu0 0.0
        %1272 = vmatpush2.xpose.msra.mxu0 0.0
        %1273 = vmatprep.subr.mxu0 0.0
        %1274 = vmatpush2.xpose.msra.mxu0 0.0
        %1275 = vmatprep.subr.mxu0 0.0
        %1276 = vmatpush2.xpose.msra.mxu0 0.0
        %1277 = vmatprep.subr.mxu0 0.0
        %1278 = vmatpush2.xpose.msra.mxu0 0.0
        %1279 = vmatprep.subr.mxu0 0.0
        %1280 = vmatpush2.xpose.msra.mxu0 0.0
        %1281 = vmatprep.subr.mxu0 0.0
        %1282 = vmatpush2.xpose.msra.mxu0 0.0
        %1283 = vmatprep.subr.mxu0 0.0
        %1284 = vmatpush2.xpose.msra.mxu0 0.0
        %1285 = vmatprep.subr.mxu0 0.0
        %1286 = vmatpush2.xpose.msra.mxu0 0.0
        %1287 = vmatprep.subr.mxu0 0.0
        %1288 = vmatpush2.xpose.msra.mxu0 0.0
        %1289 = vmatprep.subr.mxu0 0.0
        %1290 = vmatpush2.xpose.msra.mxu0 0.0
        %1291 = vmatprep.subr.mxu0 0.0
        %1292 = vmatpush2.xpose.msra.mxu0 0.0
        %1293 = vmatprep.subr.mxu0 0.0
        %1294 = vmatpush2.xpose.msra.mxu0 0.0
        %1295 = vmatprep.subr.mxu0 0.0
        %1296 = vmatpush2.xpose.msra.mxu0 0.0
        %1297 = vmatprep.subr.mxu0 0.0
        %1298 = vmatpush2.xpose.msra.mxu0 0.0
        %1299 = vmatprep.subr.mxu0 0.0
        %1300 = vmatpush2.xpose.msra.mxu0 0.0
        %1301 = vmatprep.mubr.f32.mxu0 0.0
        %1302 = vmatmul.mubr.f32.gmra.mxu0 %v1232
        %v1303 = vpop.f32.mrf.mxu0
        %v1304 = vadd.f32 0.0, %v1303
        %v1305 = vpop.f32.mrf.mxu0
        %1306 = vdwg.mxu0
        %v1308 = vsel %vm1230, %v1227, 0
        %v1311 = vsel %vm1230, %v1076, 0
        %1313 = vmatprep.subr.mxu0 0.0
        %1314 = vmatpush1.xpose.msra.mxu0 0.0
        %1315 = vmatprep.subr.mxu0 0.0
        %1316 = vmatpush1.xpose.msra.mxu0 0.0
        %1317 = vmatprep.subr.mxu0 0.0
        %1318 = vmatpush1.xpose.msra.mxu0 0.0
        %1319 = vmatprep.subr.mxu0 0.0
        %1320 = vmatpush1.xpose.msra.mxu0 0.0
        %1321 = vmatprep.subr.mxu0 0.0
        %1322 = vmatpush1.xpose.msra.mxu0 0.0
        %1323 = vmatprep.subr.mxu0 0.0
        %1324 = vmatpush1.xpose.msra.mxu0 0.0
        %1325 = vmatprep.subr.mxu0 0.0
        %1326 = vmatpush1.xpose.msra.mxu0 0.0
        %1327 = vmatprep.subr.mxu0 0.0
        %1328 = vmatpush1.xpose.msra.mxu0 0.0
        %1329 = vmatprep.subr.mxu0 0.0
        %1330 = vmatpush1.xpose.msra.mxu0 0.0
        %1331 = vmatprep.subr.mxu0 0.0
        %1332 = vmatpush1.xpose.msra.mxu0 0.0
        %1333 = vmatprep.subr.mxu0 0.0
        %1334 = vmatpush1.xpose.msra.mxu0 0.0
        %1335 = vmatprep.subr.mxu0 0.0
        %1336 = vmatpush1.xpose.msra.mxu0 0.0
        %1337 = vmatprep.subr.mxu0 0.0
        %1338 = vmatpush1.xpose.msra.mxu0 0.0
        %1339 = vmatprep.subr.mxu0 0.0
        %1340 = vmatpush1.xpose.msra.mxu0 0.0
        %1341 = vmatprep.subr.mxu0 0.0
        %1342 = vmatpush1.xpose.msra.mxu0 0.0
        %1343 = vmatprep.subr.mxu0 0.0
        %1344 = vmatpush1.xpose.msra.mxu0 %v1311
        %1345 = vmatprep.subr.mxu0 0.0
        %1346 = vmatpush2.xpose.msra.mxu0 0.0
        %1347 = vmatprep.subr.mxu0 0.0
        %1348 = vmatpush2.xpose.msra.mxu0 0.0
        %1349 = vmatprep.subr.mxu0 0.0
        %1350 = vmatpush2.xpose.msra.mxu0 0.0
        %1351 = vmatprep.subr.mxu0 0.0
        %1352 = vmatpush2.xpose.msra.mxu0 0.0
        %1353 = vmatprep.subr.mxu0 0.0
        %1354 = vmatpush2.xpose.msra.mxu0 0.0
        %1355 = vmatprep.subr.mxu0 0.0
        %1356 = vmatpush2.xpose.msra.mxu0 0.0
        %1357 = vmatprep.subr.mxu0 0.0
        %1358 = vmatpush2.xpose.msra.mxu0 0.0
        %1359 = vmatprep.subr.mxu0 0.0
        %1360 = vmatpush2.xpose.msra.mxu0 0.0
        %1361 = vmatprep.subr.mxu0 0.0
        %1362 = vmatpush2.xpose.msra.mxu0 0.0
        %1363 = vmatprep.subr.mxu0 0.0
        %1364 = vmatpush2.xpose.msra.mxu0 0.0
        %1365 = vmatprep.subr.mxu0 0.0
        %1366 = vmatpush2.xpose.msra.mxu0 0.0
        %1367 = vmatprep.subr.mxu0 0.0
        %1368 = vmatpush2.xpose.msra.mxu0 0.0
        %1369 = vmatprep.subr.mxu0 0.0
        %1370 = vmatpush2.xpose.msra.mxu0 0.0
        %1371 = vmatprep.subr.mxu0 0.0
        %1372 = vmatpush2.xpose.msra.mxu0 0.0
        %1373 = vmatprep.subr.mxu0 0.0
        %1374 = vmatpush2.xpose.msra.mxu0 0.0
        %1375 = vmatprep.subr.mxu0 0.0
        %1376 = vmatpush2.xpose.msra.mxu0 0.0
        %1377 = vmatprep.mubr.f32.mxu0 0.0
        %1378 = vmatmul.mubr.f32.gmra.mxu0 %v1308
        %v1379 = vpop.f32.mrf.mxu0
        %v1380 = vadd.f32 0.0, %v1379
        %v1381 = vpop.f32.mrf.mxu0
        %1382 = vdwg.mxu0
        %v1384 = vsel %vm1230, %v1228, 0
        %v1387 = vsel %vm1230, %v1077, 0
        %1389 = vmatprep.subr.mxu0 0.0
        %1390 = vmatpush1.xpose.msra.mxu0 0.0
        %1391 = vmatprep.subr.mxu0 0.0
        %1392 = vmatpush1.xpose.msra.mxu0 0.0
        %1393 = vmatprep.subr.mxu0 0.0
        %1394 = vmatpush1.xpose.msra.mxu0 0.0
        %1395 = vmatprep.subr.mxu0 0.0
        %1396 = vmatpush1.xpose.msra.mxu0 0.0
        %1397 = vmatprep.subr.mxu0 0.0
        %1398 = vmatpush1.xpose.msra.mxu0 0.0
        %1399 = vmatprep.subr.mxu0 0.0
        %1400 = vmatpush1.xpose.msra.mxu0 0.0
        %1401 = vmatprep.subr.mxu0 0.0
        %1402 = vmatpush1.xpose.msra.mxu0 0.0
        %1403 = vmatprep.subr.mxu0 0.0
        %1404 = vmatpush1.xpose.msra.mxu0 0.0
        %1405 = vmatprep.subr.mxu0 0.0
        %1406 = vmatpush1.xpose.msra.mxu0 0.0
        %1407 = vmatprep.subr.mxu0 0.0
        %1408 = vmatpush1.xpose.msra.mxu0 0.0
        %1409 = vmatprep.subr.mxu0 0.0
        %1410 = vmatpush1.xpose.msra.mxu0 0.0
        %1411 = vmatprep.subr.mxu0 0.0
        %1412 = vmatpush1.xpose.msra.mxu0 0.0
        %1413 = vmatprep.subr.mxu0 0.0
        %1414 = vmatpush1.xpose.msra.mxu0 0.0
        %1415 = vmatprep.subr.mxu0 0.0
        %1416 = vmatpush1.xpose.msra.mxu0 0.0
        %1417 = vmatprep.subr.mxu0 0.0
        %1418 = vmatpush1.xpose.msra.mxu0 0.0
        %1419 = vmatprep.subr.mxu0 0.0
        %1420 = vmatpush1.xpose.msra.mxu0 %v1387
        %1421 = vmatprep.subr.mxu0 0.0
        %1422 = vmatpush2.xpose.msra.mxu0 0.0
        %1423 = vmatprep.subr.mxu0 0.0
        %1424 = vmatpush2.xpose.msra.mxu0 0.0
        %1425 = vmatprep.subr.mxu0 0.0
        %1426 = vmatpush2.xpose.msra.mxu0 0.0
        %1427 = vmatprep.subr.mxu0 0.0
        %1428 = vmatpush2.xpose.msra.mxu0 0.0
        %1429 = vmatprep.subr.mxu0 0.0
        %1430 = vmatpush2.xpose.msra.mxu0 0.0
        %1431 = vmatprep.subr.mxu0 0.0
        %1432 = vmatpush2.xpose.msra.mxu0 0.0
        %1433 = vmatprep.subr.mxu0 0.0
        %1434 = vmatpush2.xpose.msra.mxu0 0.0
        %1435 = vmatprep.subr.mxu0 0.0
        %1436 = vmatpush2.xpose.msra.mxu0 0.0
        %1437 = vmatprep.subr.mxu0 0.0
        %1438 = vmatpush2.xpose.msra.mxu0 0.0
        %1439 = vmatprep.subr.mxu0 0.0
        %1440 = vmatpush2.xpose.msra.mxu0 0.0
        %1441 = vmatprep.subr.mxu0 0.0
        %1442 = vmatpush2.xpose.msra.mxu0 0.0
        %1443 = vmatprep.subr.mxu0 0.0
        %1444 = vmatpush2.xpose.msra.mxu0 0.0
        %1445 = vmatprep.subr.mxu0 0.0
        %1446 = vmatpush2.xpose.msra.mxu0 0.0
        %1447 = vmatprep.subr.mxu0 0.0
        %1448 = vmatpush2.xpose.msra.mxu0 0.0
        %1449 = vmatprep.subr.mxu0 0.0
        %1450 = vmatpush2.xpose.msra.mxu0 0.0
        %1451 = vmatprep.subr.mxu0 0.0
        %1452 = vmatpush2.xpose.msra.mxu0 0.0
        %1453 = vmatprep.mubr.f32.mxu0 0.0
        %1454 = vmatmul.mubr.f32.gmra.mxu0 %v1384
        %v1455 = vpop.f32.mrf.mxu0
        %v1456 = vadd.f32 0.0, %v1455
        %v1457 = vpop.f32.mrf.mxu0
        %1458 = vdwg.mxu0
        %v1460 = vsel %vm1230, %v1229, 0
        %v1463 = vsel %vm1230, %v1078, 0
        %1465 = vmatprep.subr.mxu0 0.0
        %1466 = vmatpush1.xpose.msra.mxu0 0.0
        %1467 = vmatprep.subr.mxu0 0.0
        %1468 = vmatpush1.xpose.msra.mxu0 0.0
        %1469 = vmatprep.subr.mxu0 0.0
        %1470 = vmatpush1.xpose.msra.mxu0 0.0
        %1471 = vmatprep.subr.mxu0 0.0
        %1472 = vmatpush1.xpose.msra.mxu0 0.0
        %1473 = vmatprep.subr.mxu0 0.0
        %1474 = vmatpush1.xpose.msra.mxu0 0.0
        %1475 = vmatprep.subr.mxu0 0.0
        %1476 = vmatpush1.xpose.msra.mxu0 0.0
        %1477 = vmatprep.subr.mxu0 0.0
        %1478 = vmatpush1.xpose.msra.mxu0 0.0
        %1479 = vmatprep.subr.mxu0 0.0
        %1480 = vmatpush1.xpose.msra.mxu0 0.0
        %1481 = vmatprep.subr.mxu0 0.0
        %1482 = vmatpush1.xpose.msra.mxu0 0.0
        %1483 = vmatprep.subr.mxu0 0.0
        %1484 = vmatpush1.xpose.msra.mxu0 0.0
        %1485 = vmatprep.subr.mxu0 0.0
        %1486 = vmatpush1.xpose.msra.mxu0 0.0
        %1487 = vmatprep.subr.mxu0 0.0
        %1488 = vmatpush1.xpose.msra.mxu0 0.0
        %1489 = vmatprep.subr.mxu0 0.0
        %1490 = vmatpush1.xpose.msra.mxu0 0.0
        %1491 = vmatprep.subr.mxu0 0.0
        %1492 = vmatpush1.xpose.msra.mxu0 0.0
        %1493 = vmatprep.subr.mxu0 0.0
        %1494 = vmatpush1.xpose.msra.mxu0 0.0
        %1495 = vmatprep.subr.mxu0 0.0
        %1496 = vmatpush1.xpose.msra.mxu0 %v1463
        %1497 = vmatprep.subr.mxu0 0.0
        %1498 = vmatpush2.xpose.msra.mxu0 0.0
        %1499 = vmatprep.subr.mxu0 0.0
        %1500 = vmatpush2.xpose.msra.mxu0 0.0
        %1501 = vmatprep.subr.mxu0 0.0
        %1502 = vmatpush2.xpose.msra.mxu0 0.0
        %1503 = vmatprep.subr.mxu0 0.0
        %1504 = vmatpush2.xpose.msra.mxu0 0.0
        %1505 = vmatprep.subr.mxu0 0.0
        %1506 = vmatpush2.xpose.msra.mxu0 0.0
        %1507 = vmatprep.subr.mxu0 0.0
        %1508 = vmatpush2.xpose.msra.mxu0 0.0
        %1509 = vmatprep.subr.mxu0 0.0
        %1510 = vmatpush2.xpose.msra.mxu0 0.0
        %1511 = vmatprep.subr.mxu0 0.0
        %1512 = vmatpush2.xpose.msra.mxu0 0.0
        %1513 = vmatprep.subr.mxu0 0.0
        %1514 = vmatpush2.xpose.msra.mxu0 0.0
        %1515 = vmatprep.subr.mxu0 0.0
        %1516 = vmatpush2.xpose.msra.mxu0 0.0
        %1517 = vmatprep.subr.mxu0 0.0
        %1518 = vmatpush2.xpose.msra.mxu0 0.0
        %1519 = vmatprep.subr.mxu0 0.0
        %1520 = vmatpush2.xpose.msra.mxu0 0.0
        %1521 = vmatprep.subr.mxu0 0.0
        %1522 = vmatpush2.xpose.msra.mxu0 0.0
        %1523 = vmatprep.subr.mxu0 0.0
        %1524 = vmatpush2.xpose.msra.mxu0 0.0
        %1525 = vmatprep.subr.mxu0 0.0
        %1526 = vmatpush2.xpose.msra.mxu0 0.0
        %1527 = vmatprep.subr.mxu0 0.0
        %1528 = vmatpush2.xpose.msra.mxu0 0.0
        %1529 = vmatprep.mubr.f32.mxu0 0.0
        %1530 = vmatmul.mubr.f32.gmra.mxu0 %v1460
        %v1531 = vpop.f32.mrf.mxu0
        %v1532 = vadd.f32 0.0, %v1531
        %v1533 = vpop.f32.mrf.mxu0
        %1534 = vdwg.mxu0
        %v1535 = vld [vmem:[#allocation3] sm:$0xff]
        %v1536 = vld [vmem:[#allocation3 + $0x8] sm:$0xff]
        %v1537 = vld [vmem:[#allocation3 + $0x10] sm:$0xff]
        %v1538 = vld [vmem:[#allocation3 + $0x18] sm:$0xff]
        %vm1539 = vcmask 64512
        %v1540 = vsel %vm1539, %v1304, -inf
        %1541 = vmax.xlane.f32.xlu0 %v1540
        %v1542 = vpop.xlane.xlu0 %1541
        %v1543 = vsel %vm1539, %v1380, -inf
        %1544 = vmax.xlane.f32.xlu0 %v1543
        %v1545 = vpop.xlane.xlu0 %1544
        %v1546 = vsel %vm1539, %v1456, -inf
        %1547 = vmax.xlane.f32.xlu0 %v1546
        %v1548 = vpop.xlane.xlu0 %1547
        %v1549 = vsel %vm1539, %v1532, -inf
        %1550 = vmax.xlane.f32.xlu0 %v1549
        %v1551 = vpop.xlane.xlu0 %1550
        %v1552 = vmax.f32 %v1535, %v1542
        %v1553 = vmax.f32 %v1536, %v1545
        %v1554 = vmax.f32 %v1537, %v1548
        %v1555 = vmax.f32 %v1538, %v1551
        %v1556 = vsub.f32 %v1535, %v1552
        %v1557 = vsub.f32 %v1536, %v1553
        %v1558 = vsub.f32 %v1537, %v1554
        %v1559 = vsub.f32 %v1538, %v1555
        %v1560 = vmul.f32 %v1556, 1.442695
        %v1561 = vpow.pop %v1560
        %v1562 = vmul.f32 %v1557, 1.442695
        %v1563 = vpow.pop %v1562
        %v1564 = vmul.f32 %v1558, 1.442695
        %v1565 = vpow.pop %v1564
        %v1566 = vmul.f32 %v1559, 1.442695
        %v1567 = vpow.pop %v1566
        %1569 = vset.pattern.permute.xlu0 0
        %1570 = vperm.xlu0 %1569, %v1552
        %v1571 = vpop.permute.xlu0 %1570
        %1574 = vset.pattern.permute.xlu0 0
        %1575 = vperm.xlu0 %1574, %v1553
        %v1576 = vpop.permute.xlu0 %1575
        %1579 = vset.pattern.permute.xlu0 0
        %1580 = vperm.xlu0 %1579, %v1554
        %v1581 = vpop.permute.xlu0 %1580
        %1584 = vset.pattern.permute.xlu0 0
        %1585 = vperm.xlu0 %1584, %v1555
        %v1586 = vpop.permute.xlu0 %1585
        %v1588 = vsub.f32 %v1304, %v1571
        %v1589 = vsub.f32 %v1380, %v1576
        %v1590 = vsub.f32 %v1456, %v1581
        %v1591 = vsub.f32 %v1532, %v1586
        %v1592 = vmul.f32 %v1588, 1.442695
        %v1593 = vpow.pop %v1592
        %v1594 = vmul.f32 %v1589, 1.442695
        %v1595 = vpow.pop %v1594
        %v1596 = vmul.f32 %v1590, 1.442695
        %v1597 = vpow.pop %v1596
        %v1598 = vmul.f32 %v1591, 1.442695
        %v1599 = vpow.pop %v1598
        %v1600 = vld [vmem:[#allocation4] sm:$0xff]
        %v1601 = vld [vmem:[#allocation4 + $0x8] sm:$0xff]
        %v1602 = vld [vmem:[#allocation4 + $0x10] sm:$0xff]
        %v1603 = vld [vmem:[#allocation4 + $0x18] sm:$0xff]
        %v1604 = vmul.f32 %v1561, %v1600
        %v1605 = vmul.f32 %v1563, %v1601
        %v1606 = vmul.f32 %v1565, %v1602
        %v1607 = vmul.f32 %v1567, %v1603
        %v1608 = vsel %vm1539, %v1593, 0.0
        %1609 = vadd.xlane.f32.xlu0 %v1608
        %v1610 = vpop.xlane.xlu0 %1609
        %v1611 = vsel %vm1539, %v1595, 0.0
        %1612 = vadd.xlane.f32.xlu0 %v1611
        %v1613 = vpop.xlane.xlu0 %1612
        %v1614 = vsel %vm1539, %v1597, 0.0
        %1615 = vadd.xlane.f32.xlu0 %v1614
        %v1616 = vpop.xlane.xlu0 %1615
        %v1617 = vsel %vm1539, %v1599, 0.0
        %1618 = vadd.xlane.f32.xlu0 %v1617
        %v1619 = vpop.xlane.xlu0 %1618
        %v1620 = vadd.f32 %v1604, %v1610
        %v1621 = vadd.f32 %v1605, %v1613
        %v1622 = vadd.f32 %v1606, %v1616
        %v1623 = vadd.f32 %v1607, %v1619
        %vm1624 = vcmask 7168
        %1625 = vst.msk [vmem:[#allocation4] sm:$0xff] %vm1624, %v1620
        %1626 = vst.msk [vmem:[#allocation4 + $0x8] sm:$0xff] %vm1624, %v1621
        %1627 = vst.msk [vmem:[#allocation4 + $0x10] sm:$0xff] %vm1624, %v1622
        %1628 = vst.msk [vmem:[#allocation4 + $0x18] sm:$0xff] %vm1624, %v1623
        %v1629 = vld [vmem:[#allocation5] sm:$0xff]
        %v1630 = vld [vmem:[#allocation5 + $0x8] sm:$0xff]
        %v1631 = vld [vmem:[#allocation5 + $0x10] sm:$0xff]
        %v1632 = vld [vmem:[#allocation5 + $0x18] sm:$0xff]
        %1634 = vset.pattern.permute.xlu0 0
        %1635 = vperm.xlu0 %1634, %v1561
        %v1636 = vpop.permute.xlu0 %1635
        %1639 = vset.pattern.permute.xlu0 0
        %1640 = vperm.xlu0 %1639, %v1563
        %v1641 = vpop.permute.xlu0 %1640
        %1644 = vset.pattern.permute.xlu0 0
        %1645 = vperm.xlu0 %1644, %v1565
        %v1646 = vpop.permute.xlu0 %1645
        %1649 = vset.pattern.permute.xlu0 0
        %1650 = vperm.xlu0 %1649, %v1567
        %v1651 = vpop.permute.xlu0 %1650
        %v1653 = vmul.f32 %v1636, %v1629
        %v1654 = vmul.f32 %v1641, %v1630
        %v1655 = vmul.f32 %v1646, %v1631
        %v1656 = vmul.f32 %v1651, %v1632
        %v1658 = vsel %vm1539, %v1593, 0
        %1660 = vmatprep.subr.mxu0 0.0
        %1661 = vmatpush1.msra.mxu0 0.0
        %1662 = vmatprep.subr.mxu0 0.0
        %1663 = vmatpush1.msra.mxu0 0.0
        %1664 = vmatprep.subr.mxu0 0.0
        %1665 = vmatpush1.msra.mxu0 0.0
        %1666 = vmatprep.subr.mxu0 0.0
        %1667 = vmatpush1.msra.mxu0 0.0
        %1668 = vmatprep.subr.mxu0 0.0
        %1669 = vmatpush1.msra.mxu0 0.0
        %1670 = vmatprep.subr.mxu0 0.0
        %1671 = vmatpush1.msra.mxu0 0.0
        %1672 = vmatprep.subr.mxu0 0.0
        %1673 = vmatpush1.msra.mxu0 0.0
        %1674 = vmatprep.subr.mxu0 0.0
        %1675 = vmatpush1.msra.mxu0 0.0
        %1676 = vmatprep.subr.mxu0 0.0
        %1677 = vmatpush1.msra.mxu0 0.0
        %1678 = vmatprep.subr.mxu0 0.0
        %1679 = vmatpush1.msra.mxu0 0.0
        %1680 = vmatprep.subr.mxu0 0.0
        %1681 = vmatpush1.msra.mxu0 0.0
        %1682 = vmatprep.subr.mxu0 0.0
        %1683 = vmatpush1.msra.mxu0 0.0
        %1684 = vmatprep.subr.mxu0 0.0
        %1685 = vmatpush1.msra.mxu0 0.0
        %1686 = vmatprep.subr.mxu0 0.0
        %1687 = vmatpush1.msra.mxu0 0.0
        %1688 = vmatprep.subr.mxu0 0.0
        %1689 = vmatpush1.msra.mxu0 0.0
        %1690 = vmatprep.subr.mxu0 0.0
        %1691 = vmatpush1.msra.mxu0 %v1222
        %1692 = vmatprep.subr.mxu0 0.0
        %1693 = vmatpush2.msra.mxu0 0.0
        %1694 = vmatprep.subr.mxu0 0.0
        %1695 = vmatpush2.msra.mxu0 0.0
        %1696 = vmatprep.subr.mxu0 0.0
        %1697 = vmatpush2.msra.mxu0 0.0
        %1698 = vmatprep.subr.mxu0 0.0
        %1699 = vmatpush2.msra.mxu0 0.0
        %1700 = vmatprep.subr.mxu0 0.0
        %1701 = vmatpush2.msra.mxu0 0.0
        %1702 = vmatprep.subr.mxu0 0.0
        %1703 = vmatpush2.msra.mxu0 0.0
        %1704 = vmatprep.subr.mxu0 0.0
        %1705 = vmatpush2.msra.mxu0 0.0
        %1706 = vmatprep.subr.mxu0 0.0
        %1707 = vmatpush2.msra.mxu0 0.0
        %1708 = vmatprep.subr.mxu0 0.0
        %1709 = vmatpush2.msra.mxu0 0.0
        %1710 = vmatprep.subr.mxu0 0.0
        %1711 = vmatpush2.msra.mxu0 0.0
        %1712 = vmatprep.subr.mxu0 0.0
        %1713 = vmatpush2.msra.mxu0 0.0
        %1714 = vmatprep.subr.mxu0 0.0
        %1715 = vmatpush2.msra.mxu0 0.0
        %1716 = vmatprep.subr.mxu0 0.0
        %1717 = vmatpush2.msra.mxu0 0.0
        %1718 = vmatprep.subr.mxu0 0.0
        %1719 = vmatpush2.msra.mxu0 0.0
        %1720 = vmatprep.subr.mxu0 0.0
        %1721 = vmatpush2.msra.mxu0 0.0
        %1722 = vmatprep.subr.mxu0 0.0
        %1723 = vmatpush2.msra.mxu0 0.0
        %1724 = vmatprep.mubr.f32.mxu0 0.0
        %1725 = vmatmul.mubr.f32.gmra.mxu0 %v1658
        %v1726 = vpop.f32.mrf.mxu0
        %v1727 = vadd.f32 0.0, %v1726
        %v1728 = vpop.f32.mrf.mxu0
        %1729 = vdwg.mxu0
        %v1731 = vsel %vm1539, %v1595, 0
        %1733 = vmatprep.subr.mxu0 0.0
        %1734 = vmatpush1.msra.mxu0 0.0
        %1735 = vmatprep.subr.mxu0 0.0
        %1736 = vmatpush1.msra.mxu0 0.0
        %1737 = vmatprep.subr.mxu0 0.0
        %1738 = vmatpush1.msra.mxu0 0.0
        %1739 = vmatprep.subr.mxu0 0.0
        %1740 = vmatpush1.msra.mxu0 0.0
        %1741 = vmatprep.subr.mxu0 0.0
        %1742 = vmatpush1.msra.mxu0 0.0
        %1743 = vmatprep.subr.mxu0 0.0
        %1744 = vmatpush1.msra.mxu0 0.0
        %1745 = vmatprep.subr.mxu0 0.0
        %1746 = vmatpush1.msra.mxu0 0.0
        %1747 = vmatprep.subr.mxu0 0.0
        %1748 = vmatpush1.msra.mxu0 0.0
        %1749 = vmatprep.subr.mxu0 0.0
        %1750 = vmatpush1.msra.mxu0 0.0
        %1751 = vmatprep.subr.mxu0 0.0
        %1752 = vmatpush1.msra.mxu0 0.0
        %1753 = vmatprep.subr.mxu0 0.0
        %1754 = vmatpush1.msra.mxu0 0.0
        %1755 = vmatprep.subr.mxu0 0.0
        %1756 = vmatpush1.msra.mxu0 0.0
        %1757 = vmatprep.subr.mxu0 0.0
        %1758 = vmatpush1.msra.mxu0 0.0
        %1759 = vmatprep.subr.mxu0 0.0
        %1760 = vmatpush1.msra.mxu0 0.0
        %1761 = vmatprep.subr.mxu0 0.0
        %1762 = vmatpush1.msra.mxu0 0.0
        %1763 = vmatprep.subr.mxu0 0.0
        %1764 = vmatpush1.msra.mxu0 %v1223
        %1765 = vmatprep.subr.mxu0 0.0
        %1766 = vmatpush2.msra.mxu0 0.0
        %1767 = vmatprep.subr.mxu0 0.0
        %1768 = vmatpush2.msra.mxu0 0.0
        %1769 = vmatprep.subr.mxu0 0.0
        %1770 = vmatpush2.msra.mxu0 0.0
        %1771 = vmatprep.subr.mxu0 0.0
        %1772 = vmatpush2.msra.mxu0 0.0
        %1773 = vmatprep.subr.mxu0 0.0
        %1774 = vmatpush2.msra.mxu0 0.0
        %1775 = vmatprep.subr.mxu0 0.0
        %1776 = vmatpush2.msra.mxu0 0.0
        %1777 = vmatprep.subr.mxu0 0.0
        %1778 = vmatpush2.msra.mxu0 0.0
        %1779 = vmatprep.subr.mxu0 0.0
        %1780 = vmatpush2.msra.mxu0 0.0
        %1781 = vmatprep.subr.mxu0 0.0
        %1782 = vmatpush2.msra.mxu0 0.0
        %1783 = vmatprep.subr.mxu0 0.0
        %1784 = vmatpush2.msra.mxu0 0.0
        %1785 = vmatprep.subr.mxu0 0.0
        %1786 = vmatpush2.msra.mxu0 0.0
        %1787 = vmatprep.subr.mxu0 0.0
        %1788 = vmatpush2.msra.mxu0 0.0
        %1789 = vmatprep.subr.mxu0 0.0
        %1790 = vmatpush2.msra.mxu0 0.0
        %1791 = vmatprep.subr.mxu0 0.0
        %1792 = vmatpush2.msra.mxu0 0.0
        %1793 = vmatprep.subr.mxu0 0.0
        %1794 = vmatpush2.msra.mxu0 0.0
        %1795 = vmatprep.subr.mxu0 0.0
        %1796 = vmatpush2.msra.mxu0 0.0
        %1797 = vmatprep.mubr.f32.mxu0 0.0
        %1798 = vmatmul.mubr.f32.gmra.mxu0 %v1731
        %v1799 = vpop.f32.mrf.mxu0
        %v1800 = vadd.f32 0.0, %v1799
        %v1801 = vpop.f32.mrf.mxu0
        %1802 = vdwg.mxu0
        %v1804 = vsel %vm1539, %v1597, 0
        %1806 = vmatprep.subr.mxu0 0.0
        %1807 = vmatpush1.msra.mxu0 0.0
        %1808 = vmatprep.subr.mxu0 0.0
        %1809 = vmatpush1.msra.mxu0 0.0
        %1810 = vmatprep.subr.mxu0 0.0
        %1811 = vmatpush1.msra.mxu0 0.0
        %1812 = vmatprep.subr.mxu0 0.0
        %1813 = vmatpush1.msra.mxu0 0.0
        %1814 = vmatprep.subr.mxu0 0.0
        %1815 = vmatpush1.msra.mxu0 0.0
        %1816 = vmatprep.subr.mxu0 0.0
        %1817 = vmatpush1.msra.mxu0 0.0
        %1818 = vmatprep.subr.mxu0 0.0
        %1819 = vmatpush1.msra.mxu0 0.0
        %1820 = vmatprep.subr.mxu0 0.0
        %1821 = vmatpush1.msra.mxu0 0.0
        %1822 = vmatprep.subr.mxu0 0.0
        %1823 = vmatpush1.msra.mxu0 0.0
        %1824 = vmatprep.subr.mxu0 0.0
        %1825 = vmatpush1.msra.mxu0 0.0
        %1826 = vmatprep.subr.mxu0 0.0
        %1827 = vmatpush1.msra.mxu0 0.0
        %1828 = vmatprep.subr.mxu0 0.0
        %1829 = vmatpush1.msra.mxu0 0.0
        %1830 = vmatprep.subr.mxu0 0.0
        %1831 = vmatpush1.msra.mxu0 0.0
        %1832 = vmatprep.subr.mxu0 0.0
        %1833 = vmatpush1.msra.mxu0 0.0
        %1834 = vmatprep.subr.mxu0 0.0
        %1835 = vmatpush1.msra.mxu0 0.0
        %1836 = vmatprep.subr.mxu0 0.0
        %1837 = vmatpush1.msra.mxu0 %v1224
        %1838 = vmatprep.subr.mxu0 0.0
        %1839 = vmatpush2.msra.mxu0 0.0
        %1840 = vmatprep.subr.mxu0 0.0
        %1841 = vmatpush2.msra.mxu0 0.0
        %1842 = vmatprep.subr.mxu0 0.0
        %1843 = vmatpush2.msra.mxu0 0.0
        %1844 = vmatprep.subr.mxu0 0.0
        %1845 = vmatpush2.msra.mxu0 0.0
        %1846 = vmatprep.subr.mxu0 0.0
        %1847 = vmatpush2.msra.mxu0 0.0
        %1848 = vmatprep.subr.mxu0 0.0
        %1849 = vmatpush2.msra.mxu0 0.0
        %1850 = vmatprep.subr.mxu0 0.0
        %1851 = vmatpush2.msra.mxu0 0.0
        %1852 = vmatprep.subr.mxu0 0.0
        %1853 = vmatpush2.msra.mxu0 0.0
        %1854 = vmatprep.subr.mxu0 0.0
        %1855 = vmatpush2.msra.mxu0 0.0
        %1856 = vmatprep.subr.mxu0 0.0
        %1857 = vmatpush2.msra.mxu0 0.0
        %1858 = vmatprep.subr.mxu0 0.0
        %1859 = vmatpush2.msra.mxu0 0.0
        %1860 = vmatprep.subr.mxu0 0.0
        %1861 = vmatpush2.msra.mxu0 0.0
        %1862 = vmatprep.subr.mxu0 0.0
        %1863 = vmatpush2.msra.mxu0 0.0
        %1864 = vmatprep.subr.mxu0 0.0
        %1865 = vmatpush2.msra.mxu0 0.0
        %1866 = vmatprep.subr.mxu0 0.0
        %1867 = vmatpush2.msra.mxu0 0.0
        %1868 = vmatprep.subr.mxu0 0.0
        %1869 = vmatpush2.msra.mxu0 0.0
        %1870 = vmatprep.mubr.f32.mxu0 0.0
        %1871 = vmatmul.mubr.f32.gmra.mxu0 %v1804
        %v1872 = vpop.f32.mrf.mxu0
        %v1873 = vadd.f32 0.0, %v1872
        %v1874 = vpop.f32.mrf.mxu0
        %1875 = vdwg.mxu0
        %v1877 = vsel %vm1539, %v1599, 0
        %1879 = vmatprep.subr.mxu0 0.0
        %1880 = vmatpush1.msra.mxu0 0.0
        %1881 = vmatprep.subr.mxu0 0.0
        %1882 = vmatpush1.msra.mxu0 0.0
        %1883 = vmatprep.subr.mxu0 0.0
        %1884 = vmatpush1.msra.mxu0 0.0
        %1885 = vmatprep.subr.mxu0 0.0
        %1886 = vmatpush1.msra.mxu0 0.0
        %1887 = vmatprep.subr.mxu0 0.0
        %1888 = vmatpush1.msra.mxu0 0.0
        %1889 = vmatprep.subr.mxu0 0.0
        %1890 = vmatpush1.msra.mxu0 0.0
        %1891 = vmatprep.subr.mxu0 0.0
        %1892 = vmatpush1.msra.mxu0 0.0
        %1893 = vmatprep.subr.mxu0 0.0
        %1894 = vmatpush1.msra.mxu0 0.0
        %1895 = vmatprep.subr.mxu0 0.0
        %1896 = vmatpush1.msra.mxu0 0.0
        %1897 = vmatprep.subr.mxu0 0.0
        %1898 = vmatpush1.msra.mxu0 0.0
        %1899 = vmatprep.subr.mxu0 0.0
        %1900 = vmatpush1.msra.mxu0 0.0
        %1901 = vmatprep.subr.mxu0 0.0
        %1902 = vmatpush1.msra.mxu0 0.0
        %1903 = vmatprep.subr.mxu0 0.0
        %1904 = vmatpush1.msra.mxu0 0.0
        %1905 = vmatprep.subr.mxu0 0.0
        %1906 = vmatpush1.msra.mxu0 0.0
        %1907 = vmatprep.subr.mxu0 0.0
        %1908 = vmatpush1.msra.mxu0 0.0
        %1909 = vmatprep.subr.mxu0 0.0
        %1910 = vmatpush1.msra.mxu0 %v1225
        %1911 = vmatprep.subr.mxu0 0.0
        %1912 = vmatpush2.msra.mxu0 0.0
        %1913 = vmatprep.subr.mxu0 0.0
        %1914 = vmatpush2.msra.mxu0 0.0
        %1915 = vmatprep.subr.mxu0 0.0
        %1916 = vmatpush2.msra.mxu0 0.0
        %1917 = vmatprep.subr.mxu0 0.0
        %1918 = vmatpush2.msra.mxu0 0.0
        %1919 = vmatprep.subr.mxu0 0.0
        %1920 = vmatpush2.msra.mxu0 0.0
        %1921 = vmatprep.subr.mxu0 0.0
        %1922 = vmatpush2.msra.mxu0 0.0
        %1923 = vmatprep.subr.mxu0 0.0
        %1924 = vmatpush2.msra.mxu0 0.0
        %1925 = vmatprep.subr.mxu0 0.0
        %1926 = vmatpush2.msra.mxu0 0.0
        %1927 = vmatprep.subr.mxu0 0.0
        %1928 = vmatpush2.msra.mxu0 0.0
        %1929 = vmatprep.subr.mxu0 0.0
        %1930 = vmatpush2.msra.mxu0 0.0
        %1931 = vmatprep.subr.mxu0 0.0
        %1932 = vmatpush2.msra.mxu0 0.0
        %1933 = vmatprep.subr.mxu0 0.0
        %1934 = vmatpush2.msra.mxu0 0.0
        %1935 = vmatprep.subr.mxu0 0.0
        %1936 = vmatpush2.msra.mxu0 0.0
        %1937 = vmatprep.subr.mxu0 0.0
        %1938 = vmatpush2.msra.mxu0 0.0
        %1939 = vmatprep.subr.mxu0 0.0
        %1940 = vmatpush2.msra.mxu0 0.0
        %1941 = vmatprep.subr.mxu0 0.0
        %1942 = vmatpush2.msra.mxu0 0.0
        %1943 = vmatprep.mubr.f32.mxu0 0.0
        %1944 = vmatmul.mubr.f32.gmra.mxu0 %v1877
        %v1945 = vpop.f32.mrf.mxu0
        %v1946 = vadd.f32 0.0, %v1945
        %v1947 = vpop.f32.mrf.mxu0
        %1948 = vdwg.mxu0
        %v1949 = vadd.f32 %v1653, %v1727
        %v1950 = vadd.f32 %v1654, %v1800
        %v1951 = vadd.f32 %v1655, %v1873
        %v1952 = vadd.f32 %v1656, %v1946
        %1953 = vst.msk [vmem:[#allocation5] sm:$0xff] %vm1230, %v1949
        %1954 = vst.msk [vmem:[#allocation5 + $0x8] sm:$0xff] %vm1230, %v1950
        %1955 = vst.msk [vmem:[#allocation5 + $0x10] sm:$0xff] %vm1230, %v1951
        %1956 = vst.msk [vmem:[#allocation5 + $0x18] sm:$0xff] %vm1230, %v1952
        %1957 = vst.msk [vmem:[#allocation3] sm:$0xff] %vm1624, %v1552
        %1958 = vst.msk [vmem:[#allocation3 + $0x8] sm:$0xff] %vm1624, %v1553
        %1959 = vst.msk [vmem:[#allocation3 + $0x10] sm:$0xff] %vm1624, %v1554
        %1960 = vst.msk [vmem:[#allocation3 + $0x18] sm:$0xff] %vm1624, %v1555
        // Predicated region
        $region113: #{tpu_custom_call.1} parent=79 // pred_check
          %p1961 = pneg %p669
        $region114: #{tpu_custom_call.1} parent=79 // pred_check_branch
          %1963 = sbr.rel (%p1961) target = $region116
        $region115: #{tpu_custom_call.1} parent=79 // pred_region
          %v1964 = vld [vmem:[#allocation5] sm:$0xff]
          %v1965 = vld [vmem:[#allocation5 + $0x8] sm:$0xff]
          %v1966 = vld [vmem:[#allocation5 + $0x10] sm:$0xff]
          %v1967 = vld [vmem:[#allocation5 + $0x18] sm:$0xff]
          %v1968 = vld [vmem:[#allocation4] sm:$0xff]
          %v1969 = vld [vmem:[#allocation4 + $0x8] sm:$0xff]
          %v1970 = vld [vmem:[#allocation4 + $0x10] sm:$0xff]
          %v1971 = vld [vmem:[#allocation4 + $0x18] sm:$0xff]
          %v1972 = vrcp.pop %v1968
          %v1973 = vmul.f32 1.0, %v1972
          %v1974 = vrcp.pop %v1969
          %v1975 = vmul.f32 1.0, %v1974
          %v1976 = vrcp.pop %v1970
          %v1977 = vmul.f32 1.0, %v1976
          %v1978 = vrcp.pop %v1971
          %v1979 = vmul.f32 1.0, %v1978
          %1981 = vset.pattern.permute.xlu0 0
          %1982 = vperm.xlu0 %1981, %v1973
          %v1983 = vpop.permute.xlu0 %1982
          %1986 = vset.pattern.permute.xlu0 0
          %1987 = vperm.xlu0 %1986, %v1975
          %v1988 = vpop.permute.xlu0 %1987
          %1991 = vset.pattern.permute.xlu0 0
          %1992 = vperm.xlu0 %1991, %v1977
          %v1993 = vpop.permute.xlu0 %1992
          %1996 = vset.pattern.permute.xlu0 0
          %1997 = vperm.xlu0 %1996, %v1979
          %v1998 = vpop.permute.xlu0 %1997
          %v2000 = vmul.f32 %v1964, %v1983
          %v2001 = vmul.f32 %v1965, %v1988
          %v2002 = vmul.f32 %v1966, %v1993
          %v2003 = vmul.f32 %v1967, %v1998
          %v2004 = vcombine.low %v2000, %v2002
          %v2005 = vcombine.high %v2000, %v2002
          %v2007 = vunpack.c.l.s4 1983009808
          %v2008 = vunpack.c.0.s8 %v2007
          %v2009 = vlaneseq
          %v2010 = vshrl.u32 %v2009, 7
          %v2011 = vsub.s32 %v2008, %v2010
          %v2012 = vrot.slane %v2004, %v2011
          %v2014 = vunpack.c.l.s4 1983009808
          %v2015 = vunpack.c.0.s8 %v2014
          %v2016 = vlaneseq
          %v2017 = vshrl.u32 %v2016, 7
          %v2018 = vsub.s32 %v2015, %v2017
          %v2019 = vrot.slane %v2005, %v2018
          %v2020 = vcombine.low %v2001, %v2003
          %v2021 = vcombine.high %v2001, %v2003
          %v2023 = vunpack.c.l.s4 1983009808
          %v2024 = vunpack.c.0.s8 %v2023
          %v2025 = vlaneseq
          %v2026 = vshrl.u32 %v2025, 7
          %v2027 = vsub.s32 %v2024, %v2026
          %v2028 = vrot.slane %v2020, %v2027
          %v2030 = vunpack.c.l.s4 1983009808
          %v2031 = vunpack.c.0.s8 %v2030
          %v2032 = vlaneseq
          %v2033 = vshrl.u32 %v2032, 7
          %v2034 = vsub.s32 %v2031, %v2033
          %v2035 = vrot.slane %v2021, %v2034
          %v2036 = vcombine.low %v2012, %v2028
          %v2037 = vcombine.high %v2012, %v2028
          %v2039 = vunpack.c.l.s4 1934713408
          %v2040 = vunpack.c.0.s8 %v2039
          %v2041 = vlaneseq
          %v2042 = vshrl.u32 %v2041, 7
          %v2043 = vsub.s32 %v2040, %v2042
          %v2044 = vrot.slane %v2036, %v2043
          %v2046 = vunpack.c.l.s4 1934713408
          %v2047 = vunpack.c.0.s8 %v2046
          %v2048 = vlaneseq
          %v2049 = vshrl.u32 %v2048, 7
          %v2050 = vsub.s32 %v2047, %v2049
          %v2051 = vrot.slane %v2037, %v2050
          %v2052 = vcombine.low %v2019, %v2035
          %v2053 = vcombine.high %v2019, %v2035
          %v2055 = vunpack.c.l.s4 1934713408
          %v2056 = vunpack.c.0.s8 %v2055
          %v2057 = vlaneseq
          %v2058 = vshrl.u32 %v2057, 7
          %v2059 = vsub.s32 %v2056, %v2058
          %v2060 = vrot.slane %v2052, %v2059
          %v2062 = vunpack.c.l.s4 1934713408
          %v2063 = vunpack.c.0.s8 %v2062
          %v2064 = vlaneseq
          %v2065 = vshrl.u32 %v2064, 7
          %v2066 = vsub.s32 %v2063, %v2065
          %v2067 = vrot.slane %v2053, %v2066
          %v2068 = vcombine.high %v2044, 0.0
          %v2069 = vcombine.high %v2051, 0.0
          %v2070 = vcombine.high %v2060, 0.0
          %v2071 = vcombine.high %v2067, 0.0
          %v2072 = vcombine.low %v2044, %v2051
          %v2074 = vunpack.c.l.s4 1983009808
          %v2075 = vunpack.c.0.s8 %v2074
          %v2076 = vlaneseq
          %v2077 = vshrl.u32 %v2076, 7
          %v2078 = vsub.s32 %v2075, %v2077
          %v2079 = vrot.slane %v2072, %v2078
          %v2080 = vcombine.low %v2068, %v2069
          %v2082 = vunpack.c.l.s4 1983009808
          %v2083 = vunpack.c.0.s8 %v2082
          %v2084 = vlaneseq
          %v2085 = vshrl.u32 %v2084, 7
          %v2086 = vsub.s32 %v2083, %v2085
          %v2087 = vrot.slane %v2080, %v2086
          %v2088 = vcombine.low %v2060, %v2067
          %v2090 = vunpack.c.l.s4 1983009808
          %v2091 = vunpack.c.0.s8 %v2090
          %v2092 = vlaneseq
          %v2093 = vshrl.u32 %v2092, 7
          %v2094 = vsub.s32 %v2091, %v2093
          %v2095 = vrot.slane %v2088, %v2094
          %v2096 = vcombine.low %v2070, %v2071
          %v2098 = vunpack.c.l.s4 1983009808
          %v2099 = vunpack.c.0.s8 %v2098
          %v2100 = vlaneseq
          %v2101 = vshrl.u32 %v2100, 7
          %v2102 = vsub.s32 %v2099, %v2101
          %v2103 = vrot.slane %v2096, %v2102
          %v2104 = vcombine.low %v2079, %v2087
          %v2105 = vcombine.high %v2079, %v2087
          %v2107 = vunpack.c.l.s4 1934713408
          %v2108 = vunpack.c.0.s8 %v2107
          %v2109 = vlaneseq
          %v2110 = vshrl.u32 %v2109, 7
          %v2111 = vsub.s32 %v2108, %v2110
          %v2112 = vrot.slane %v2104, %v2111
          %v2114 = vunpack.c.l.s4 1934713408
          %v2115 = vunpack.c.0.s8 %v2114
          %v2116 = vlaneseq
          %v2117 = vshrl.u32 %v2116, 7
          %v2118 = vsub.s32 %v2115, %v2117
          %v2119 = vrot.slane %v2105, %v2118
          %v2120 = vcombine.low %v2095, %v2103
          %v2121 = vcombine.high %v2095, %v2103
          %v2123 = vunpack.c.l.s4 1934713408
          %v2124 = vunpack.c.0.s8 %v2123
          %v2125 = vlaneseq
          %v2126 = vshrl.u32 %v2125, 7
          %v2127 = vsub.s32 %v2124, %v2126
          %v2128 = vrot.slane %v2120, %v2127
          %v2130 = vunpack.c.l.s4 1934713408
          %v2131 = vunpack.c.0.s8 %v2130
          %v2132 = vlaneseq
          %v2133 = vshrl.u32 %v2132, 7
          %v2134 = vsub.s32 %v2131, %v2133
          %v2135 = vrot.slane %v2121, %v2134
          %v2136 = vcombine.low %v2112, %v2128
          %v2137 = vcombine.high %v2112, %v2128
          %v2138 = vcombine.low %v2119, %v2135
          %v2139 = vcombine.high %v2119, %v2135
          %2141 = vrot.lane.b32.xlu0 %v2137, 32
          %v2142 = vpop.permute.xlu0 %2141
          %2145 = vrot.lane.b32.xlu0 %v2138, 64
          %v2146 = vpop.permute.xlu0 %2145
          %2149 = vrot.lane.b32.xlu0 %v2139, 96
          %v2150 = vpop.permute.xlu0 %2149
          %v2152 = vsel %vm1230, %v2136, %v2142
          %vm2153 = vcmask 523264
          %v2154 = vsel %vm2153, %v2152, %v2146
          %vm2155 = vcmask 785408
          %v2156 = vsel %vm2155, %v2154, %v2150
          %v2157 = vld [vmem:[#allocation14] sm:$0xff]
          %v2158 = vld [vmem:[#allocation14 + $0x8] sm:$0xff]
          %v2159 = vld [vmem:[#allocation14 + $0x10] sm:$0xff]
          %v2160 = vld [vmem:[#allocation14 + $0x18] sm:$0xff]
          %v2161 = vld [vmem:[#allocation14 + $0x20] sm:$0xff]
          %v2162 = vld [vmem:[#allocation14 + $0x28] sm:$0xff]
          %v2163 = vld [vmem:[#allocation14 + $0x30] sm:$0xff]
          %v2164 = vld [vmem:[#allocation14 + $0x38] sm:$0xff]
          %v2165 = vld [vmem:[#allocation14 + $0x40] sm:$0xff]
          %v2166 = vld [vmem:[#allocation14 + $0x48] sm:$0xff]
          %v2167 = vld [vmem:[#allocation14 + $0x50] sm:$0xff]
          %v2168 = vld [vmem:[#allocation14 + $0x58] sm:$0xff]
          %v2169 = vld [vmem:[#allocation14 + $0x60] sm:$0xff]
          %v2170 = vld [vmem:[#allocation14 + $0x68] sm:$0xff]
          %v2171 = vld [vmem:[#allocation14 + $0x70] sm:$0xff]
          %v2172 = vld [vmem:[#allocation14 + $0x78] sm:$0xff]
          %v2173 = vld [vmem:[%s6] sm:$0x1]
          %v2175 = vlaneseq
          %v2176 = vshrl.u32 %v2175, 7
          %v2177 = vsub.s32 0, %v2176
          %v2178 = vrot.slane %v2173, %v2177
          %2180 = vmatprep.subr.mxu0 0.0
          %2181 = vmatpush1.msra.mxu0 %v2172
          %2182 = vmatprep.subr.mxu0 0.0
          %2183 = vmatpush1.msra.mxu0 %v2171
          %2184 = vmatprep.subr.mxu0 0.0
          %2185 = vmatpush1.msra.mxu0 %v2170
          %2186 = vmatprep.subr.mxu0 0.0
          %2187 = vmatpush1.msra.mxu0 %v2169
          %2188 = vmatprep.subr.mxu0 0.0
          %2189 = vmatpush1.msra.mxu0 %v2168
          %2190 = vmatprep.subr.mxu0 0.0
          %2191 = vmatpush1.msra.mxu0 %v2167
          %2192 = vmatprep.subr.mxu0 0.0
          %2193 = vmatpush1.msra.mxu0 %v2166
          %2194 = vmatprep.subr.mxu0 0.0
          %2195 = vmatpush1.msra.mxu0 %v2165
          %2196 = vmatprep.subr.mxu0 0.0
          %2197 = vmatpush1.msra.mxu0 %v2164
          %2198 = vmatprep.subr.mxu0 0.0
          %2199 = vmatpush1.msra.mxu0 %v2163
          %2200 = vmatprep.subr.mxu0 0.0
          %2201 = vmatpush1.msra.mxu0 %v2162
          %2202 = vmatprep.subr.mxu0 0.0
          %2203 = vmatpush1.msra.mxu0 %v2161
          %2204 = vmatprep.subr.mxu0 0.0
          %2205 = vmatpush1.msra.mxu0 %v2160
          %2206 = vmatprep.subr.mxu0 0.0
          %2207 = vmatpush1.msra.mxu0 %v2159
          %2208 = vmatprep.subr.mxu0 0.0
          %2209 = vmatpush1.msra.mxu0 %v2158
          %2210 = vmatprep.subr.mxu0 0.0
          %2211 = vmatpush1.msra.mxu0 %v2157
          %2212 = vmatprep.subr.mxu0 0.0
          %2213 = vmatpush2.msra.mxu0 0.0
          %2214 = vmatprep.subr.mxu0 0.0
          %2215 = vmatpush2.msra.mxu0 0.0
          %2216 = vmatprep.subr.mxu0 0.0
          %2217 = vmatpush2.msra.mxu0 0.0
          %2218 = vmatprep.subr.mxu0 0.0
          %2219 = vmatpush2.msra.mxu0 0.0
          %2220 = vmatprep.subr.mxu0 0.0
          %2221 = vmatpush2.msra.mxu0 0.0
          %2222 = vmatprep.subr.mxu0 0.0
          %2223 = vmatpush2.msra.mxu0 0.0
          %2224 = vmatprep.subr.mxu0 0.0
          %2225 = vmatpush2.msra.mxu0 0.0
          %2226 = vmatprep.subr.mxu0 0.0
          %2227 = vmatpush2.msra.mxu0 0.0
          %2228 = vmatprep.subr.mxu0 0.0
          %2229 = vmatpush2.msra.mxu0 0.0
          %2230 = vmatprep.subr.mxu0 0.0
          %2231 = vmatpush2.msra.mxu0 0.0
          %2232 = vmatprep.subr.mxu0 0.0
          %2233 = vmatpush2.msra.mxu0 0.0
          %2234 = vmatprep.subr.mxu0 0.0
          %2235 = vmatpush2.msra.mxu0 0.0
          %2236 = vmatprep.subr.mxu0 0.0
          %2237 = vmatpush2.msra.mxu0 0.0
          %2238 = vmatprep.subr.mxu0 0.0
          %2239 = vmatpush2.msra.mxu0 0.0
          %2240 = vmatprep.subr.mxu0 0.0
          %2241 = vmatpush2.msra.mxu0 0.0
          %2242 = vmatprep.subr.mxu0 0.0
          %2243 = vmatpush2.msra.mxu0 0.0
          %2244 = vmatprep.mubr.f32.mxu0 0.0
          %2245 = vmatmul.mubr.f32.gmra.mxu0 %v2156
          %v2246 = vpop.f32.mrf.mxu0
          %v2247 = vadd.f32 %v2178, %v2246
          %v2248 = vpop.f32.mrf.mxu0
          %2249 = vdwg.mxu0
          %v2250 = vld [vmem:[%s578] sm:$0xff]
          %v2251 = vadd.f32 %v2250, %v2247
          %v2252 = vld [vmem:[%s7] sm:$0x1]
          %v2253 = vld [vmem:[%s8] sm:$0x1]
          %2254 = vadd.xlane.f32.xlu0 %v2251
          %v2255 = vpop.xlane.xlu0 %2254
          %v2256 = vrcp.pop 128.0
          %v2257 = vmul.f32 %v2255, %v2256
          %v2258 = vsub.f32 %v2251, %v2257
          %v2259 = vmul.f32 %v2258, %v2258
          %2260 = vadd.xlane.f32.xlu0 %v2259
          %v2261 = vpop.xlane.xlu0 %2260
          %v2262 = vmul.f32 %v2261, %v2256
          %v2263 = vadd.f32 %v2262, 1e-05
          %v2264 = vrsqrt.pop %v2263
          %v2265 = vmul.f32 %v2258, %v2264
          %v2267 = vlaneseq
          %v2268 = vshrl.u32 %v2267, 7
          %v2269 = vsub.s32 0, %v2268
          %v2270 = vrot.slane %v2252, %v2269
          %v2272 = vmul.f32 %v2265, %v2270
          %v2274 = vlaneseq
          %v2275 = vshrl.u32 %v2274, 7
          %v2276 = vsub.s32 0, %v2275
          %v2277 = vrot.slane %v2253, %v2276
          %v2279 = vadd.f32 %v2272, %v2277
          %v2280 = vld [vmem:[#allocation15] sm:$0xff]
          %v2281 = vld [vmem:[#allocation15 + $0x8] sm:$0xff]
          %v2282 = vld [vmem:[#allocation15 + $0x10] sm:$0xff]
          %v2283 = vld [vmem:[#allocation15 + $0x18] sm:$0xff]
          %v2284 = vld [vmem:[#allocation15 + $0x20] sm:$0xff]
          %v2285 = vld [vmem:[#allocation15 + $0x28] sm:$0xff]
          %v2286 = vld [vmem:[#allocation15 + $0x30] sm:$0xff]
          %v2287 = vld [vmem:[#allocation15 + $0x38] sm:$0xff]
          %v2288 = vld [vmem:[#allocation15 + $0x40] sm:$0xff]
          %v2289 = vld [vmem:[#allocation15 + $0x48] sm:$0xff]
          %v2290 = vld [vmem:[#allocation15 + $0x50] sm:$0xff]
          %v2291 = vld [vmem:[#allocation15 + $0x58] sm:$0xff]
          %v2292 = vld [vmem:[#allocation15 + $0x60] sm:$0xff]
          %v2293 = vld [vmem:[#allocation15 + $0x68] sm:$0xff]
          %v2294 = vld [vmem:[#allocation15 + $0x70] sm:$0xff]
          %v2295 = vld [vmem:[#allocation15 + $0x78] sm:$0xff]
          %v2296 = vld [vmem:[#allocation15 + $0x80] sm:$0xff]
          %v2297 = vld [vmem:[#allocation15 + $0x88] sm:$0xff]
          %v2298 = vld [vmem:[#allocation15 + $0x90] sm:$0xff]
          %v2299 = vld [vmem:[#allocation15 + $0x98] sm:$0xff]
          %v2300 = vld [vmem:[#allocation15 + $0xa0] sm:$0xff]
          %v2301 = vld [vmem:[#allocation15 + $0xa8] sm:$0xff]
          %v2302 = vld [vmem:[#allocation15 + $0xb0] sm:$0xff]
          %v2303 = vld [vmem:[#allocation15 + $0xb8] sm:$0xff]
          %v2304 = vld [vmem:[#allocation15 + $0xc0] sm:$0xff]
          %v2305 = vld [vmem:[#allocation15 + $0xc8] sm:$0xff]
          %v2306 = vld [vmem:[#allocation15 + $0xd0] sm:$0xff]
          %v2307 = vld [vmem:[#allocation15 + $0xd8] sm:$0xff]
          %v2308 = vld [vmem:[#allocation15 + $0xe0] sm:$0xff]
          %v2309 = vld [vmem:[#allocation15 + $0xe8] sm:$0xff]
          %v2310 = vld [vmem:[#allocation15 + $0xf0] sm:$0xff]
          %v2311 = vld [vmem:[#allocation15 + $0xf8] sm:$0xff]
          %v2312 = vld [vmem:[%s10] sm:$0x3]
          %v2314 = vlaneseq
          %v2315 = vshrl.u32 %v2314, 7
          %v2316 = vsub.s32 0, %v2315
          %v2317 = vrot.slane %v2312, %v2316
          %v2318 = vlaneseq
          %v2319 = vshrl.u32 %v2318, 7
          %v2320 = vsub.s32 1, %v2319
          %v2321 = vrot.slane %v2312, %v2320
          %2324 = vmatprep.subr.mxu0 %v2311
          %2325 = vmatpush1.msra.mxu0 %v2310
          %2326 = vmatprep.subr.mxu0 %v2309
          %2327 = vmatpush1.msra.mxu0 %v2308
          %2328 = vmatprep.subr.mxu0 %v2307
          %2329 = vmatpush1.msra.mxu0 %v2306
          %2330 = vmatprep.subr.mxu0 %v2305
          %2331 = vmatpush1.msra.mxu0 %v2304
          %2332 = vmatprep.subr.mxu0 %v2303
          %2333 = vmatpush1.msra.mxu0 %v2302
          %2334 = vmatprep.subr.mxu0 %v2301
          %2335 = vmatpush1.msra.mxu0 %v2300
          %2336 = vmatprep.subr.mxu0 %v2299
          %2337 = vmatpush1.msra.mxu0 %v2298
          %2338 = vmatprep.subr.mxu0 %v2297
          %2339 = vmatpush1.msra.mxu0 %v2296
          %2340 = vmatprep.subr.mxu0 %v2295
          %2341 = vmatpush1.msra.mxu0 %v2294
          %2342 = vmatprep.subr.mxu0 %v2293
          %2343 = vmatpush1.msra.mxu0 %v2292
          %2344 = vmatprep.subr.mxu0 %v2291
          %2345 = vmatpush1.msra.mxu0 %v2290
          %2346 = vmatprep.subr.mxu0 %v2289
          %2347 = vmatpush1.msra.mxu0 %v2288
          %2348 = vmatprep.subr.mxu0 %v2287
          %2349 = vmatpush1.msra.mxu0 %v2286
          %2350 = vmatprep.subr.mxu0 %v2285
          %2351 = vmatpush1.msra.mxu0 %v2284
          %2352 = vmatprep.subr.mxu0 %v2283
          %2353 = vmatpush1.msra.mxu0 %v2282
          %2354 = vmatprep.subr.mxu0 %v2281
          %2355 = vmatpush1.msra.mxu0 %v2280
          %2356 = vmatprep.subr.mxu0 0.0
          %2357 = vmatpush2.msra.mxu0 0.0
          %2358 = vmatprep.subr.mxu0 0.0
          %2359 = vmatpush2.msra.mxu0 0.0
          %2360 = vmatprep.subr.mxu0 0.0
          %2361 = vmatpush2.msra.mxu0 0.0
          %2362 = vmatprep.subr.mxu0 0.0
          %2363 = vmatpush2.msra.mxu0 0.0
          %2364 = vmatprep.subr.mxu0 0.0
          %2365 = vmatpush2.msra.mxu0 0.0
          %2366 = vmatprep.subr.mxu0 0.0
          %2367 = vmatpush2.msra.mxu0 0.0
          %2368 = vmatprep.subr.mxu0 0.0
          %2369 = vmatpush2.msra.mxu0 0.0
          %2370 = vmatprep.subr.mxu0 0.0
          %2371 = vmatpush2.msra.mxu0 0.0
          %2372 = vmatprep.subr.mxu0 0.0
          %2373 = vmatpush2.msra.mxu0 0.0
          %2374 = vmatprep.subr.mxu0 0.0
          %2375 = vmatpush2.msra.mxu0 0.0
          %2376 = vmatprep.subr.mxu0 0.0
          %2377 = vmatpush2.msra.mxu0 0.0
          %2378 = vmatprep.subr.mxu0 0.0
          %2379 = vmatpush2.msra.mxu0 0.0
          %2380 = vmatprep.subr.mxu0 0.0
          %2381 = vmatpush2.msra.mxu0 0.0
          %2382 = vmatprep.subr.mxu0 0.0
          %2383 = vmatpush2.msra.mxu0 0.0
          %2384 = vmatprep.subr.mxu0 0.0
          %2385 = vmatpush2.msra.mxu0 0.0
          %2386 = vmatprep.subr.mxu0 0.0
          %2387 = vmatpush2.msra.mxu0 0.0
          %2388 = vmatprep.mubr.f32.mxu0 0.0
          %2389 = vmatmul.mubr.f32.gmra.mxu0 %v2279
          %v2390 = vpop.f32.mrf.mxu0
          %v2391 = vadd.f32 %v2317, %v2390
          %v2392 = vpop.f32.mrf.mxu0
          %v2393 = vadd.f32 %v2321, %v2392
          %2394 = vdwg.mxu0
          %v2395 = vmax.f32 %v2391, 0.0
          %v2396 = vmax.f32 %v2393, 0.0
          %v2397 = vld [vmem:[#allocation17] sm:$0xff]
          %v2398 = vld [vmem:[#allocation17 + $0x8] sm:$0xff]
          %v2399 = vld [vmem:[#allocation17 + $0x10] sm:$0xff]
          %v2400 = vld [vmem:[#allocation17 + $0x18] sm:$0xff]
          %v2401 = vld [vmem:[#allocation17 + $0x20] sm:$0xff]
          %v2402 = vld [vmem:[#allocation17 + $0x28] sm:$0xff]
          %v2403 = vld [vmem:[#allocation17 + $0x30] sm:$0xff]
          %v2404 = vld [vmem:[#allocation17 + $0x38] sm:$0xff]
          %v2405 = vld [vmem:[#allocation17 + $0x40] sm:$0xff]
          %v2406 = vld [vmem:[#allocation17 + $0x48] sm:$0xff]
          %v2407 = vld [vmem:[#allocation17 + $0x50] sm:$0xff]
          %v2408 = vld [vmem:[#allocation17 + $0x58] sm:$0xff]
          %v2409 = vld [vmem:[#allocation17 + $0x60] sm:$0xff]
          %v2410 = vld [vmem:[#allocation17 + $0x68] sm:$0xff]
          %v2411 = vld [vmem:[#allocation17 + $0x70] sm:$0xff]
          %v2412 = vld [vmem:[#allocation17 + $0x78] sm:$0xff]
          %v2413 = vld [vmem:[#allocation17 + $0x80] sm:$0xff]
          %v2414 = vld [vmem:[#allocation17 + $0x88] sm:$0xff]
          %v2415 = vld [vmem:[#allocation17 + $0x90] sm:$0xff]
          %v2416 = vld [vmem:[#allocation17 + $0x98] sm:$0xff]
          %v2417 = vld [vmem:[#allocation17 + $0xa0] sm:$0xff]
          %v2418 = vld [vmem:[#allocation17 + $0xa8] sm:$0xff]
          %v2419 = vld [vmem:[#allocation17 + $0xb0] sm:$0xff]
          %v2420 = vld [vmem:[#allocation17 + $0xb8] sm:$0xff]
          %v2421 = vld [vmem:[#allocation17 + $0xc0] sm:$0xff]
          %v2422 = vld [vmem:[#allocation17 + $0xc8] sm:$0xff]
          %v2423 = vld [vmem:[#allocation17 + $0xd0] sm:$0xff]
          %v2424 = vld [vmem:[#allocation17 + $0xd8] sm:$0xff]
          %v2425 = vld [vmem:[#allocation17 + $0xe0] sm:$0xff]
          %v2426 = vld [vmem:[#allocation17 + $0xe8] sm:$0xff]
          %v2427 = vld [vmem:[#allocation17 + $0xf0] sm:$0xff]
          %v2428 = vld [vmem:[#allocation17 + $0xf8] sm:$0xff]
          %v2429 = vld [vmem:[%s12] sm:$0x1]
          %v2431 = vlaneseq
          %v2432 = vshrl.u32 %v2431, 7
          %v2433 = vsub.s32 0, %v2432
          %v2434 = vrot.slane %v2429, %v2433
          %2436 = vmatprep.subr.mxu0 0.0
          %2437 = vmatpush1.msra.mxu0 %v2412
          %2438 = vmatprep.subr.mxu0 0.0
          %2439 = vmatpush1.msra.mxu0 %v2411
          %2440 = vmatprep.subr.mxu0 0.0
          %2441 = vmatpush1.msra.mxu0 %v2410
          %2442 = vmatprep.subr.mxu0 0.0
          %2443 = vmatpush1.msra.mxu0 %v2409
          %2444 = vmatprep.subr.mxu0 0.0
          %2445 = vmatpush1.msra.mxu0 %v2408
          %2446 = vmatprep.subr.mxu0 0.0
          %2447 = vmatpush1.msra.mxu0 %v2407
          %2448 = vmatprep.subr.mxu0 0.0
          %2449 = vmatpush1.msra.mxu0 %v2406
          %2450 = vmatprep.subr.mxu0 0.0
          %2451 = vmatpush1.msra.mxu0 %v2405
          %2452 = vmatprep.subr.mxu0 0.0
          %2453 = vmatpush1.msra.mxu0 %v2404
          %2454 = vmatprep.subr.mxu0 0.0
          %2455 = vmatpush1.msra.mxu0 %v2403
          %2456 = vmatprep.subr.mxu0 0.0
          %2457 = vmatpush1.msra.mxu0 %v2402
          %2458 = vmatprep.subr.mxu0 0.0
          %2459 = vmatpush1.msra.mxu0 %v2401
          %2460 = vmatprep.subr.mxu0 0.0
          %2461 = vmatpush1.msra.mxu0 %v2400
          %2462 = vmatprep.subr.mxu0 0.0
          %2463 = vmatpush1.msra.mxu0 %v2399
          %2464 = vmatprep.subr.mxu0 0.0
          %2465 = vmatpush1.msra.mxu0 %v2398
          %2466 = vmatprep.subr.mxu0 0.0
          %2467 = vmatpush1.msra.mxu0 %v2397
          %2468 = vmatprep.subr.mxu0 0.0
          %2469 = vmatpush2.msra.mxu0 %v2428
          %2470 = vmatprep.subr.mxu0 0.0
          %2471 = vmatpush2.msra.mxu0 %v2427
          %2472 = vmatprep.subr.mxu0 0.0
          %2473 = vmatpush2.msra.mxu0 %v2426
          %2474 = vmatprep.subr.mxu0 0.0
          %2475 = vmatpush2.msra.mxu0 %v2425
          %2476 = vmatprep.subr.mxu0 0.0
          %2477 = vmatpush2.msra.mxu0 %v2424
          %2478 = vmatprep.subr.mxu0 0.0
          %2479 = vmatpush2.msra.mxu0 %v2423
          %2480 = vmatprep.subr.mxu0 0.0
          %2481 = vmatpush2.msra.mxu0 %v2422
          %2482 = vmatprep.subr.mxu0 0.0
          %2483 = vmatpush2.msra.mxu0 %v2421
          %2484 = vmatprep.subr.mxu0 0.0
          %2485 = vmatpush2.msra.mxu0 %v2420
          %2486 = vmatprep.subr.mxu0 0.0
          %2487 = vmatpush2.msra.mxu0 %v2419
          %2488 = vmatprep.subr.mxu0 0.0
          %2489 = vmatpush2.msra.mxu0 %v2418
          %2490 = vmatprep.subr.mxu0 0.0
          %2491 = vmatpush2.msra.mxu0 %v2417
          %2492 = vmatprep.subr.mxu0 0.0
          %2493 = vmatpush2.msra.mxu0 %v2416
          %2494 = vmatprep.subr.mxu0 0.0
          %2495 = vmatpush2.msra.mxu0 %v2415
          %2496 = vmatprep.subr.mxu0 0.0
          %2497 = vmatpush2.msra.mxu0 %v2414
          %2498 = vmatprep.subr.mxu0 0.0
          %2499 = vmatpush2.msra.mxu0 %v2413
          %2500 = vmatprep.mubr.f32.mxu0 %v2396
          %2501 = vmatmul.mubr.f32.gmra.mxu0 %v2395
          %v2502 = vpop.f32.mrf.mxu0
          %v2503 = vadd.f32 %v2434, %v2502
          %v2504 = vpop.f32.mrf.mxu0
          %2505 = vdwg.mxu0
          %v2506 = vadd.f32 %v2279, %v2503
          %v2507 = vld [vmem:[%s13] sm:$0x1]
          %v2508 = vld [vmem:[%s14] sm:$0x1]
          %2509 = vadd.xlane.f32.xlu0 %v2506
          %v2510 = vpop.xlane.xlu0 %2509
          %v2511 = vmul.f32 %v2510, %v2256
          %v2512 = vsub.f32 %v2506, %v2511
          %v2513 = vmul.f32 %v2512, %v2512
          %2514 = vadd.xlane.f32.xlu0 %v2513
          %v2515 = vpop.xlane.xlu0 %2514
          %v2516 = vmul.f32 %v2515, %v2256
          %v2517 = vadd.f32 %v2516, 1e-05
          %v2518 = vrsqrt.pop %v2517
          %v2519 = vmul.f32 %v2512, %v2518
          %v2521 = vlaneseq
          %v2522 = vshrl.u32 %v2521, 7
          %v2523 = vsub.s32 0, %v2522
          %v2524 = vrot.slane %v2507, %v2523
          %v2526 = vmul.f32 %v2519, %v2524
          %v2528 = vlaneseq
          %v2529 = vshrl.u32 %v2528, 7
          %v2530 = vsub.s32 0, %v2529
          %v2531 = vrot.slane %v2508, %v2530
          %v2533 = vadd.f32 %v2526, %v2531
          %2534 = vst [vmem:[%s668] sm:$0xff] %v2533
        $region116: #{tpu_custom_call.1} parent=79 // pred_fallthru
          _
        %s2535 = sand.u32 %s402, 1
        %s2536 = scalar_lea.sflag [#allocation8], %s2535
        %s2537 = sand.u32 %s402, 1
        %s2538 = smul.addr %s2537, 8
        %s2539 = scalar_lea.vmem [#allocation18], %s2538
        // Predicated region
        $region117: #{tpu_custom_call.1} parent=79 // pred_check
          %p2540 = pneg %p412
        $region118: #{tpu_custom_call.1} parent=79 // pred_check_branch
          %2542 = sbr.rel (%p2540) target = $region120
        $region119: #{tpu_custom_call.1} parent=79 // pred_region
          %s2544 = ssub.s32 128, 128
          %2545 = vsyncadd %s2536, %s2544
          %s2546 = sadd.s32 %s43, %s42
          %s2547 = smul.addr %s2546, 128
          %s2548 = scalar_lea.hbm %s15, %s2547
          %s2550 = sshll.u32 %s2539, 4
          %s2551 = int_to_ptr.vmem [resolvable:$true] %s2550
          %2553 = dma.vmem_to_hbm [thread:$0]  %s2551, 128, %s2548, %s2536
        $region120: #{tpu_custom_call.1} parent=79 // pred_fallthru
          _
      $region80: #{tpu_custom_call.1} parent=5 // pred_fallthru
        _
      %p2554 = scmp.le.s32.totalorder 2, %s32
      // Predicated region
      $region121: #{tpu_custom_call.1} parent=5 // pred_check
        %p2555 = pneg %p2554
      $region122: #{tpu_custom_call.1} parent=5 // pred_check_branch
        %2557 = sbr.rel (%p2555) target = $region124
      $region123: #{tpu_custom_call.1} parent=5 // pred_region
        %s2558 = ssub.s32 %s32, 2
        // Predicated region
        $region125: #{tpu_custom_call.1} parent=123 // pred_check
          %p2559 = pneg %p418
        $region126: #{tpu_custom_call.1} parent=123 // pred_check_branch
          %2561 = sbr.rel (%p2559) target = $region128
        $region127: #{tpu_custom_call.1} parent=123 // pred_region
          %s2562 = sand.u32 %s403, 1
          %s2563 = scalar_lea.sflag [#allocation8], %s2562
          %s2564 = sand.u32 %s403, 1
          %s2565 = smul.addr %s2564, 8
          %s2566 = scalar_lea.vmem [#allocation18], %s2565
          %2567 = dma.done %s2563, 128
        $region128: #{tpu_custom_call.1} parent=123 // pred_fallthru
          _
      $region124: #{tpu_custom_call.1} parent=5 // pred_fallthru
        _
    $region6: #{tpu_custom_call.1} parent=1 // loop_footer
      %s36 = sadd.s32 1, %s32
    $region7: #{tpu_custom_call.1} parent=1 // loop_footer_branch
      %31 = sbr.rel target = $region3
    $region8: #{tpu_custom_call.1} parent=1 // loop_exit
      _
    %2568 = vsyncpa [#allocation7], 1
    %s2569 = scalar_lea.sflag [#allocation7], 1
    %2570 = vsyncpa %s2569, 1
    %2571 = vsyncpa [#allocation10], 1
    %s2572 = scalar_lea.sflag [#allocation10], 1
    %2573 = vsyncpa %s2572, 1
    %2574 = vsyncpa [#allocation13], 1
    %2575 = vsyncpa [#allocation16], 1
    %2576 = vsyncpa [#allocation8], 1
    %s2577 = scalar_lea.sflag [#allocation8], 1
    %2578 = vsyncpa %s2577, 1

</llo_original>
